<compile_context>
chip_gen: v6e
topology: v6e:2x2x1
jax: 0.10.0
libtpu: 0.0.40
codegen_flags: <defaults>
</compile_context>

<pallas_src>
import functools

import jax
import jax.numpy as jnp
from jax.experimental import pallas as pl
from jax.experimental.pallas import tpu as pltpu

EPS = 1e-5
LANES = 128


def _round_up(a: int, b: int) -> int:
    return (a + b - 1) // b * b


# ---------------------------------------------------------------------------
# Path A: single-pass fused kernel — whole problem resident in VMEM.
# ---------------------------------------------------------------------------
def _fused_single_pass_kernel(x_ref, w_ref, gamma_ref, beta_ref, o_ref, *,
                              true_m: int, eps: float):
    # x_ref:     (Cin,  m_pad)  channel-major input (zero-padded along M)
    # w_ref:     (Cout, Cin)    1x1 conv weight, native layout
    # gamma_ref: (Cout, 1)
    # beta_ref:  (Cout, 1)
    # o_ref:     (Cout, m_pad)
    xr = jnp.maximum(x_ref[...], 0.0)                                  # ReLU (VPU)
    y = jnp.dot(w_ref[...], xr, preferred_element_type=jnp.float32)    # 1x1 conv (MXU)

    m_pad = y.shape[1]
    inv_m = 1.0 / true_m
    mean = jnp.sum(y, axis=1, keepdims=True) * inv_m                   # padded cols are 0

    # Two-pass (centered) variance for accuracy; mask the zero-padded columns so they
    # don't contribute (0 - mean)^2.
    valid = jax.lax.broadcasted_iota(jnp.int32, (1, m_pad), 1) < true_m
    centered = jnp.where(valid, y - mean, 0.0)
    var = jnp.sum(centered * centered, axis=1, keepdims=True) * inv_m  # biased variance

    scale = gamma_ref[...] * jax.lax.rsqrt(var + eps)
    bias = beta_ref[...] - mean * scale
    o_ref[...] = y * scale + bias                                      # single FMA epilogue


# ---------------------------------------------------------------------------
# Path B: large-M fallback — two-phase grid with lane-dense stat accumulators.
# (Not exercised at the spec shape; kept so any M is handled.)
# ---------------------------------------------------------------------------
def _relu_conv1x1_bn_tiled_kernel(x_ref, w_ref, gamma_ref, beta_ref, o_ref,
                                  sum_acc, sq_acc, scale_sc, bias_sc, *,
                                  true_m: int, eps: float):
    # sum_acc / sq_acc: (Cout, 128) lane-dense partial accumulators (VPU adds per tile,
    # single XLU cross-lane reduce at finalize).
    phase = pl.program_id(0)   # 0 = statistics pass, 1 = normalize pass
    tile = pl.program_id(1)

    @pl.when(phase == 0)
    def _stats_pass():
        @pl.when(tile == 0)
        def _init():
            sum_acc[...] = jnp.zeros_like(sum_acc)
            sq_acc[...] = jnp.zeros_like(sq_acc)

        xr = jnp.maximum(x_ref[...], 0.0)
        y = jnp.dot(w_ref[...], xr, preferred_element_type=jnp.float32)
        tm = y.shape[1]
        s = sum_acc[...]
        q = sq_acc[...]
        for c in range(tm // LANES):                 # unrolled VPU adds, no relayout
            chunk = y[:, c * LANES:(c + 1) * LANES]
            s = s + chunk
            q = q + chunk * chunk
        sum_acc[...] = s
        sq_acc[...] = q

    @pl.when(phase == 1)
    def _normalize_pass():
        @pl.when(tile == 0)
        def _finalize():
            inv_m = 1.0 / true_m
            total = jnp.sum(sum_acc[...], axis=1, keepdims=True)       # one XLU reduce
            total_sq = jnp.sum(sq_acc[...], axis=1, keepdims=True)
            mean = total * inv_m
            var = total_sq * inv_m - mean * mean                       # biased variance
            scale = gamma_ref[...] * jax.lax.rsqrt(var + eps)
            scale_sc[...] = scale
            bias_sc[...] = beta_ref[...] - mean * scale

        xr = jnp.maximum(x_ref[...], 0.0)
        y = jnp.dot(w_ref[...], xr, preferred_element_type=jnp.float32)
        o_ref[...] = y * scale_sc[...] + bias_sc[...]


def relu_conv1x1_bn(x_nchw, conv_w, gamma, beta, *, eps=EPS):
    """x_nchw: (N, Cin, H, W) f32; conv_w: (Cout, Cin, 1, 1); gamma/beta: (Cout,)."""
    n, cin, h, w = x_nchw.shape
    cout = conv_w.shape[0]
    m = n * h * w

    # Channel-major flatten: (N, Cin, H, W) -> (Cin, N*H*W).  For N=1 the transpose is a
    # size-1-axis no-op (pure reshape, no HBM transpose).
    x_mat = jnp.transpose(x_nchw.reshape(n, cin, h * w), (1, 0, 2)).reshape(cin, m)
    w_mat = conv_w.reshape(cout, cin).astype(jnp.float32)
    gamma2 = gamma.reshape(cout, 1).astype(jnp.float32)
    beta2 = beta.reshape(cout, 1).astype(jnp.float32)

    m128 = _round_up(m, 128)

    # Rough f32 VMEM footprint if the whole problem is made resident (x, W, y temp, out,
    # + slack for compiler temps).  If it fits comfortably -> single-pass fused kernel.
    single_pass_bytes = 4 * (cin * m128 + cout * cin + 2 * cout * m128) + (4 << 20)

    if single_pass_bytes <= (40 << 20):
        # -------- Path A: one grid step, one matmul --------
        m_pad = m128
        x_p = jnp.pad(x_mat, ((0, 0), (0, m_pad - m))) if m_pad != m else x_mat
        kernel = functools.partial(_fused_single_pass_kernel, true_m=m, eps=eps)
        out_mat = pl.pallas_call(
            kernel,
            out_shape=jax.ShapeDtypeStruct((cout, m_pad), jnp.float32),
            grid_spec=pltpu.PrefetchScalarGridSpec(
                num_scalar_prefetch=0,
                grid=(1,),
                in_specs=[
                    pl.BlockSpec((cin, m_pad), lambda i: (0, 0)),
                    pl.BlockSpec((cout, cin), lambda i: (0, 0)),
                    pl.BlockSpec((cout, 1), lambda i: (0, 0)),
                    pl.BlockSpec((cout, 1), lambda i: (0, 0)),
                ],
                out_specs=pl.BlockSpec((cout, m_pad), lambda i: (0, 0)),
            ),
            compiler_params=pltpu.CompilerParams(
                dimension_semantics=("arbitrary",),
                vmem_limit_bytes=48 << 20,   # below v7x's 64 MiB physical VMEM
            ),
        )(x_p, w_mat, gamma2, beta2)
    else:
        # -------- Path B: two-phase tiled kernel for large M --------
        # TODO(synk): avoid the wrapper-side pad (extra HBM read/write of x) by masking
        #             the ragged last tile in-kernel; acceptable tax for this fallback.
        tile_m = 2048
        m_pad = _round_up(m, tile_m)
        x_p = jnp.pad(x_mat, ((0, 0), (0, m_pad - m))) if m_pad != m else x_mat
        num_tiles = m_pad // tile_m
        kernel = functools.partial(_relu_conv1x1_bn_tiled_kernel, true_m=m, eps=eps)
        out_mat = pl.pallas_call(
            kernel,
            out_shape=jax.ShapeDtypeStruct((cout, m_pad), jnp.float32),
            grid_spec=pltpu.PrefetchScalarGridSpec(
                num_scalar_prefetch=0,
                grid=(2, num_tiles),
                in_specs=[
                    pl.BlockSpec((cin, tile_m), lambda p, i: (0, i)),
                    pl.BlockSpec((cout, cin), lambda p, i: (0, 0)),
                    pl.BlockSpec((cout, 1), lambda p, i: (0, 0)),
                    pl.BlockSpec((cout, 1), lambda p, i: (0, 0)),
                ],
                # Phase 0 pins the output to block 0 (never written there), so no
                # un-normalized data is flushed; phase 1 writes each tile exactly once.
                out_specs=pl.BlockSpec((cout, tile_m), lambda p, i: (0, i * p)),
                scratch_shapes=[
                    pltpu.VMEM((cout, LANES), jnp.float32),  # lane-dense partial sum
                    pltpu.VMEM((cout, LANES), jnp.float32),  # lane-dense partial sumsq
                    pltpu.VMEM((cout, 1), jnp.float32),      # folded scale
                    pltpu.VMEM((cout, 1), jnp.float32),      # folded bias
                ],
            ),
            compiler_params=pltpu.CompilerParams(
                dimension_semantics=("arbitrary", "arbitrary"),
                vmem_limit_bytes=48 << 20,
            ),
        )(x_p, w_mat, gamma2, beta2)

    # Drop the M padding and fold back to NCHW (free for N=1: size-1-axis transpose).
    out = out_mat[:, :m]
    return jnp.transpose(out.reshape(cout, n, h * w), (1, 0, 2)).reshape(n, cout, h, w)


if __name__ == "__main__":
    key = jax.random.PRNGKey(0)
    k_x, k_w, k_g, k_b = jax.random.split(key, 4)

    # Shapes from the original module: input (1, 256, 14, 14), Conv2d(256 -> 1024, 1x1).
    N, CIN, H, W = 1, 256, 14, 14
    COUT = 1024

    x = jax.random.normal(k_x, (N, CIN, H, W), dtype=jnp.float32)
    conv_w = jax.random.normal(k_w, (COUT, CIN, 1, 1), dtype=jnp.float32) * 0.05
    gamma = jax.random.normal(k_g, (COUT,), dtype=jnp.float32) * 0.1 + 1.0
    beta = jax.random.normal(k_b, (COUT,), dtype=jnp.float32) * 0.1

    out = jax.jit(relu_conv1x1_bn)(x, conv_w, gamma, beta)
    jax.block_until_ready(out)

    # Pure-JAX reference (mirrors PyTorch training-mode forward).
    xr = jnp.maximum(x, 0.0)
    y_ref = jnp.einsum("nchw,oc->nohw", xr, conv_w.reshape(COUT, CIN))
    mean = jnp.mean(y_ref, axis=(0, 2, 3), keepdims=True)
    var = jnp.mean((y_ref - mean) ** 2, axis=(0, 2, 3), keepdims=True)
    ref = (y_ref - mean) * jax.lax.rsqrt(var + EPS) * gamma.reshape(1, COUT, 1, 1) \
        + beta.reshape(1, COUT, 1, 1)

    assert out.shape == (N, COUT, H, W)
    err = float(jnp.max(jnp.abs(out - ref)))
    assert err < 1e-3, f"mismatch vs reference: {err}"

    print("KERNEL_OK")
</pallas_src>

<mosaic_0001>
module attributes {stable_mosaic.version = 11 : i64} {
  func.func @_fused_single_pass_kernel(%arg0: i32, %arg1: memref<256x256xf32, #tpu.memory_space<vmem>>, %arg2: memref<1024x256xf32, #tpu.memory_space<vmem>>, %arg3: memref<1024x1xf32, #tpu.memory_space<vmem>>, %arg4: memref<1024x1xf32, #tpu.memory_space<vmem>>, %arg5: memref<1024x256xf32, #tpu.memory_space<vmem>>) attributes {dimension_semantics = [#tpu.dimension_semantics<arbitrary>], iteration_bounds = array<i64: 1>, scalar_prefetch = 0 : i64, scratch_operands = 0 : i64, tpu.core_type = #tpu.core_type<tc>, window_params = [{pipeline_mode = #tpu.pipeline_mode<synchronous>, transform_indices = @transform_0, window_bounds = array<i64: 256, 256>}, {pipeline_mode = #tpu.pipeline_mode<synchronous>, transform_indices = @transform_1, window_bounds = array<i64: 1024, 256>}, {pipeline_mode = #tpu.pipeline_mode<synchronous>, transform_indices = @transform_2, window_bounds = array<i64: 1024, 1>}, {pipeline_mode = #tpu.pipeline_mode<synchronous>, transform_indices = @transform_3, window_bounds = array<i64: 1024, 1>}, {pipeline_mode = #tpu.pipeline_mode<synchronous>, transform_indices = @transform_4, window_bounds = array<i64: 1024, 256>}]} {
    %c0 = arith.constant 0 : index
    %c0_0 = arith.constant 0 : index
    %0 = vector.load %arg1[%c0, %c0_0] : memref<256x256xf32, #tpu.memory_space<vmem>>, vector<256x256xf32>
    %cst = arith.constant 0.000000e+00 : f32
    %1 = vector.broadcast %cst : f32 to vector<256x256xf32>
    %2 = arith.maximumf %0, %1 : vector<256x256xf32>
    %c0_1 = arith.constant 0 : index
    %c0_2 = arith.constant 0 : index
    %3 = vector.load %arg2[%c0_1, %c0_2] : memref<1024x256xf32, #tpu.memory_space<vmem>>, vector<1024x256xf32>
    %cst_3 = arith.constant dense<0.000000e+00> : vector<1024x256xf32>
    %4 = tpu.matmul %3, %2, %cst_3 {dimension_numbers = #tpu.dot_dimension_numbers<[1], [0], [0], [1], [0, 0, 1, 1], [], []>} : vector<1024x256xf32>, vector<256x256xf32>, vector<1024x256xf32> -> vector<1024x256xf32>
    %cst_4 = arith.constant dense<0.000000e+00> : vector<1024xf32>
    %5 = vector.multi_reduction <add>, %4, %cst_4 [1] : vector<1024x256xf32> to vector<1024xf32>
    %6 = vector.shape_cast %5 : vector<1024xf32> to vector<1024x1xf32>
    %cst_5 = arith.constant 0.00510204071 : f32
    %7 = vector.broadcast %cst_5 : f32 to vector<1024x1xf32>
    %8 = arith.mulf %6, %7 : vector<1024x1xf32>
    %9 = tpu.iota {dimensions = array<i32: 1>} : vector<1x256xi32>
    %c196_i32 = arith.constant 196 : i32
    %10 = vector.broadcast %c196_i32 : i32 to vector<1x256xi32>
    %11 = arith.cmpi slt, %9, %10 : vector<1x256xi32>
    %12 = vector.broadcast %8 : vector<1024x1xf32> to vector<1024x256xf32>
    %13 = arith.subf %4, %12 : vector<1024x256xf32>
    %cst_6 = arith.constant 0.000000e+00 : f32
    %14 = vector.shape_cast %11 : vector<1x256xi1> to vector<1x256xi1>
    %15 = vector.broadcast %14 : vector<1x256xi1> to vector<1024x256xi1>
    %16 = vector.broadcast %cst_6 : f32 to vector<1024x256xf32>
    %17 = arith.select %15, %13, %16 : vector<1024x256xi1>, vector<1024x256xf32>
    %18 = arith.mulf %17, %17 : vector<1024x256xf32>
    %cst_7 = arith.constant dense<0.000000e+00> : vector<1024xf32>
    %19 = vector.multi_reduction <add>, %18, %cst_7 [1] : vector<1024x256xf32> to vector<1024xf32>
    %20 = vector.shape_cast %19 : vector<1024xf32> to vector<1024x1xf32>
    %cst_8 = arith.constant 0.00510204071 : f32
    %21 = vector.broadcast %cst_8 : f32 to vector<1024x1xf32>
    %22 = arith.mulf %20, %21 : vector<1024x1xf32>
    %c0_9 = arith.constant 0 : index
    %c0_10 = arith.constant 0 : index
    %23 = vector.load %arg3[%c0_9, %c0_10] : memref<1024x1xf32, #tpu.memory_space<vmem>>, vector<1024x1xf32>
    %cst_11 = arith.constant 9.99999974E-6 : f32
    %24 = vector.broadcast %cst_11 : f32 to vector<1024x1xf32>
    %25 = arith.addf %22, %24 : vector<1024x1xf32>
    %26 = math.rsqrt %25 : vector<1024x1xf32>
    %27 = arith.mulf %23, %26 : vector<1024x1xf32>
    %c0_12 = arith.constant 0 : index
    %c0_13 = arith.constant 0 : index
    %28 = vector.load %arg4[%c0_12, %c0_13] : memref<1024x1xf32, #tpu.memory_space<vmem>>, vector<1024x1xf32>
    %29 = arith.mulf %8, %27 : vector<1024x1xf32>
    %30 = arith.subf %28, %29 : vector<1024x1xf32>
    %31 = vector.broadcast %27 : vector<1024x1xf32> to vector<1024x256xf32>
    %32 = arith.mulf %4, %31 : vector<1024x256xf32>
    %33 = vector.broadcast %30 : vector<1024x1xf32> to vector<1024x256xf32>
    %34 = arith.addf %32, %33 : vector<1024x256xf32>
    %c0_14 = arith.constant 0 : index
    %c0_15 = arith.constant 0 : index
    %35 = vector.load %arg5[%c0_14, %c0_15] : memref<1024x256xf32, #tpu.memory_space<vmem>>, vector<1024x256xf32>
    tpu.vector_store %arg5[%c0_14, %c0_15], %34 {strides = array<i32>} : memref<1024x256xf32, #tpu.memory_space<vmem>>, vector<1024x256xf32>,
    return
  }
  func.func @transform_0(%arg0: i32) -> (i32, i32) {
    %c0_i32 = arith.constant 0 : i32
    %c0_i32_0 = arith.constant 0 : i32
    %c0_i32_1 = arith.constant 0 : i32
    return %c0_i32, %c0_i32_0 : i32, i32
  }
  func.func @transform_1(%arg0: i32) -> (i32, i32) {
    %c0_i32 = arith.constant 0 : i32
    %c0_i32_0 = arith.constant 0 : i32
    %c0_i32_1 = arith.constant 0 : i32
    return %c0_i32, %c0_i32_0 : i32, i32
  }
  func.func @transform_2(%arg0: i32) -> (i32, i32) {
    %c0_i32 = arith.constant 0 : i32
    %c0_i32_0 = arith.constant 0 : i32
    %c0_i32_1 = arith.constant 0 : i32
    return %c0_i32, %c0_i32_0 : i32, i32
  }
  func.func @transform_3(%arg0: i32) -> (i32, i32) {
    %c0_i32 = arith.constant 0 : i32
    %c0_i32_0 = arith.constant 0 : i32
    %c0_i32_1 = arith.constant 0 : i32
    return %c0_i32, %c0_i32_0 : i32, i32
  }
  func.func @transform_4(%arg0: i32) -> (i32, i32) {
    %c0_i32 = arith.constant 0 : i32
    %c0_i32_0 = arith.constant 0 : i32
    %c0_i32_1 = arith.constant 0 : i32
    return %c0_i32, %c0_i32_0 : i32, i32
  }
}

</mosaic_0001>

<llo_original>
// kernel: relu_conv1x1_bn.1
$region0: #{relu_conv1x1_bn.1}
  #allocation0 [shape = 'u32[]', space=smem, size = 0x4, offset = 0x4, fixed_abs, tag = 'smem constant byte address 0x4 - core index']
  #allocation1 [shape = 'u32[144,128]{1,0:T(1,128)}', space=vmem, size = 0x12000, scoped, tag = 'internal scratch']
  %s0 = inlined_call_operand.vmem [shape: f32[256,256], index: 0, kind: input, shape index: {}]
  %s1 = inlined_call_operand.vmem [shape: f32[1024,256], index: 1, kind: input, shape index: {}]
  %s2 = inlined_call_operand.vmem [shape: f32[1024,1], index: 2, kind: input, shape index: {}]
  %s3 = inlined_call_operand.vmem [shape: f32[1024,1], index: 3, kind: input, shape index: {}]
  %s4 = inlined_call_operand.vmem [shape: f32[1024,256], index: 4, kind: output, shape index: {}]
  %s5 = sld [smem:[#allocation0]]
  $region26: #{relu_conv1x1_bn.1} parent=0
    _
  %s7 = ssub.s32 1, %s5
  %s8 = scalar_select 0, %s7, %s5
  // Predicated region
  $region2: #{relu_conv1x1_bn.1} parent=0 // pred_check
    _
  $region3: #{relu_conv1x1_bn.1} parent=0 // pred_check_branch
    %10 = sbr.rel (0) target = $region5
  $region4: #{relu_conv1x1_bn.1} parent=0 // pred_region
    _
  $region5: #{relu_conv1x1_bn.1} parent=0 // pred_fallthru
    _
  // Predicated region
  $region6: #{relu_conv1x1_bn.1} parent=0 // pred_check
    _
  $region7: #{relu_conv1x1_bn.1} parent=0 // pred_check_branch
    %12 = sbr.rel (0) target = $region9
  $region8: #{relu_conv1x1_bn.1} parent=0 // pred_region
    _
  $region9: #{relu_conv1x1_bn.1} parent=0 // pred_fallthru
    _
  // Predicated region
  $region10: #{relu_conv1x1_bn.1} parent=0 // pred_check
    _
  $region11: #{relu_conv1x1_bn.1} parent=0 // pred_check_branch
    %14 = sbr.rel (0) target = $region13
  $region12: #{relu_conv1x1_bn.1} parent=0 // pred_region
    _
  $region13: #{relu_conv1x1_bn.1} parent=0 // pred_fallthru
    _
  // Predicated region
  $region14: #{relu_conv1x1_bn.1} parent=0 // pred_check
    _
  $region15: #{relu_conv1x1_bn.1} parent=0 // pred_check_branch
    %16 = sbr.rel (0) target = $region17
  $region16: #{relu_conv1x1_bn.1} parent=0 // pred_region
    _
  $region17: #{relu_conv1x1_bn.1} parent=0 // pred_fallthru
    _
  %v17 = vld [vmem:[%s0] sm:$0xff]
  %v18 = vld [vmem:[%s0 + $0x8] sm:$0xff]
  %v19 = vld [vmem:[%s0 + $0x10] sm:$0xff]
  %v20 = vld [vmem:[%s0 + $0x18] sm:$0xff]
  %v21 = vld [vmem:[%s0 + $0x20] sm:$0xff]
  %v22 = vld [vmem:[%s0 + $0x28] sm:$0xff]
  %v23 = vld [vmem:[%s0 + $0x30] sm:$0xff]
  %v24 = vld [vmem:[%s0 + $0x38] sm:$0xff]
  %v25 = vld [vmem:[%s0 + $0x40] sm:$0xff]
  %v26 = vld [vmem:[%s0 + $0x48] sm:$0xff]
  %v27 = vld [vmem:[%s0 + $0x50] sm:$0xff]
  %v28 = vld [vmem:[%s0 + $0x58] sm:$0xff]
  %v29 = vld [vmem:[%s0 + $0x60] sm:$0xff]
  %v30 = vld [vmem:[%s0 + $0x68] sm:$0xff]
  %v31 = vld [vmem:[%s0 + $0x70] sm:$0xff]
  %v32 = vld [vmem:[%s0 + $0x78] sm:$0xff]
  %v33 = vld [vmem:[%s0 + $0x80] sm:$0xff]
  %v34 = vld [vmem:[%s0 + $0x88] sm:$0xff]
  %v35 = vld [vmem:[%s0 + $0x90] sm:$0xff]
  %v36 = vld [vmem:[%s0 + $0x98] sm:$0xff]
  %v37 = vld [vmem:[%s0 + $0xa0] sm:$0xff]
  %v38 = vld [vmem:[%s0 + $0xa8] sm:$0xff]
  %v39 = vld [vmem:[%s0 + $0xb0] sm:$0xff]
  %v40 = vld [vmem:[%s0 + $0xb8] sm:$0xff]
  %v41 = vld [vmem:[%s0 + $0xc0] sm:$0xff]
  %v42 = vld [vmem:[%s0 + $0xc8] sm:$0xff]
  %v43 = vld [vmem:[%s0 + $0xd0] sm:$0xff]
  %v44 = vld [vmem:[%s0 + $0xd8] sm:$0xff]
  %v45 = vld [vmem:[%s0 + $0xe0] sm:$0xff]
  %v46 = vld [vmem:[%s0 + $0xe8] sm:$0xff]
  %v47 = vld [vmem:[%s0 + $0xf0] sm:$0xff]
  %v48 = vld [vmem:[%s0 + $0xf8] sm:$0xff]
  %v49 = vld [vmem:[%s0 + $0x100] sm:$0xff]
  %v50 = vld [vmem:[%s0 + $0x108] sm:$0xff]
  %v51 = vld [vmem:[%s0 + $0x110] sm:$0xff]
  %v52 = vld [vmem:[%s0 + $0x118] sm:$0xff]
  %v53 = vld [vmem:[%s0 + $0x120] sm:$0xff]
  %v54 = vld [vmem:[%s0 + $0x128] sm:$0xff]
  %v55 = vld [vmem:[%s0 + $0x130] sm:$0xff]
  %v56 = vld [vmem:[%s0 + $0x138] sm:$0xff]
  %v57 = vld [vmem:[%s0 + $0x140] sm:$0xff]
  %v58 = vld [vmem:[%s0 + $0x148] sm:$0xff]
  %v59 = vld [vmem:[%s0 + $0x150] sm:$0xff]
  %v60 = vld [vmem:[%s0 + $0x158] sm:$0xff]
  %v61 = vld [vmem:[%s0 + $0x160] sm:$0xff]
  %v62 = vld [vmem:[%s0 + $0x168] sm:$0xff]
  %v63 = vld [vmem:[%s0 + $0x170] sm:$0xff]
  %v64 = vld [vmem:[%s0 + $0x178] sm:$0xff]
  %v65 = vld [vmem:[%s0 + $0x180] sm:$0xff]
  %v66 = vld [vmem:[%s0 + $0x188] sm:$0xff]
  %v67 = vld [vmem:[%s0 + $0x190] sm:$0xff]
  %v68 = vld [vmem:[%s0 + $0x198] sm:$0xff]
  %v69 = vld [vmem:[%s0 + $0x1a0] sm:$0xff]
  %v70 = vld [vmem:[%s0 + $0x1a8] sm:$0xff]
  %v71 = vld [vmem:[%s0 + $0x1b0] sm:$0xff]
  %v72 = vld [vmem:[%s0 + $0x1b8] sm:$0xff]
  %v73 = vld [vmem:[%s0 + $0x1c0] sm:$0xff]
  %v74 = vld [vmem:[%s0 + $0x1c8] sm:$0xff]
  %v75 = vld [vmem:[%s0 + $0x1d0] sm:$0xff]
  %v76 = vld [vmem:[%s0 + $0x1d8] sm:$0xff]
  %v77 = vld [vmem:[%s0 + $0x1e0] sm:$0xff]
  %v78 = vld [vmem:[%s0 + $0x1e8] sm:$0xff]
  %v79 = vld [vmem:[%s0 + $0x1f0] sm:$0xff]
  %v80 = vld [vmem:[%s0 + $0x1f8] sm:$0xff]
  %v81 = vmax.f32 %v17, 0.0
  %v82 = vmax.f32 %v18, 0.0
  %v83 = vmax.f32 %v19, 0.0
  %v84 = vmax.f32 %v20, 0.0
  %v85 = vmax.f32 %v21, 0.0
  %v86 = vmax.f32 %v22, 0.0
  %v87 = vmax.f32 %v23, 0.0
  %v88 = vmax.f32 %v24, 0.0
  %v89 = vmax.f32 %v25, 0.0
  %v90 = vmax.f32 %v26, 0.0
  %v91 = vmax.f32 %v27, 0.0
  %v92 = vmax.f32 %v28, 0.0
  %v93 = vmax.f32 %v29, 0.0
  %v94 = vmax.f32 %v30, 0.0
  %v95 = vmax.f32 %v31, 0.0
  %v96 = vmax.f32 %v32, 0.0
  %v97 = vmax.f32 %v33, 0.0
  %v98 = vmax.f32 %v34, 0.0
  %v99 = vmax.f32 %v35, 0.0
  %v100 = vmax.f32 %v36, 0.0
  %v101 = vmax.f32 %v37, 0.0
  %v102 = vmax.f32 %v38, 0.0
  %v103 = vmax.f32 %v39, 0.0
  %v104 = vmax.f32 %v40, 0.0
  %v105 = vmax.f32 %v41, 0.0
  %v106 = vmax.f32 %v42, 0.0
  %v107 = vmax.f32 %v43, 0.0
  %v108 = vmax.f32 %v44, 0.0
  %v109 = vmax.f32 %v45, 0.0
  %v110 = vmax.f32 %v46, 0.0
  %v111 = vmax.f32 %v47, 0.0
  %v112 = vmax.f32 %v48, 0.0
  %v113 = vmax.f32 %v49, 0.0
  %v114 = vmax.f32 %v50, 0.0
  %v115 = vmax.f32 %v51, 0.0
  %v116 = vmax.f32 %v52, 0.0
  %v117 = vmax.f32 %v53, 0.0
  %v118 = vmax.f32 %v54, 0.0
  %v119 = vmax.f32 %v55, 0.0
  %v120 = vmax.f32 %v56, 0.0
  %v121 = vmax.f32 %v57, 0.0
  %v122 = vmax.f32 %v58, 0.0
  %v123 = vmax.f32 %v59, 0.0
  %v124 = vmax.f32 %v60, 0.0
  %v125 = vmax.f32 %v61, 0.0
  %v126 = vmax.f32 %v62, 0.0
  %v127 = vmax.f32 %v63, 0.0
  %v128 = vmax.f32 %v64, 0.0
  %v129 = vmax.f32 %v65, 0.0
  %v130 = vmax.f32 %v66, 0.0
  %v131 = vmax.f32 %v67, 0.0
  %v132 = vmax.f32 %v68, 0.0
  %v133 = vmax.f32 %v69, 0.0
  %v134 = vmax.f32 %v70, 0.0
  %v135 = vmax.f32 %v71, 0.0
  %v136 = vmax.f32 %v72, 0.0
  %v137 = vmax.f32 %v73, 0.0
  %v138 = vmax.f32 %v74, 0.0
  %v139 = vmax.f32 %v75, 0.0
  %v140 = vmax.f32 %v76, 0.0
  %v141 = vmax.f32 %v77, 0.0
  %v142 = vmax.f32 %v78, 0.0
  %v143 = vmax.f32 %v79, 0.0
  %v144 = vmax.f32 %v80, 0.0
  %v145 = vld [vmem:[%s1] sm:$0xff]
  %v146 = vld [vmem:[%s1 + $0x8] sm:$0xff]
  %v147 = vld [vmem:[%s1 + $0x10] sm:$0xff]
  %v148 = vld [vmem:[%s1 + $0x18] sm:$0xff]
  %v149 = vld [vmem:[%s1 + $0x20] sm:$0xff]
  %v150 = vld [vmem:[%s1 + $0x28] sm:$0xff]
  %v151 = vld [vmem:[%s1 + $0x30] sm:$0xff]
  %v152 = vld [vmem:[%s1 + $0x38] sm:$0xff]
  %v153 = vld [vmem:[%s1 + $0x40] sm:$0xff]
  %v154 = vld [vmem:[%s1 + $0x48] sm:$0xff]
  %v155 = vld [vmem:[%s1 + $0x50] sm:$0xff]
  %v156 = vld [vmem:[%s1 + $0x58] sm:$0xff]
  %v157 = vld [vmem:[%s1 + $0x60] sm:$0xff]
  %v158 = vld [vmem:[%s1 + $0x68] sm:$0xff]
  %v159 = vld [vmem:[%s1 + $0x70] sm:$0xff]
  %v160 = vld [vmem:[%s1 + $0x78] sm:$0xff]
  %v161 = vld [vmem:[%s1 + $0x80] sm:$0xff]
  %v162 = vld [vmem:[%s1 + $0x88] sm:$0xff]
  %v163 = vld [vmem:[%s1 + $0x90] sm:$0xff]
  %v164 = vld [vmem:[%s1 + $0x98] sm:$0xff]
  %v165 = vld [vmem:[%s1 + $0xa0] sm:$0xff]
  %v166 = vld [vmem:[%s1 + $0xa8] sm:$0xff]
  %v167 = vld [vmem:[%s1 + $0xb0] sm:$0xff]
  %v168 = vld [vmem:[%s1 + $0xb8] sm:$0xff]
  %v169 = vld [vmem:[%s1 + $0xc0] sm:$0xff]
  %v170 = vld [vmem:[%s1 + $0xc8] sm:$0xff]
  %v171 = vld [vmem:[%s1 + $0xd0] sm:$0xff]
  %v172 = vld [vmem:[%s1 + $0xd8] sm:$0xff]
  %v173 = vld [vmem:[%s1 + $0xe0] sm:$0xff]
  %v174 = vld [vmem:[%s1 + $0xe8] sm:$0xff]
  %v175 = vld [vmem:[%s1 + $0xf0] sm:$0xff]
  %v176 = vld [vmem:[%s1 + $0xf8] sm:$0xff]
  %v177 = vld [vmem:[%s1 + $0x100] sm:$0xff]
  %v178 = vld [vmem:[%s1 + $0x108] sm:$0xff]
  %v179 = vld [vmem:[%s1 + $0x110] sm:$0xff]
  %v180 = vld [vmem:[%s1 + $0x118] sm:$0xff]
  %v181 = vld [vmem:[%s1 + $0x120] sm:$0xff]
  %v182 = vld [vmem:[%s1 + $0x128] sm:$0xff]
  %v183 = vld [vmem:[%s1 + $0x130] sm:$0xff]
  %v184 = vld [vmem:[%s1 + $0x138] sm:$0xff]
  %v185 = vld [vmem:[%s1 + $0x140] sm:$0xff]
  %v186 = vld [vmem:[%s1 + $0x148] sm:$0xff]
  %v187 = vld [vmem:[%s1 + $0x150] sm:$0xff]
  %v188 = vld [vmem:[%s1 + $0x158] sm:$0xff]
  %v189 = vld [vmem:[%s1 + $0x160] sm:$0xff]
  %v190 = vld [vmem:[%s1 + $0x168] sm:$0xff]
  %v191 = vld [vmem:[%s1 + $0x170] sm:$0xff]
  %v192 = vld [vmem:[%s1 + $0x178] sm:$0xff]
  %v193 = vld [vmem:[%s1 + $0x180] sm:$0xff]
  %v194 = vld [vmem:[%s1 + $0x188] sm:$0xff]
  %v195 = vld [vmem:[%s1 + $0x190] sm:$0xff]
  %v196 = vld [vmem:[%s1 + $0x198] sm:$0xff]
  %v197 = vld [vmem:[%s1 + $0x1a0] sm:$0xff]
  %v198 = vld [vmem:[%s1 + $0x1a8] sm:$0xff]
  %v199 = vld [vmem:[%s1 + $0x1b0] sm:$0xff]
  %v200 = vld [vmem:[%s1 + $0x1b8] sm:$0xff]
  %v201 = vld [vmem:[%s1 + $0x1c0] sm:$0xff]
  %v202 = vld [vmem:[%s1 + $0x1c8] sm:$0xff]
  %v203 = vld [vmem:[%s1 + $0x1d0] sm:$0xff]
  %v204 = vld [vmem:[%s1 + $0x1d8] sm:$0xff]
  %v205 = vld [vmem:[%s1 + $0x1e0] sm:$0xff]
  %v206 = vld [vmem:[%s1 + $0x1e8] sm:$0xff]
  %v207 = vld [vmem:[%s1 + $0x1f0] sm:$0xff]
  %v208 = vld [vmem:[%s1 + $0x1f8] sm:$0xff]
  %v209 = vld [vmem:[%s1 + $0x200] sm:$0xff]
  %v210 = vld [vmem:[%s1 + $0x208] sm:$0xff]
  %v211 = vld [vmem:[%s1 + $0x210] sm:$0xff]
  %v212 = vld [vmem:[%s1 + $0x218] sm:$0xff]
  %v213 = vld [vmem:[%s1 + $0x220] sm:$0xff]
  %v214 = vld [vmem:[%s1 + $0x228] sm:$0xff]
  %v215 = vld [vmem:[%s1 + $0x230] sm:$0xff]
  %v216 = vld [vmem:[%s1 + $0x238] sm:$0xff]
  %v217 = vld [vmem:[%s1 + $0x240] sm:$0xff]
  %v218 = vld [vmem:[%s1 + $0x248] sm:$0xff]
  %v219 = vld [vmem:[%s1 + $0x250] sm:$0xff]
  %v220 = vld [vmem:[%s1 + $0x258] sm:$0xff]
  %v221 = vld [vmem:[%s1 + $0x260] sm:$0xff]
  %v222 = vld [vmem:[%s1 + $0x268] sm:$0xff]
  %v223 = vld [vmem:[%s1 + $0x270] sm:$0xff]
  %v224 = vld [vmem:[%s1 + $0x278] sm:$0xff]
  %v225 = vld [vmem:[%s1 + $0x280] sm:$0xff]
  %v226 = vld [vmem:[%s1 + $0x288] sm:$0xff]
  %v227 = vld [vmem:[%s1 + $0x290] sm:$0xff]
  %v228 = vld [vmem:[%s1 + $0x298] sm:$0xff]
  %v229 = vld [vmem:[%s1 + $0x2a0] sm:$0xff]
  %v230 = vld [vmem:[%s1 + $0x2a8] sm:$0xff]
  %v231 = vld [vmem:[%s1 + $0x2b0] sm:$0xff]
  %v232 = vld [vmem:[%s1 + $0x2b8] sm:$0xff]
  %v233 = vld [vmem:[%s1 + $0x2c0] sm:$0xff]
  %v234 = vld [vmem:[%s1 + $0x2c8] sm:$0xff]
  %v235 = vld [vmem:[%s1 + $0x2d0] sm:$0xff]
  %v236 = vld [vmem:[%s1 + $0x2d8] sm:$0xff]
  %v237 = vld [vmem:[%s1 + $0x2e0] sm:$0xff]
  %v238 = vld [vmem:[%s1 + $0x2e8] sm:$0xff]
  %v239 = vld [vmem:[%s1 + $0x2f0] sm:$0xff]
  %v240 = vld [vmem:[%s1 + $0x2f8] sm:$0xff]
  %v241 = vld [vmem:[%s1 + $0x300] sm:$0xff]
  %v242 = vld [vmem:[%s1 + $0x308] sm:$0xff]
  %v243 = vld [vmem:[%s1 + $0x310] sm:$0xff]
  %v244 = vld [vmem:[%s1 + $0x318] sm:$0xff]
  %v245 = vld [vmem:[%s1 + $0x320] sm:$0xff]
  %v246 = vld [vmem:[%s1 + $0x328] sm:$0xff]
  %v247 = vld [vmem:[%s1 + $0x330] sm:$0xff]
  %v248 = vld [vmem:[%s1 + $0x338] sm:$0xff]
  %v249 = vld [vmem:[%s1 + $0x340] sm:$0xff]
  %v250 = vld [vmem:[%s1 + $0x348] sm:$0xff]
  %v251 = vld [vmem:[%s1 + $0x350] sm:$0xff]
  %v252 = vld [vmem:[%s1 + $0x358] sm:$0xff]
  %v253 = vld [vmem:[%s1 + $0x360] sm:$0xff]
  %v254 = vld [vmem:[%s1 + $0x368] sm:$0xff]
  %v255 = vld [vmem:[%s1 + $0x370] sm:$0xff]
  %v256 = vld [vmem:[%s1 + $0x378] sm:$0xff]
  %v257 = vld [vmem:[%s1 + $0x380] sm:$0xff]
  %v258 = vld [vmem:[%s1 + $0x388] sm:$0xff]
  %v259 = vld [vmem:[%s1 + $0x390] sm:$0xff]
  %v260 = vld [vmem:[%s1 + $0x398] sm:$0xff]
  %v261 = vld [vmem:[%s1 + $0x3a0] sm:$0xff]
  %v262 = vld [vmem:[%s1 + $0x3a8] sm:$0xff]
  %v263 = vld [vmem:[%s1 + $0x3b0] sm:$0xff]
  %v264 = vld [vmem:[%s1 + $0x3b8] sm:$0xff]
  %v265 = vld [vmem:[%s1 + $0x3c0] sm:$0xff]
  %v266 = vld [vmem:[%s1 + $0x3c8] sm:$0xff]
  %v267 = vld [vmem:[%s1 + $0x3d0] sm:$0xff]
  %v268 = vld [vmem:[%s1 + $0x3d8] sm:$0xff]
  %v269 = vld [vmem:[%s1 + $0x3e0] sm:$0xff]
  %v270 = vld [vmem:[%s1 + $0x3e8] sm:$0xff]
  %v271 = vld [vmem:[%s1 + $0x3f0] sm:$0xff]
  %v272 = vld [vmem:[%s1 + $0x3f8] sm:$0xff]
  %v273 = vld [vmem:[%s1 + $0x400] sm:$0xff]
  %v274 = vld [vmem:[%s1 + $0x408] sm:$0xff]
  %v275 = vld [vmem:[%s1 + $0x410] sm:$0xff]
  %v276 = vld [vmem:[%s1 + $0x418] sm:$0xff]
  %v277 = vld [vmem:[%s1 + $0x420] sm:$0xff]
  %v278 = vld [vmem:[%s1 + $0x428] sm:$0xff]
  %v279 = vld [vmem:[%s1 + $0x430] sm:$0xff]
  %v280 = vld [vmem:[%s1 + $0x438] sm:$0xff]
  %v281 = vld [vmem:[%s1 + $0x440] sm:$0xff]
  %v282 = vld [vmem:[%s1 + $0x448] sm:$0xff]
  %v283 = vld [vmem:[%s1 + $0x450] sm:$0xff]
  %v284 = vld [vmem:[%s1 + $0x458] sm:$0xff]
  %v285 = vld [vmem:[%s1 + $0x460] sm:$0xff]
  %v286 = vld [vmem:[%s1 + $0x468] sm:$0xff]
  %v287 = vld [vmem:[%s1 + $0x470] sm:$0xff]
  %v288 = vld [vmem:[%s1 + $0x478] sm:$0xff]
  %v289 = vld [vmem:[%s1 + $0x480] sm:$0xff]
  %v290 = vld [vmem:[%s1 + $0x488] sm:$0xff]
  %v291 = vld [vmem:[%s1 + $0x490] sm:$0xff]
  %v292 = vld [vmem:[%s1 + $0x498] sm:$0xff]
  %v293 = vld [vmem:[%s1 + $0x4a0] sm:$0xff]
  %v294 = vld [vmem:[%s1 + $0x4a8] sm:$0xff]
  %v295 = vld [vmem:[%s1 + $0x4b0] sm:$0xff]
  %v296 = vld [vmem:[%s1 + $0x4b8] sm:$0xff]
  %v297 = vld [vmem:[%s1 + $0x4c0] sm:$0xff]
  %v298 = vld [vmem:[%s1 + $0x4c8] sm:$0xff]
  %v299 = vld [vmem:[%s1 + $0x4d0] sm:$0xff]
  %v300 = vld [vmem:[%s1 + $0x4d8] sm:$0xff]
  %v301 = vld [vmem:[%s1 + $0x4e0] sm:$0xff]
  %v302 = vld [vmem:[%s1 + $0x4e8] sm:$0xff]
  %v303 = vld [vmem:[%s1 + $0x4f0] sm:$0xff]
  %v304 = vld [vmem:[%s1 + $0x4f8] sm:$0xff]
  %v305 = vld [vmem:[%s1 + $0x500] sm:$0xff]
  %v306 = vld [vmem:[%s1 + $0x508] sm:$0xff]
  %v307 = vld [vmem:[%s1 + $0x510] sm:$0xff]
  %v308 = vld [vmem:[%s1 + $0x518] sm:$0xff]
  %v309 = vld [vmem:[%s1 + $0x520] sm:$0xff]
  %v310 = vld [vmem:[%s1 + $0x528] sm:$0xff]
  %v311 = vld [vmem:[%s1 + $0x530] sm:$0xff]
  %v312 = vld [vmem:[%s1 + $0x538] sm:$0xff]
  %v313 = vld [vmem:[%s1 + $0x540] sm:$0xff]
  %v314 = vld [vmem:[%s1 + $0x548] sm:$0xff]
  %v315 = vld [vmem:[%s1 + $0x550] sm:$0xff]
  %v316 = vld [vmem:[%s1 + $0x558] sm:$0xff]
  %v317 = vld [vmem:[%s1 + $0x560] sm:$0xff]
  %v318 = vld [vmem:[%s1 + $0x568] sm:$0xff]
  %v319 = vld [vmem:[%s1 + $0x570] sm:$0xff]
  %v320 = vld [vmem:[%s1 + $0x578] sm:$0xff]
  %v321 = vld [vmem:[%s1 + $0x580] sm:$0xff]
  %v322 = vld [vmem:[%s1 + $0x588] sm:$0xff]
  %v323 = vld [vmem:[%s1 + $0x590] sm:$0xff]
  %v324 = vld [vmem:[%s1 + $0x598] sm:$0xff]
  %v325 = vld [vmem:[%s1 + $0x5a0] sm:$0xff]
  %v326 = vld [vmem:[%s1 + $0x5a8] sm:$0xff]
  %v327 = vld [vmem:[%s1 + $0x5b0] sm:$0xff]
  %v328 = vld [vmem:[%s1 + $0x5b8] sm:$0xff]
  %v329 = vld [vmem:[%s1 + $0x5c0] sm:$0xff]
  %v330 = vld [vmem:[%s1 + $0x5c8] sm:$0xff]
  %v331 = vld [vmem:[%s1 + $0x5d0] sm:$0xff]
  %v332 = vld [vmem:[%s1 + $0x5d8] sm:$0xff]
  %v333 = vld [vmem:[%s1 + $0x5e0] sm:$0xff]
  %v334 = vld [vmem:[%s1 + $0x5e8] sm:$0xff]
  %v335 = vld [vmem:[%s1 + $0x5f0] sm:$0xff]
  %v336 = vld [vmem:[%s1 + $0x5f8] sm:$0xff]
  %v337 = vld [vmem:[%s1 + $0x600] sm:$0xff]
  %v338 = vld [vmem:[%s1 + $0x608] sm:$0xff]
  %v339 = vld [vmem:[%s1 + $0x610] sm:$0xff]
  %v340 = vld [vmem:[%s1 + $0x618] sm:$0xff]
  %v341 = vld [vmem:[%s1 + $0x620] sm:$0xff]
  %v342 = vld [vmem:[%s1 + $0x628] sm:$0xff]
  %v343 = vld [vmem:[%s1 + $0x630] sm:$0xff]
  %v344 = vld [vmem:[%s1 + $0x638] sm:$0xff]
  %v345 = vld [vmem:[%s1 + $0x640] sm:$0xff]
  %v346 = vld [vmem:[%s1 + $0x648] sm:$0xff]
  %v347 = vld [vmem:[%s1 + $0x650] sm:$0xff]
  %v348 = vld [vmem:[%s1 + $0x658] sm:$0xff]
  %v349 = vld [vmem:[%s1 + $0x660] sm:$0xff]
  %v350 = vld [vmem:[%s1 + $0x668] sm:$0xff]
  %v351 = vld [vmem:[%s1 + $0x670] sm:$0xff]
  %v352 = vld [vmem:[%s1 + $0x678] sm:$0xff]
  %v353 = vld [vmem:[%s1 + $0x680] sm:$0xff]
  %v354 = vld [vmem:[%s1 + $0x688] sm:$0xff]
  %v355 = vld [vmem:[%s1 + $0x690] sm:$0xff]
  %v356 = vld [vmem:[%s1 + $0x698] sm:$0xff]
  %v357 = vld [vmem:[%s1 + $0x6a0] sm:$0xff]
  %v358 = vld [vmem:[%s1 + $0x6a8] sm:$0xff]
  %v359 = vld [vmem:[%s1 + $0x6b0] sm:$0xff]
  %v360 = vld [vmem:[%s1 + $0x6b8] sm:$0xff]
  %v361 = vld [vmem:[%s1 + $0x6c0] sm:$0xff]
  %v362 = vld [vmem:[%s1 + $0x6c8] sm:$0xff]
  %v363 = vld [vmem:[%s1 + $0x6d0] sm:$0xff]
  %v364 = vld [vmem:[%s1 + $0x6d8] sm:$0xff]
  %v365 = vld [vmem:[%s1 + $0x6e0] sm:$0xff]
  %v366 = vld [vmem:[%s1 + $0x6e8] sm:$0xff]
  %v367 = vld [vmem:[%s1 + $0x6f0] sm:$0xff]
  %v368 = vld [vmem:[%s1 + $0x6f8] sm:$0xff]
  %v369 = vld [vmem:[%s1 + $0x700] sm:$0xff]
  %v370 = vld [vmem:[%s1 + $0x708] sm:$0xff]
  %v371 = vld [vmem:[%s1 + $0x710] sm:$0xff]
  %v372 = vld [vmem:[%s1 + $0x718] sm:$0xff]
  %v373 = vld [vmem:[%s1 + $0x720] sm:$0xff]
  %v374 = vld [vmem:[%s1 + $0x728] sm:$0xff]
  %v375 = vld [vmem:[%s1 + $0x730] sm:$0xff]
  %v376 = vld [vmem:[%s1 + $0x738] sm:$0xff]
  %v377 = vld [vmem:[%s1 + $0x740] sm:$0xff]
  %v378 = vld [vmem:[%s1 + $0x748] sm:$0xff]
  %v379 = vld [vmem:[%s1 + $0x750] sm:$0xff]
  %v380 = vld [vmem:[%s1 + $0x758] sm:$0xff]
  %v381 = vld [vmem:[%s1 + $0x760] sm:$0xff]
  %v382 = vld [vmem:[%s1 + $0x768] sm:$0xff]
  %v383 = vld [vmem:[%s1 + $0x770] sm:$0xff]
  %v384 = vld [vmem:[%s1 + $0x778] sm:$0xff]
  %v385 = vld [vmem:[%s1 + $0x780] sm:$0xff]
  %v386 = vld [vmem:[%s1 + $0x788] sm:$0xff]
  %v387 = vld [vmem:[%s1 + $0x790] sm:$0xff]
  %v388 = vld [vmem:[%s1 + $0x798] sm:$0xff]
  %v389 = vld [vmem:[%s1 + $0x7a0] sm:$0xff]
  %v390 = vld [vmem:[%s1 + $0x7a8] sm:$0xff]
  %v391 = vld [vmem:[%s1 + $0x7b0] sm:$0xff]
  %v392 = vld [vmem:[%s1 + $0x7b8] sm:$0xff]
  %v393 = vld [vmem:[%s1 + $0x7c0] sm:$0xff]
  %v394 = vld [vmem:[%s1 + $0x7c8] sm:$0xff]
  %v395 = vld [vmem:[%s1 + $0x7d0] sm:$0xff]
  %v396 = vld [vmem:[%s1 + $0x7d8] sm:$0xff]
  %v397 = vld [vmem:[%s1 + $0x7e0] sm:$0xff]
  %v398 = vld [vmem:[%s1 + $0x7e8] sm:$0xff]
  %v399 = vld [vmem:[%s1 + $0x7f0] sm:$0xff]
  %v400 = vld [vmem:[%s1 + $0x7f8] sm:$0xff]
  %401 = vmatprep.subr.mxu0 %v112
  %402 = vmatpush1.msra.mxu0 %v111
  %403 = vmatprep.subr.mxu0 %v110
  %404 = vmatpush1.msra.mxu0 %v109
  %405 = vmatprep.subr.mxu0 %v108
  %406 = vmatpush1.msra.mxu0 %v107
  %407 = vmatprep.subr.mxu0 %v106
  %408 = vmatpush1.msra.mxu0 %v105
  %409 = vmatprep.subr.mxu0 %v104
  %410 = vmatpush1.msra.mxu0 %v103
  %411 = vmatprep.subr.mxu0 %v102
  %412 = vmatpush1.msra.mxu0 %v101
  %413 = vmatprep.subr.mxu0 %v100
  %414 = vmatpush1.msra.mxu0 %v99
  %415 = vmatprep.subr.mxu0 %v98
  %416 = vmatpush1.msra.mxu0 %v97
  %417 = vmatprep.subr.mxu0 %v96
  %418 = vmatpush1.msra.mxu0 %v95
  %419 = vmatprep.subr.mxu0 %v94
  %420 = vmatpush1.msra.mxu0 %v93
  %421 = vmatprep.subr.mxu0 %v92
  %422 = vmatpush1.msra.mxu0 %v91
  %423 = vmatprep.subr.mxu0 %v90
  %424 = vmatpush1.msra.mxu0 %v89
  %425 = vmatprep.subr.mxu0 %v88
  %426 = vmatpush1.msra.mxu0 %v87
  %427 = vmatprep.subr.mxu0 %v86
  %428 = vmatpush1.msra.mxu0 %v85
  %429 = vmatprep.subr.mxu0 %v84
  %430 = vmatpush1.msra.mxu0 %v83
  %431 = vmatprep.subr.mxu0 %v82
  %432 = vmatpush1.msra.mxu0 %v81
  %433 = vmatprep.subr.mxu0 %v144
  %434 = vmatpush2.msra.mxu0 %v143
  %435 = vmatprep.subr.mxu0 %v142
  %436 = vmatpush2.msra.mxu0 %v141
  %437 = vmatprep.subr.mxu0 %v140
  %438 = vmatpush2.msra.mxu0 %v139
  %439 = vmatprep.subr.mxu0 %v138
  %440 = vmatpush2.msra.mxu0 %v137
  %441 = vmatprep.subr.mxu0 %v136
  %442 = vmatpush2.msra.mxu0 %v135
  %443 = vmatprep.subr.mxu0 %v134
  %444 = vmatpush2.msra.mxu0 %v133
  %445 = vmatprep.subr.mxu0 %v132
  %446 = vmatpush2.msra.mxu0 %v131
  %447 = vmatprep.subr.mxu0 %v130
  %448 = vmatpush2.msra.mxu0 %v129
  %449 = vmatprep.subr.mxu0 %v128
  %450 = vmatpush2.msra.mxu0 %v127
  %451 = vmatprep.subr.mxu0 %v126
  %452 = vmatpush2.msra.mxu0 %v125
  %453 = vmatprep.subr.mxu0 %v124
  %454 = vmatpush2.msra.mxu0 %v123
  %455 = vmatprep.subr.mxu0 %v122
  %456 = vmatpush2.msra.mxu0 %v121
  %457 = vmatprep.subr.mxu0 %v120
  %458 = vmatpush2.msra.mxu0 %v119
  %459 = vmatprep.subr.mxu0 %v118
  %460 = vmatpush2.msra.mxu0 %v117
  %461 = vmatprep.subr.mxu0 %v116
  %462 = vmatpush2.msra.mxu0 %v115
  %463 = vmatprep.subr.mxu0 %v114
  %464 = vmatpush2.msra.mxu0 %v113
  %465 = vmatprep.mubr.f32.mxu0 %v146
  %466 = vmatmul.mubr.f32.gmra.mxu0 %v145
  %v467 = vpop.f32.mrf.mxu0
  %v468 = vadd.f32 0.0, %v467
  %v469 = vpop.f32.mrf.mxu0
  %v470 = vadd.f32 0.0, %v469
  %471 = vmatprep.mubr.f32.mxu0 %v148
  %472 = vmatmul.mubr.f32.gmra.mxu0 %v147
  %v473 = vpop.f32.mrf.mxu0
  %v474 = vadd.f32 0.0, %v473
  %v475 = vpop.f32.mrf.mxu0
  %v476 = vadd.f32 0.0, %v475
  %477 = vmatprep.mubr.f32.mxu0 %v150
  %478 = vmatmul.mubr.f32.gmra.mxu0 %v149
  %v479 = vpop.f32.mrf.mxu0
  %v480 = vadd.f32 0.0, %v479
  %v481 = vpop.f32.mrf.mxu0
  %v482 = vadd.f32 0.0, %v481
  %483 = vmatprep.mubr.f32.mxu0 %v152
  %484 = vmatmul.mubr.f32.gmra.mxu0 %v151
  %v485 = vpop.f32.mrf.mxu0
  %v486 = vadd.f32 0.0, %v485
  %v487 = vpop.f32.mrf.mxu0
  %v488 = vadd.f32 0.0, %v487
  %489 = vmatprep.mubr.f32.mxu0 %v154
  %490 = vmatmul.mubr.f32.gmra.mxu0 %v153
  %v491 = vpop.f32.mrf.mxu0
  %v492 = vadd.f32 0.0, %v491
  %v493 = vpop.f32.mrf.mxu0
  %v494 = vadd.f32 0.0, %v493
  %495 = vmatprep.mubr.f32.mxu0 %v156
  %496 = vmatmul.mubr.f32.gmra.mxu0 %v155
  %v497 = vpop.f32.mrf.mxu0
  %v498 = vadd.f32 0.0, %v497
  %v499 = vpop.f32.mrf.mxu0
  %v500 = vadd.f32 0.0, %v499
  %501 = vmatprep.mubr.f32.mxu0 %v158
  %502 = vmatmul.mubr.f32.gmra.mxu0 %v157
  %v503 = vpop.f32.mrf.mxu0
  %v504 = vadd.f32 0.0, %v503
  %v505 = vpop.f32.mrf.mxu0
  %v506 = vadd.f32 0.0, %v505
  %507 = vmatprep.mubr.f32.mxu0 %v160
  %508 = vmatmul.mubr.f32.gmra.mxu0 %v159
  %v509 = vpop.f32.mrf.mxu0
  %v510 = vadd.f32 0.0, %v509
  %v511 = vpop.f32.mrf.mxu0
  %v512 = vadd.f32 0.0, %v511
  %513 = vmatprep.mubr.f32.mxu0 %v162
  %514 = vmatmul.mubr.f32.gmra.mxu0 %v161
  %v515 = vpop.f32.mrf.mxu0
  %v516 = vadd.f32 0.0, %v515
  %v517 = vpop.f32.mrf.mxu0
  %v518 = vadd.f32 0.0, %v517
  %519 = vmatprep.mubr.f32.mxu0 %v164
  %520 = vmatmul.mubr.f32.gmra.mxu0 %v163
  %v521 = vpop.f32.mrf.mxu0
  %v522 = vadd.f32 0.0, %v521
  %v523 = vpop.f32.mrf.mxu0
  %v524 = vadd.f32 0.0, %v523
  %525 = vmatprep.mubr.f32.mxu0 %v166
  %526 = vmatmul.mubr.f32.gmra.mxu0 %v165
  %v527 = vpop.f32.mrf.mxu0
  %v528 = vadd.f32 0.0, %v527
  %v529 = vpop.f32.mrf.mxu0
  %v530 = vadd.f32 0.0, %v529
  %531 = vmatprep.mubr.f32.mxu0 %v168
  %532 = vmatmul.mubr.f32.gmra.mxu0 %v167
  %v533 = vpop.f32.mrf.mxu0
  %v534 = vadd.f32 0.0, %v533
  %v535 = vpop.f32.mrf.mxu0
  %v536 = vadd.f32 0.0, %v535
  %537 = vmatprep.mubr.f32.mxu0 %v170
  %538 = vmatmul.mubr.f32.gmra.mxu0 %v169
  %v539 = vpop.f32.mrf.mxu0
  %v540 = vadd.f32 0.0, %v539
  %v541 = vpop.f32.mrf.mxu0
  %v542 = vadd.f32 0.0, %v541
  %543 = vmatprep.mubr.f32.mxu0 %v172
  %544 = vmatmul.mubr.f32.gmra.mxu0 %v171
  %v545 = vpop.f32.mrf.mxu0
  %v546 = vadd.f32 0.0, %v545
  %v547 = vpop.f32.mrf.mxu0
  %v548 = vadd.f32 0.0, %v547
  %549 = vmatprep.mubr.f32.mxu0 %v174
  %550 = vmatmul.mubr.f32.gmra.mxu0 %v173
  %v551 = vpop.f32.mrf.mxu0
  %v552 = vadd.f32 0.0, %v551
  %v553 = vpop.f32.mrf.mxu0
  %v554 = vadd.f32 0.0, %v553
  %555 = vmatprep.mubr.f32.mxu0 %v176
  %556 = vmatmul.mubr.f32.gmra.mxu0 %v175
  %v557 = vpop.f32.mrf.mxu0
  %v558 = vadd.f32 0.0, %v557
  %v559 = vpop.f32.mrf.mxu0
  %v560 = vadd.f32 0.0, %v559
  %561 = vmatprep.mubr.f32.mxu0 %v178
  %562 = vmatmul.mubr.f32.gmra.mxu0 %v177
  %v563 = vpop.f32.mrf.mxu0
  %v564 = vadd.f32 0.0, %v563
  %v565 = vpop.f32.mrf.mxu0
  %v566 = vadd.f32 0.0, %v565
  %567 = vmatprep.mubr.f32.mxu0 %v180
  %568 = vmatmul.mubr.f32.gmra.mxu0 %v179
  %v569 = vpop.f32.mrf.mxu0
  %v570 = vadd.f32 0.0, %v569
  %v571 = vpop.f32.mrf.mxu0
  %v572 = vadd.f32 0.0, %v571
  %573 = vmatprep.mubr.f32.mxu0 %v182
  %574 = vmatmul.mubr.f32.gmra.mxu0 %v181
  %v575 = vpop.f32.mrf.mxu0
  %v576 = vadd.f32 0.0, %v575
  %v577 = vpop.f32.mrf.mxu0
  %v578 = vadd.f32 0.0, %v577
  %579 = vmatprep.mubr.f32.mxu0 %v184
  %580 = vmatmul.mubr.f32.gmra.mxu0 %v183
  %v581 = vpop.f32.mrf.mxu0
  %v582 = vadd.f32 0.0, %v581
  %v583 = vpop.f32.mrf.mxu0
  %v584 = vadd.f32 0.0, %v583
  %585 = vmatprep.mubr.f32.mxu0 %v186
  %586 = vmatmul.mubr.f32.gmra.mxu0 %v185
  %v587 = vpop.f32.mrf.mxu0
  %v588 = vadd.f32 0.0, %v587
  %v589 = vpop.f32.mrf.mxu0
  %v590 = vadd.f32 0.0, %v589
  %591 = vmatprep.mubr.f32.mxu0 %v188
  %592 = vmatmul.mubr.f32.gmra.mxu0 %v187
  %v593 = vpop.f32.mrf.mxu0
  %v594 = vadd.f32 0.0, %v593
  %v595 = vpop.f32.mrf.mxu0
  %v596 = vadd.f32 0.0, %v595
  %597 = vmatprep.mubr.f32.mxu0 %v190
  %598 = vmatmul.mubr.f32.gmra.mxu0 %v189
  %v599 = vpop.f32.mrf.mxu0
  %v600 = vadd.f32 0.0, %v599
  %v601 = vpop.f32.mrf.mxu0
  %v602 = vadd.f32 0.0, %v601
  %603 = vmatprep.mubr.f32.mxu0 %v192
  %604 = vmatmul.mubr.f32.gmra.mxu0 %v191
  %v605 = vpop.f32.mrf.mxu0
  %v606 = vadd.f32 0.0, %v605
  %v607 = vpop.f32.mrf.mxu0
  %v608 = vadd.f32 0.0, %v607
  %609 = vmatprep.mubr.f32.mxu0 %v194
  %610 = vmatmul.mubr.f32.gmra.mxu0 %v193
  %v611 = vpop.f32.mrf.mxu0
  %v612 = vadd.f32 0.0, %v611
  %v613 = vpop.f32.mrf.mxu0
  %v614 = vadd.f32 0.0, %v613
  %615 = vmatprep.mubr.f32.mxu0 %v196
  %616 = vmatmul.mubr.f32.gmra.mxu0 %v195
  %v617 = vpop.f32.mrf.mxu0
  %v618 = vadd.f32 0.0, %v617
  %v619 = vpop.f32.mrf.mxu0
  %v620 = vadd.f32 0.0, %v619
  %621 = vmatprep.mubr.f32.mxu0 %v198
  %622 = vmatmul.mubr.f32.gmra.mxu0 %v197
  %v623 = vpop.f32.mrf.mxu0
  %v624 = vadd.f32 0.0, %v623
  %v625 = vpop.f32.mrf.mxu0
  %v626 = vadd.f32 0.0, %v625
  %627 = vmatprep.mubr.f32.mxu0 %v200
  %628 = vmatmul.mubr.f32.gmra.mxu0 %v199
  %v629 = vpop.f32.mrf.mxu0
  %v630 = vadd.f32 0.0, %v629
  %v631 = vpop.f32.mrf.mxu0
  %v632 = vadd.f32 0.0, %v631
  %633 = vmatprep.mubr.f32.mxu0 %v202
  %634 = vmatmul.mubr.f32.gmra.mxu0 %v201
  %v635 = vpop.f32.mrf.mxu0
  %v636 = vadd.f32 0.0, %v635
  %v637 = vpop.f32.mrf.mxu0
  %v638 = vadd.f32 0.0, %v637
  %639 = vmatprep.mubr.f32.mxu0 %v204
  %640 = vmatmul.mubr.f32.gmra.mxu0 %v203
  %v641 = vpop.f32.mrf.mxu0
  %v642 = vadd.f32 0.0, %v641
  %v643 = vpop.f32.mrf.mxu0
  %v644 = vadd.f32 0.0, %v643
  %645 = vmatprep.mubr.f32.mxu0 %v206
  %646 = vmatmul.mubr.f32.gmra.mxu0 %v205
  %v647 = vpop.f32.mrf.mxu0
  %v648 = vadd.f32 0.0, %v647
  %v649 = vpop.f32.mrf.mxu0
  %v650 = vadd.f32 0.0, %v649
  %651 = vmatprep.mubr.f32.mxu0 %v208
  %652 = vmatmul.mubr.f32.gmra.mxu0 %v207
  %v653 = vpop.f32.mrf.mxu0
  %v654 = vadd.f32 0.0, %v653
  %v655 = vpop.f32.mrf.mxu0
  %v656 = vadd.f32 0.0, %v655
  %657 = vmatprep.mubr.f32.mxu0 %v210
  %658 = vmatmul.mubr.f32.gmra.mxu0 %v209
  %v659 = vpop.f32.mrf.mxu0
  %v660 = vadd.f32 0.0, %v659
  %v661 = vpop.f32.mrf.mxu0
  %v662 = vadd.f32 0.0, %v661
  %663 = vmatprep.mubr.f32.mxu0 %v212
  %664 = vmatmul.mubr.f32.gmra.mxu0 %v211
  %v665 = vpop.f32.mrf.mxu0
  %v666 = vadd.f32 0.0, %v665
  %v667 = vpop.f32.mrf.mxu0
  %v668 = vadd.f32 0.0, %v667
  %669 = vmatprep.mubr.f32.mxu0 %v214
  %670 = vmatmul.mubr.f32.gmra.mxu0 %v213
  %v671 = vpop.f32.mrf.mxu0
  %v672 = vadd.f32 0.0, %v671
  %v673 = vpop.f32.mrf.mxu0
  %v674 = vadd.f32 0.0, %v673
  %675 = vmatprep.mubr.f32.mxu0 %v216
  %676 = vmatmul.mubr.f32.gmra.mxu0 %v215
  %v677 = vpop.f32.mrf.mxu0
  %v678 = vadd.f32 0.0, %v677
  %v679 = vpop.f32.mrf.mxu0
  %v680 = vadd.f32 0.0, %v679
  %681 = vmatprep.mubr.f32.mxu0 %v218
  %682 = vmatmul.mubr.f32.gmra.mxu0 %v217
  %v683 = vpop.f32.mrf.mxu0
  %v684 = vadd.f32 0.0, %v683
  %v685 = vpop.f32.mrf.mxu0
  %v686 = vadd.f32 0.0, %v685
  %687 = vmatprep.mubr.f32.mxu0 %v220
  %688 = vmatmul.mubr.f32.gmra.mxu0 %v219
  %v689 = vpop.f32.mrf.mxu0
  %v690 = vadd.f32 0.0, %v689
  %v691 = vpop.f32.mrf.mxu0
  %v692 = vadd.f32 0.0, %v691
  %693 = vmatprep.mubr.f32.mxu0 %v222
  %694 = vmatmul.mubr.f32.gmra.mxu0 %v221
  %v695 = vpop.f32.mrf.mxu0
  %v696 = vadd.f32 0.0, %v695
  %v697 = vpop.f32.mrf.mxu0
  %v698 = vadd.f32 0.0, %v697
  %699 = vmatprep.mubr.f32.mxu0 %v224
  %700 = vmatmul.mubr.f32.gmra.mxu0 %v223
  %v701 = vpop.f32.mrf.mxu0
  %v702 = vadd.f32 0.0, %v701
  %v703 = vpop.f32.mrf.mxu0
  %v704 = vadd.f32 0.0, %v703
  %705 = vmatprep.mubr.f32.mxu0 %v226
  %706 = vmatmul.mubr.f32.gmra.mxu0 %v225
  %v707 = vpop.f32.mrf.mxu0
  %v708 = vadd.f32 0.0, %v707
  %v709 = vpop.f32.mrf.mxu0
  %v710 = vadd.f32 0.0, %v709
  %711 = vmatprep.mubr.f32.mxu0 %v228
  %712 = vmatmul.mubr.f32.gmra.mxu0 %v227
  %v713 = vpop.f32.mrf.mxu0
  %v714 = vadd.f32 0.0, %v713
  %v715 = vpop.f32.mrf.mxu0
  %v716 = vadd.f32 0.0, %v715
  %717 = vmatprep.mubr.f32.mxu0 %v230
  %718 = vmatmul.mubr.f32.gmra.mxu0 %v229
  %v719 = vpop.f32.mrf.mxu0
  %v720 = vadd.f32 0.0, %v719
  %v721 = vpop.f32.mrf.mxu0
  %v722 = vadd.f32 0.0, %v721
  %723 = vmatprep.mubr.f32.mxu0 %v232
  %724 = vmatmul.mubr.f32.gmra.mxu0 %v231
  %v725 = vpop.f32.mrf.mxu0
  %v726 = vadd.f32 0.0, %v725
  %v727 = vpop.f32.mrf.mxu0
  %v728 = vadd.f32 0.0, %v727
  %729 = vmatprep.mubr.f32.mxu0 %v234
  %730 = vmatmul.mubr.f32.gmra.mxu0 %v233
  %v731 = vpop.f32.mrf.mxu0
  %v732 = vadd.f32 0.0, %v731
  %v733 = vpop.f32.mrf.mxu0
  %v734 = vadd.f32 0.0, %v733
  %735 = vmatprep.mubr.f32.mxu0 %v236
  %736 = vmatmul.mubr.f32.gmra.mxu0 %v235
  %v737 = vpop.f32.mrf.mxu0
  %v738 = vadd.f32 0.0, %v737
  %v739 = vpop.f32.mrf.mxu0
  %v740 = vadd.f32 0.0, %v739
  %741 = vmatprep.mubr.f32.mxu0 %v238
  %742 = vmatmul.mubr.f32.gmra.mxu0 %v237
  %v743 = vpop.f32.mrf.mxu0
  %v744 = vadd.f32 0.0, %v743
  %v745 = vpop.f32.mrf.mxu0
  %v746 = vadd.f32 0.0, %v745
  %747 = vmatprep.mubr.f32.mxu0 %v240
  %748 = vmatmul.mubr.f32.gmra.mxu0 %v239
  %v749 = vpop.f32.mrf.mxu0
  %v750 = vadd.f32 0.0, %v749
  %v751 = vpop.f32.mrf.mxu0
  %v752 = vadd.f32 0.0, %v751
  %753 = vmatprep.mubr.f32.mxu0 %v242
  %754 = vmatmul.mubr.f32.gmra.mxu0 %v241
  %v755 = vpop.f32.mrf.mxu0
  %v756 = vadd.f32 0.0, %v755
  %v757 = vpop.f32.mrf.mxu0
  %v758 = vadd.f32 0.0, %v757
  %759 = vmatprep.mubr.f32.mxu0 %v244
  %760 = vmatmul.mubr.f32.gmra.mxu0 %v243
  %v761 = vpop.f32.mrf.mxu0
  %v762 = vadd.f32 0.0, %v761
  %v763 = vpop.f32.mrf.mxu0
  %v764 = vadd.f32 0.0, %v763
  %765 = vmatprep.mubr.f32.mxu0 %v246
  %766 = vmatmul.mubr.f32.gmra.mxu0 %v245
  %v767 = vpop.f32.mrf.mxu0
  %v768 = vadd.f32 0.0, %v767
  %v769 = vpop.f32.mrf.mxu0
  %v770 = vadd.f32 0.0, %v769
  %771 = vmatprep.mubr.f32.mxu0 %v248
  %772 = vmatmul.mubr.f32.gmra.mxu0 %v247
  %v773 = vpop.f32.mrf.mxu0
  %v774 = vadd.f32 0.0, %v773
  %v775 = vpop.f32.mrf.mxu0
  %v776 = vadd.f32 0.0, %v775
  %777 = vmatprep.mubr.f32.mxu0 %v250
  %778 = vmatmul.mubr.f32.gmra.mxu0 %v249
  %v779 = vpop.f32.mrf.mxu0
  %v780 = vadd.f32 0.0, %v779
  %v781 = vpop.f32.mrf.mxu0
  %v782 = vadd.f32 0.0, %v781
  %783 = vmatprep.mubr.f32.mxu0 %v252
  %784 = vmatmul.mubr.f32.gmra.mxu0 %v251
  %v785 = vpop.f32.mrf.mxu0
  %v786 = vadd.f32 0.0, %v785
  %v787 = vpop.f32.mrf.mxu0
  %v788 = vadd.f32 0.0, %v787
  %789 = vmatprep.mubr.f32.mxu0 %v254
  %790 = vmatmul.mubr.f32.gmra.mxu0 %v253
  %v791 = vpop.f32.mrf.mxu0
  %v792 = vadd.f32 0.0, %v791
  %v793 = vpop.f32.mrf.mxu0
  %v794 = vadd.f32 0.0, %v793
  %795 = vmatprep.mubr.f32.mxu0 %v256
  %796 = vmatmul.mubr.f32.gmra.mxu0 %v255
  %v797 = vpop.f32.mrf.mxu0
  %v798 = vadd.f32 0.0, %v797
  %v799 = vpop.f32.mrf.mxu0
  %v800 = vadd.f32 0.0, %v799
  %801 = vmatprep.mubr.f32.mxu0 %v258
  %802 = vmatmul.mubr.f32.gmra.mxu0 %v257
  %v803 = vpop.f32.mrf.mxu0
  %v804 = vadd.f32 0.0, %v803
  %v805 = vpop.f32.mrf.mxu0
  %v806 = vadd.f32 0.0, %v805
  %807 = vmatprep.mubr.f32.mxu0 %v260
  %808 = vmatmul.mubr.f32.gmra.mxu0 %v259
  %v809 = vpop.f32.mrf.mxu0
  %v810 = vadd.f32 0.0, %v809
  %v811 = vpop.f32.mrf.mxu0
  %v812 = vadd.f32 0.0, %v811
  %813 = vmatprep.mubr.f32.mxu0 %v262
  %814 = vmatmul.mubr.f32.gmra.mxu0 %v261
  %v815 = vpop.f32.mrf.mxu0
  %v816 = vadd.f32 0.0, %v815
  %v817 = vpop.f32.mrf.mxu0
  %v818 = vadd.f32 0.0, %v817
  %819 = vmatprep.mubr.f32.mxu0 %v264
  %820 = vmatmul.mubr.f32.gmra.mxu0 %v263
  %v821 = vpop.f32.mrf.mxu0
  %v822 = vadd.f32 0.0, %v821
  %v823 = vpop.f32.mrf.mxu0
  %v824 = vadd.f32 0.0, %v823
  %825 = vmatprep.mubr.f32.mxu0 %v266
  %826 = vmatmul.mubr.f32.gmra.mxu0 %v265
  %v827 = vpop.f32.mrf.mxu0
  %v828 = vadd.f32 0.0, %v827
  %v829 = vpop.f32.mrf.mxu0
  %v830 = vadd.f32 0.0, %v829
  %831 = vmatprep.mubr.f32.mxu0 %v268
  %832 = vmatmul.mubr.f32.gmra.mxu0 %v267
  %v833 = vpop.f32.mrf.mxu0
  %v834 = vadd.f32 0.0, %v833
  %v835 = vpop.f32.mrf.mxu0
  %v836 = vadd.f32 0.0, %v835
  %837 = vmatprep.mubr.f32.mxu0 %v270
  %838 = vmatmul.mubr.f32.gmra.mxu0 %v269
  %v839 = vpop.f32.mrf.mxu0
  %v840 = vadd.f32 0.0, %v839
  %v841 = vpop.f32.mrf.mxu0
  %v842 = vadd.f32 0.0, %v841
  %843 = vmatprep.mubr.f32.mxu0 %v272
  %844 = vmatmul.mubr.f32.gmra.mxu0 %v271
  %v845 = vpop.f32.mrf.mxu0
  %v846 = vadd.f32 0.0, %v845
  %v847 = vpop.f32.mrf.mxu0
  %v848 = vadd.f32 0.0, %v847
  %849 = vmatprep.mubr.f32.mxu0 %v274
  %850 = vmatmul.mubr.f32.gmra.mxu0 %v273
  %v851 = vpop.f32.mrf.mxu0
  %v852 = vadd.f32 0.0, %v851
  %v853 = vpop.f32.mrf.mxu0
  %v854 = vadd.f32 0.0, %v853
  %855 = vmatprep.mubr.f32.mxu0 %v276
  %856 = vmatmul.mubr.f32.gmra.mxu0 %v275
  %v857 = vpop.f32.mrf.mxu0
  %v858 = vadd.f32 0.0, %v857
  %v859 = vpop.f32.mrf.mxu0
  %v860 = vadd.f32 0.0, %v859
  %861 = vmatprep.mubr.f32.mxu0 %v278
  %862 = vmatmul.mubr.f32.gmra.mxu0 %v277
  %v863 = vpop.f32.mrf.mxu0
  %v864 = vadd.f32 0.0, %v863
  %v865 = vpop.f32.mrf.mxu0
  %v866 = vadd.f32 0.0, %v865
  %867 = vmatprep.mubr.f32.mxu0 %v280
  %868 = vmatmul.mubr.f32.gmra.mxu0 %v279
  %v869 = vpop.f32.mrf.mxu0
  %v870 = vadd.f32 0.0, %v869
  %v871 = vpop.f32.mrf.mxu0
  %v872 = vadd.f32 0.0, %v871
  %873 = vmatprep.mubr.f32.mxu0 %v282
  %874 = vmatmul.mubr.f32.gmra.mxu0 %v281
  %v875 = vpop.f32.mrf.mxu0
  %v876 = vadd.f32 0.0, %v875
  %v877 = vpop.f32.mrf.mxu0
  %v878 = vadd.f32 0.0, %v877
  %879 = vmatprep.mubr.f32.mxu0 %v284
  %880 = vmatmul.mubr.f32.gmra.mxu0 %v283
  %v881 = vpop.f32.mrf.mxu0
  %v882 = vadd.f32 0.0, %v881
  %v883 = vpop.f32.mrf.mxu0
  %v884 = vadd.f32 0.0, %v883
  %885 = vmatprep.mubr.f32.mxu0 %v286
  %886 = vmatmul.mubr.f32.gmra.mxu0 %v285
  %v887 = vpop.f32.mrf.mxu0
  %v888 = vadd.f32 0.0, %v887
  %v889 = vpop.f32.mrf.mxu0
  %v890 = vadd.f32 0.0, %v889
  %891 = vmatprep.mubr.f32.mxu0 %v288
  %892 = vmatmul.mubr.f32.gmra.mxu0 %v287
  %v893 = vpop.f32.mrf.mxu0
  %v894 = vadd.f32 0.0, %v893
  %v895 = vpop.f32.mrf.mxu0
  %v896 = vadd.f32 0.0, %v895
  %897 = vmatprep.mubr.f32.mxu0 %v290
  %898 = vmatmul.mubr.f32.gmra.mxu0 %v289
  %v899 = vpop.f32.mrf.mxu0
  %v900 = vadd.f32 0.0, %v899
  %v901 = vpop.f32.mrf.mxu0
  %v902 = vadd.f32 0.0, %v901
  %903 = vmatprep.mubr.f32.mxu0 %v292
  %904 = vmatmul.mubr.f32.gmra.mxu0 %v291
  %v905 = vpop.f32.mrf.mxu0
  %v906 = vadd.f32 0.0, %v905
  %v907 = vpop.f32.mrf.mxu0
  %v908 = vadd.f32 0.0, %v907
  %909 = vmatprep.mubr.f32.mxu0 %v294
  %910 = vmatmul.mubr.f32.gmra.mxu0 %v293
  %v911 = vpop.f32.mrf.mxu0
  %v912 = vadd.f32 0.0, %v911
  %v913 = vpop.f32.mrf.mxu0
  %v914 = vadd.f32 0.0, %v913
  %915 = vmatprep.mubr.f32.mxu0 %v296
  %916 = vmatmul.mubr.f32.gmra.mxu0 %v295
  %v917 = vpop.f32.mrf.mxu0
  %v918 = vadd.f32 0.0, %v917
  %v919 = vpop.f32.mrf.mxu0
  %v920 = vadd.f32 0.0, %v919
  %921 = vmatprep.mubr.f32.mxu0 %v298
  %922 = vmatmul.mubr.f32.gmra.mxu0 %v297
  %v923 = vpop.f32.mrf.mxu0
  %v924 = vadd.f32 0.0, %v923
  %v925 = vpop.f32.mrf.mxu0
  %v926 = vadd.f32 0.0, %v925
  %927 = vmatprep.mubr.f32.mxu0 %v300
  %928 = vmatmul.mubr.f32.gmra.mxu0 %v299
  %v929 = vpop.f32.mrf.mxu0
  %v930 = vadd.f32 0.0, %v929
  %v931 = vpop.f32.mrf.mxu0
  %v932 = vadd.f32 0.0, %v931
  %933 = vmatprep.mubr.f32.mxu0 %v302
  %934 = vmatmul.mubr.f32.gmra.mxu0 %v301
  %v935 = vpop.f32.mrf.mxu0
  %v936 = vadd.f32 0.0, %v935
  %v937 = vpop.f32.mrf.mxu0
  %v938 = vadd.f32 0.0, %v937
  %939 = vmatprep.mubr.f32.mxu0 %v304
  %940 = vmatmul.mubr.f32.gmra.mxu0 %v303
  %v941 = vpop.f32.mrf.mxu0
  %v942 = vadd.f32 0.0, %v941
  %v943 = vpop.f32.mrf.mxu0
  %v944 = vadd.f32 0.0, %v943
  %945 = vmatprep.mubr.f32.mxu0 %v306
  %946 = vmatmul.mubr.f32.gmra.mxu0 %v305
  %v947 = vpop.f32.mrf.mxu0
  %v948 = vadd.f32 0.0, %v947
  %v949 = vpop.f32.mrf.mxu0
  %v950 = vadd.f32 0.0, %v949
  %951 = vmatprep.mubr.f32.mxu0 %v308
  %952 = vmatmul.mubr.f32.gmra.mxu0 %v307
  %v953 = vpop.f32.mrf.mxu0
  %v954 = vadd.f32 0.0, %v953
  %v955 = vpop.f32.mrf.mxu0
  %v956 = vadd.f32 0.0, %v955
  %957 = vmatprep.mubr.f32.mxu0 %v310
  %958 = vmatmul.mubr.f32.gmra.mxu0 %v309
  %v959 = vpop.f32.mrf.mxu0
  %v960 = vadd.f32 0.0, %v959
  %v961 = vpop.f32.mrf.mxu0
  %v962 = vadd.f32 0.0, %v961
  %963 = vmatprep.mubr.f32.mxu0 %v312
  %964 = vmatmul.mubr.f32.gmra.mxu0 %v311
  %v965 = vpop.f32.mrf.mxu0
  %v966 = vadd.f32 0.0, %v965
  %v967 = vpop.f32.mrf.mxu0
  %v968 = vadd.f32 0.0, %v967
  %969 = vmatprep.mubr.f32.mxu0 %v314
  %970 = vmatmul.mubr.f32.gmra.mxu0 %v313
  %v971 = vpop.f32.mrf.mxu0
  %v972 = vadd.f32 0.0, %v971
  %v973 = vpop.f32.mrf.mxu0
  %v974 = vadd.f32 0.0, %v973
  %975 = vmatprep.mubr.f32.mxu0 %v316
  %976 = vmatmul.mubr.f32.gmra.mxu0 %v315
  %v977 = vpop.f32.mrf.mxu0
  %v978 = vadd.f32 0.0, %v977
  %v979 = vpop.f32.mrf.mxu0
  %v980 = vadd.f32 0.0, %v979
  %981 = vmatprep.mubr.f32.mxu0 %v318
  %982 = vmatmul.mubr.f32.gmra.mxu0 %v317
  %v983 = vpop.f32.mrf.mxu0
  %v984 = vadd.f32 0.0, %v983
  %v985 = vpop.f32.mrf.mxu0
  %v986 = vadd.f32 0.0, %v985
  %987 = vmatprep.mubr.f32.mxu0 %v320
  %988 = vmatmul.mubr.f32.gmra.mxu0 %v319
  %v989 = vpop.f32.mrf.mxu0
  %v990 = vadd.f32 0.0, %v989
  %v991 = vpop.f32.mrf.mxu0
  %v992 = vadd.f32 0.0, %v991
  %993 = vmatprep.mubr.f32.mxu0 %v322
  %994 = vmatmul.mubr.f32.gmra.mxu0 %v321
  %v995 = vpop.f32.mrf.mxu0
  %v996 = vadd.f32 0.0, %v995
  %v997 = vpop.f32.mrf.mxu0
  %v998 = vadd.f32 0.0, %v997
  %999 = vmatprep.mubr.f32.mxu0 %v324
  %1000 = vmatmul.mubr.f32.gmra.mxu0 %v323
  %v1001 = vpop.f32.mrf.mxu0
  %v1002 = vadd.f32 0.0, %v1001
  %v1003 = vpop.f32.mrf.mxu0
  %v1004 = vadd.f32 0.0, %v1003
  %1005 = vmatprep.mubr.f32.mxu0 %v326
  %1006 = vmatmul.mubr.f32.gmra.mxu0 %v325
  %v1007 = vpop.f32.mrf.mxu0
  %v1008 = vadd.f32 0.0, %v1007
  %v1009 = vpop.f32.mrf.mxu0
  %v1010 = vadd.f32 0.0, %v1009
  %1011 = vmatprep.mubr.f32.mxu0 %v328
  %1012 = vmatmul.mubr.f32.gmra.mxu0 %v327
  %v1013 = vpop.f32.mrf.mxu0
  %v1014 = vadd.f32 0.0, %v1013
  %v1015 = vpop.f32.mrf.mxu0
  %v1016 = vadd.f32 0.0, %v1015
  %1017 = vmatprep.mubr.f32.mxu0 %v330
  %1018 = vmatmul.mubr.f32.gmra.mxu0 %v329
  %v1019 = vpop.f32.mrf.mxu0
  %v1020 = vadd.f32 0.0, %v1019
  %v1021 = vpop.f32.mrf.mxu0
  %v1022 = vadd.f32 0.0, %v1021
  %1023 = vmatprep.mubr.f32.mxu0 %v332
  %1024 = vmatmul.mubr.f32.gmra.mxu0 %v331
  %v1025 = vpop.f32.mrf.mxu0
  %v1026 = vadd.f32 0.0, %v1025
  %v1027 = vpop.f32.mrf.mxu0
  %v1028 = vadd.f32 0.0, %v1027
  %1029 = vmatprep.mubr.f32.mxu0 %v334
  %1030 = vmatmul.mubr.f32.gmra.mxu0 %v333
  %v1031 = vpop.f32.mrf.mxu0
  %v1032 = vadd.f32 0.0, %v1031
  %v1033 = vpop.f32.mrf.mxu0
  %v1034 = vadd.f32 0.0, %v1033
  %1035 = vmatprep.mubr.f32.mxu0 %v336
  %1036 = vmatmul.mubr.f32.gmra.mxu0 %v335
  %v1037 = vpop.f32.mrf.mxu0
  %v1038 = vadd.f32 0.0, %v1037
  %v1039 = vpop.f32.mrf.mxu0
  %v1040 = vadd.f32 0.0, %v1039
  %1041 = vmatprep.mubr.f32.mxu0 %v338
  %1042 = vmatmul.mubr.f32.gmra.mxu0 %v337
  %v1043 = vpop.f32.mrf.mxu0
  %v1044 = vadd.f32 0.0, %v1043
  %v1045 = vpop.f32.mrf.mxu0
  %v1046 = vadd.f32 0.0, %v1045
  %1047 = vmatprep.mubr.f32.mxu0 %v340
  %1048 = vmatmul.mubr.f32.gmra.mxu0 %v339
  %v1049 = vpop.f32.mrf.mxu0
  %v1050 = vadd.f32 0.0, %v1049
  %v1051 = vpop.f32.mrf.mxu0
  %v1052 = vadd.f32 0.0, %v1051
  %1053 = vmatprep.mubr.f32.mxu0 %v342
  %1054 = vmatmul.mubr.f32.gmra.mxu0 %v341
  %v1055 = vpop.f32.mrf.mxu0
  %v1056 = vadd.f32 0.0, %v1055
  %v1057 = vpop.f32.mrf.mxu0
  %v1058 = vadd.f32 0.0, %v1057
  %1059 = vmatprep.mubr.f32.mxu0 %v344
  %1060 = vmatmul.mubr.f32.gmra.mxu0 %v343
  %v1061 = vpop.f32.mrf.mxu0
  %v1062 = vadd.f32 0.0, %v1061
  %v1063 = vpop.f32.mrf.mxu0
  %v1064 = vadd.f32 0.0, %v1063
  %1065 = vmatprep.mubr.f32.mxu0 %v346
  %1066 = vmatmul.mubr.f32.gmra.mxu0 %v345
  %v1067 = vpop.f32.mrf.mxu0
  %v1068 = vadd.f32 0.0, %v1067
  %v1069 = vpop.f32.mrf.mxu0
  %v1070 = vadd.f32 0.0, %v1069
  %1071 = vmatprep.mubr.f32.mxu0 %v348
  %1072 = vmatmul.mubr.f32.gmra.mxu0 %v347
  %v1073 = vpop.f32.mrf.mxu0
  %v1074 = vadd.f32 0.0, %v1073
  %v1075 = vpop.f32.mrf.mxu0
  %v1076 = vadd.f32 0.0, %v1075
  %1077 = vmatprep.mubr.f32.mxu0 %v350
  %1078 = vmatmul.mubr.f32.gmra.mxu0 %v349
  %v1079 = vpop.f32.mrf.mxu0
  %v1080 = vadd.f32 0.0, %v1079
  %v1081 = vpop.f32.mrf.mxu0
  %v1082 = vadd.f32 0.0, %v1081
  %1083 = vmatprep.mubr.f32.mxu0 %v352
  %1084 = vmatmul.mubr.f32.gmra.mxu0 %v351
  %v1085 = vpop.f32.mrf.mxu0
  %v1086 = vadd.f32 0.0, %v1085
  %v1087 = vpop.f32.mrf.mxu0
  %v1088 = vadd.f32 0.0, %v1087
  %1089 = vmatprep.mubr.f32.mxu0 %v354
  %1090 = vmatmul.mubr.f32.gmra.mxu0 %v353
  %v1091 = vpop.f32.mrf.mxu0
  %v1092 = vadd.f32 0.0, %v1091
  %v1093 = vpop.f32.mrf.mxu0
  %v1094 = vadd.f32 0.0, %v1093
  %1095 = vmatprep.mubr.f32.mxu0 %v356
  %1096 = vmatmul.mubr.f32.gmra.mxu0 %v355
  %v1097 = vpop.f32.mrf.mxu0
  %v1098 = vadd.f32 0.0, %v1097
  %v1099 = vpop.f32.mrf.mxu0
  %v1100 = vadd.f32 0.0, %v1099
  %1101 = vmatprep.mubr.f32.mxu0 %v358
  %1102 = vmatmul.mubr.f32.gmra.mxu0 %v357
  %v1103 = vpop.f32.mrf.mxu0
  %v1104 = vadd.f32 0.0, %v1103
  %v1105 = vpop.f32.mrf.mxu0
  %v1106 = vadd.f32 0.0, %v1105
  %1107 = vmatprep.mubr.f32.mxu0 %v360
  %1108 = vmatmul.mubr.f32.gmra.mxu0 %v359
  %v1109 = vpop.f32.mrf.mxu0
  %v1110 = vadd.f32 0.0, %v1109
  %v1111 = vpop.f32.mrf.mxu0
  %v1112 = vadd.f32 0.0, %v1111
  %1113 = vmatprep.mubr.f32.mxu0 %v362
  %1114 = vmatmul.mubr.f32.gmra.mxu0 %v361
  %v1115 = vpop.f32.mrf.mxu0
  %v1116 = vadd.f32 0.0, %v1115
  %v1117 = vpop.f32.mrf.mxu0
  %v1118 = vadd.f32 0.0, %v1117
  %1119 = vmatprep.mubr.f32.mxu0 %v364
  %1120 = vmatmul.mubr.f32.gmra.mxu0 %v363
  %v1121 = vpop.f32.mrf.mxu0
  %v1122 = vadd.f32 0.0, %v1121
  %v1123 = vpop.f32.mrf.mxu0
  %v1124 = vadd.f32 0.0, %v1123
  %1125 = vmatprep.mubr.f32.mxu0 %v366
  %1126 = vmatmul.mubr.f32.gmra.mxu0 %v365
  %v1127 = vpop.f32.mrf.mxu0
  %v1128 = vadd.f32 0.0, %v1127
  %v1129 = vpop.f32.mrf.mxu0
  %v1130 = vadd.f32 0.0, %v1129
  %1131 = vmatprep.mubr.f32.mxu0 %v368
  %1132 = vmatmul.mubr.f32.gmra.mxu0 %v367
  %v1133 = vpop.f32.mrf.mxu0
  %v1134 = vadd.f32 0.0, %v1133
  %v1135 = vpop.f32.mrf.mxu0
  %v1136 = vadd.f32 0.0, %v1135
  %1137 = vmatprep.mubr.f32.mxu0 %v370
  %1138 = vmatmul.mubr.f32.gmra.mxu0 %v369
  %v1139 = vpop.f32.mrf.mxu0
  %v1140 = vadd.f32 0.0, %v1139
  %v1141 = vpop.f32.mrf.mxu0
  %v1142 = vadd.f32 0.0, %v1141
  %1143 = vmatprep.mubr.f32.mxu0 %v372
  %1144 = vmatmul.mubr.f32.gmra.mxu0 %v371
  %v1145 = vpop.f32.mrf.mxu0
  %v1146 = vadd.f32 0.0, %v1145
  %v1147 = vpop.f32.mrf.mxu0
  %v1148 = vadd.f32 0.0, %v1147
  %1149 = vmatprep.mubr.f32.mxu0 %v374
  %1150 = vmatmul.mubr.f32.gmra.mxu0 %v373
  %v1151 = vpop.f32.mrf.mxu0
  %v1152 = vadd.f32 0.0, %v1151
  %v1153 = vpop.f32.mrf.mxu0
  %v1154 = vadd.f32 0.0, %v1153
  %1155 = vmatprep.mubr.f32.mxu0 %v376
  %1156 = vmatmul.mubr.f32.gmra.mxu0 %v375
  %v1157 = vpop.f32.mrf.mxu0
  %v1158 = vadd.f32 0.0, %v1157
  %v1159 = vpop.f32.mrf.mxu0
  %v1160 = vadd.f32 0.0, %v1159
  %1161 = vmatprep.mubr.f32.mxu0 %v378
  %1162 = vmatmul.mubr.f32.gmra.mxu0 %v377
  %v1163 = vpop.f32.mrf.mxu0
  %v1164 = vadd.f32 0.0, %v1163
  %v1165 = vpop.f32.mrf.mxu0
  %v1166 = vadd.f32 0.0, %v1165
  %1167 = vmatprep.mubr.f32.mxu0 %v380
  %1168 = vmatmul.mubr.f32.gmra.mxu0 %v379
  %v1169 = vpop.f32.mrf.mxu0
  %v1170 = vadd.f32 0.0, %v1169
  %v1171 = vpop.f32.mrf.mxu0
  %v1172 = vadd.f32 0.0, %v1171
  %1173 = vmatprep.mubr.f32.mxu0 %v382
  %1174 = vmatmul.mubr.f32.gmra.mxu0 %v381
  %v1175 = vpop.f32.mrf.mxu0
  %v1176 = vadd.f32 0.0, %v1175
  %v1177 = vpop.f32.mrf.mxu0
  %v1178 = vadd.f32 0.0, %v1177
  %1179 = vmatprep.mubr.f32.mxu0 %v384
  %1180 = vmatmul.mubr.f32.gmra.mxu0 %v383
  %v1181 = vpop.f32.mrf.mxu0
  %v1182 = vadd.f32 0.0, %v1181
  %v1183 = vpop.f32.mrf.mxu0
  %v1184 = vadd.f32 0.0, %v1183
  %1185 = vmatprep.mubr.f32.mxu0 %v386
  %1186 = vmatmul.mubr.f32.gmra.mxu0 %v385
  %v1187 = vpop.f32.mrf.mxu0
  %v1188 = vadd.f32 0.0, %v1187
  %v1189 = vpop.f32.mrf.mxu0
  %v1190 = vadd.f32 0.0, %v1189
  %1191 = vmatprep.mubr.f32.mxu0 %v388
  %1192 = vmatmul.mubr.f32.gmra.mxu0 %v387
  %v1193 = vpop.f32.mrf.mxu0
  %v1194 = vadd.f32 0.0, %v1193
  %v1195 = vpop.f32.mrf.mxu0
  %v1196 = vadd.f32 0.0, %v1195
  %1197 = vmatprep.mubr.f32.mxu0 %v390
  %1198 = vmatmul.mubr.f32.gmra.mxu0 %v389
  %v1199 = vpop.f32.mrf.mxu0
  %v1200 = vadd.f32 0.0, %v1199
  %v1201 = vpop.f32.mrf.mxu0
  %v1202 = vadd.f32 0.0, %v1201
  %1203 = vmatprep.mubr.f32.mxu0 %v392
  %1204 = vmatmul.mubr.f32.gmra.mxu0 %v391
  %v1205 = vpop.f32.mrf.mxu0
  %v1206 = vadd.f32 0.0, %v1205
  %v1207 = vpop.f32.mrf.mxu0
  %v1208 = vadd.f32 0.0, %v1207
  %1209 = vmatprep.mubr.f32.mxu0 %v394
  %1210 = vmatmul.mubr.f32.gmra.mxu0 %v393
  %v1211 = vpop.f32.mrf.mxu0
  %v1212 = vadd.f32 0.0, %v1211
  %v1213 = vpop.f32.mrf.mxu0
  %v1214 = vadd.f32 0.0, %v1213
  %1215 = vmatprep.mubr.f32.mxu0 %v396
  %1216 = vmatmul.mubr.f32.gmra.mxu0 %v395
  %v1217 = vpop.f32.mrf.mxu0
  %v1218 = vadd.f32 0.0, %v1217
  %v1219 = vpop.f32.mrf.mxu0
  %v1220 = vadd.f32 0.0, %v1219
  %1221 = vmatprep.mubr.f32.mxu0 %v398
  %1222 = vmatmul.mubr.f32.gmra.mxu0 %v397
  %v1223 = vpop.f32.mrf.mxu0
  %v1224 = vadd.f32 0.0, %v1223
  %v1225 = vpop.f32.mrf.mxu0
  %v1226 = vadd.f32 0.0, %v1225
  %1227 = vmatprep.mubr.f32.mxu0 %v400
  %1228 = vmatmul.mubr.f32.gmra.mxu0 %v399
  %v1229 = vpop.f32.mrf.mxu0
  %v1230 = vadd.f32 0.0, %v1229
  %v1231 = vpop.f32.mrf.mxu0
  %v1232 = vadd.f32 0.0, %v1231
  %1233 = vdwg.mxu0
  %v1234 = vadd.f32 %v468, %v470
  %1235 = vadd.xlane.f32.xlu0 %v1234
  %v1236 = vpop.xlane.xlu0 %1235
  %v1237 = vadd.f32 %v474, %v476
  %1238 = vadd.xlane.f32.xlu0 %v1237
  %v1239 = vpop.xlane.xlu0 %1238
  %v1240 = vadd.f32 %v480, %v482
  %1241 = vadd.xlane.f32.xlu0 %v1240
  %v1242 = vpop.xlane.xlu0 %1241
  %v1243 = vadd.f32 %v486, %v488
  %1244 = vadd.xlane.f32.xlu0 %v1243
  %v1245 = vpop.xlane.xlu0 %1244
  %v1246 = vadd.f32 %v492, %v494
  %1247 = vadd.xlane.f32.xlu0 %v1246
  %v1248 = vpop.xlane.xlu0 %1247
  %v1249 = vadd.f32 %v498, %v500
  %1250 = vadd.xlane.f32.xlu0 %v1249
  %v1251 = vpop.xlane.xlu0 %1250
  %v1252 = vadd.f32 %v504, %v506
  %1253 = vadd.xlane.f32.xlu0 %v1252
  %v1254 = vpop.xlane.xlu0 %1253
  %v1255 = vadd.f32 %v510, %v512
  %1256 = vadd.xlane.f32.xlu0 %v1255
  %v1257 = vpop.xlane.xlu0 %1256
  %v1258 = vadd.f32 %v516, %v518
  %1259 = vadd.xlane.f32.xlu0 %v1258
  %v1260 = vpop.xlane.xlu0 %1259
  %v1261 = vadd.f32 %v522, %v524
  %1262 = vadd.xlane.f32.xlu0 %v1261
  %v1263 = vpop.xlane.xlu0 %1262
  %v1264 = vadd.f32 %v528, %v530
  %1265 = vadd.xlane.f32.xlu0 %v1264
  %v1266 = vpop.xlane.xlu0 %1265
  %v1267 = vadd.f32 %v534, %v536
  %1268 = vadd.xlane.f32.xlu0 %v1267
  %v1269 = vpop.xlane.xlu0 %1268
  %v1270 = vadd.f32 %v540, %v542
  %1271 = vadd.xlane.f32.xlu0 %v1270
  %v1272 = vpop.xlane.xlu0 %1271
  %v1273 = vadd.f32 %v546, %v548
  %1274 = vadd.xlane.f32.xlu0 %v1273
  %v1275 = vpop.xlane.xlu0 %1274
  %v1276 = vadd.f32 %v552, %v554
  %1277 = vadd.xlane.f32.xlu0 %v1276
  %v1278 = vpop.xlane.xlu0 %1277
  %v1279 = vadd.f32 %v558, %v560
  %1280 = vadd.xlane.f32.xlu0 %v1279
  %v1281 = vpop.xlane.xlu0 %1280
  %v1282 = vadd.f32 %v564, %v566
  %1283 = vadd.xlane.f32.xlu0 %v1282
  %v1284 = vpop.xlane.xlu0 %1283
  %v1285 = vadd.f32 %v570, %v572
  %1286 = vadd.xlane.f32.xlu0 %v1285
  %v1287 = vpop.xlane.xlu0 %1286
  %v1288 = vadd.f32 %v576, %v578
  %1289 = vadd.xlane.f32.xlu0 %v1288
  %v1290 = vpop.xlane.xlu0 %1289
  %v1291 = vadd.f32 %v582, %v584
  %1292 = vadd.xlane.f32.xlu0 %v1291
  %v1293 = vpop.xlane.xlu0 %1292
  %v1294 = vadd.f32 %v588, %v590
  %1295 = vadd.xlane.f32.xlu0 %v1294
  %v1296 = vpop.xlane.xlu0 %1295
  %v1297 = vadd.f32 %v594, %v596
  %1298 = vadd.xlane.f32.xlu0 %v1297
  %v1299 = vpop.xlane.xlu0 %1298
  %v1300 = vadd.f32 %v600, %v602
  %1301 = vadd.xlane.f32.xlu0 %v1300
  %v1302 = vpop.xlane.xlu0 %1301
  %v1303 = vadd.f32 %v606, %v608
  %1304 = vadd.xlane.f32.xlu0 %v1303
  %v1305 = vpop.xlane.xlu0 %1304
  %v1306 = vadd.f32 %v612, %v614
  %1307 = vadd.xlane.f32.xlu0 %v1306
  %v1308 = vpop.xlane.xlu0 %1307
  %v1309 = vadd.f32 %v618, %v620
  %1310 = vadd.xlane.f32.xlu0 %v1309
  %v1311 = vpop.xlane.xlu0 %1310
  %v1312 = vadd.f32 %v624, %v626
  %1313 = vadd.xlane.f32.xlu0 %v1312
  %v1314 = vpop.xlane.xlu0 %1313
  %v1315 = vadd.f32 %v630, %v632
  %1316 = vadd.xlane.f32.xlu0 %v1315
  %v1317 = vpop.xlane.xlu0 %1316
  %v1318 = vadd.f32 %v636, %v638
  %1319 = vadd.xlane.f32.xlu0 %v1318
  %v1320 = vpop.xlane.xlu0 %1319
  %v1321 = vadd.f32 %v642, %v644
  %1322 = vadd.xlane.f32.xlu0 %v1321
  %v1323 = vpop.xlane.xlu0 %1322
  %v1324 = vadd.f32 %v648, %v650
  %1325 = vadd.xlane.f32.xlu0 %v1324
  %v1326 = vpop.xlane.xlu0 %1325
  %v1327 = vadd.f32 %v654, %v656
  %1328 = vadd.xlane.f32.xlu0 %v1327
  %v1329 = vpop.xlane.xlu0 %1328
  %v1330 = vadd.f32 %v660, %v662
  %1331 = vadd.xlane.f32.xlu0 %v1330
  %v1332 = vpop.xlane.xlu0 %1331
  %v1333 = vadd.f32 %v666, %v668
  %1334 = vadd.xlane.f32.xlu0 %v1333
  %v1335 = vpop.xlane.xlu0 %1334
  %v1336 = vadd.f32 %v672, %v674
  %1337 = vadd.xlane.f32.xlu0 %v1336
  %v1338 = vpop.xlane.xlu0 %1337
  %v1339 = vadd.f32 %v678, %v680
  %1340 = vadd.xlane.f32.xlu0 %v1339
  %v1341 = vpop.xlane.xlu0 %1340
  %v1342 = vadd.f32 %v684, %v686
  %1343 = vadd.xlane.f32.xlu0 %v1342
  %v1344 = vpop.xlane.xlu0 %1343
  %v1345 = vadd.f32 %v690, %v692
  %1346 = vadd.xlane.f32.xlu0 %v1345
  %v1347 = vpop.xlane.xlu0 %1346
  %v1348 = vadd.f32 %v696, %v698
  %1349 = vadd.xlane.f32.xlu0 %v1348
  %v1350 = vpop.xlane.xlu0 %1349
  %v1351 = vadd.f32 %v702, %v704
  %1352 = vadd.xlane.f32.xlu0 %v1351
  %v1353 = vpop.xlane.xlu0 %1352
  %v1354 = vadd.f32 %v708, %v710
  %1355 = vadd.xlane.f32.xlu0 %v1354
  %v1356 = vpop.xlane.xlu0 %1355
  %v1357 = vadd.f32 %v714, %v716
  %1358 = vadd.xlane.f32.xlu0 %v1357
  %v1359 = vpop.xlane.xlu0 %1358
  %v1360 = vadd.f32 %v720, %v722
  %1361 = vadd.xlane.f32.xlu0 %v1360
  %v1362 = vpop.xlane.xlu0 %1361
  %v1363 = vadd.f32 %v726, %v728
  %1364 = vadd.xlane.f32.xlu0 %v1363
  %v1365 = vpop.xlane.xlu0 %1364
  %v1366 = vadd.f32 %v732, %v734
  %1367 = vadd.xlane.f32.xlu0 %v1366
  %v1368 = vpop.xlane.xlu0 %1367
  %v1369 = vadd.f32 %v738, %v740
  %1370 = vadd.xlane.f32.xlu0 %v1369
  %v1371 = vpop.xlane.xlu0 %1370
  %v1372 = vadd.f32 %v744, %v746
  %1373 = vadd.xlane.f32.xlu0 %v1372
  %v1374 = vpop.xlane.xlu0 %1373
  %v1375 = vadd.f32 %v750, %v752
  %1376 = vadd.xlane.f32.xlu0 %v1375
  %v1377 = vpop.xlane.xlu0 %1376
  %v1378 = vadd.f32 %v756, %v758
  %1379 = vadd.xlane.f32.xlu0 %v1378
  %v1380 = vpop.xlane.xlu0 %1379
  %v1381 = vadd.f32 %v762, %v764
  %1382 = vadd.xlane.f32.xlu0 %v1381
  %v1383 = vpop.xlane.xlu0 %1382
  %v1384 = vadd.f32 %v768, %v770
  %1385 = vadd.xlane.f32.xlu0 %v1384
  %v1386 = vpop.xlane.xlu0 %1385
  %v1387 = vadd.f32 %v774, %v776
  %1388 = vadd.xlane.f32.xlu0 %v1387
  %v1389 = vpop.xlane.xlu0 %1388
  %v1390 = vadd.f32 %v780, %v782
  %1391 = vadd.xlane.f32.xlu0 %v1390
  %v1392 = vpop.xlane.xlu0 %1391
  %v1393 = vadd.f32 %v786, %v788
  %1394 = vadd.xlane.f32.xlu0 %v1393
  %v1395 = vpop.xlane.xlu0 %1394
  %v1396 = vadd.f32 %v792, %v794
  %1397 = vadd.xlane.f32.xlu0 %v1396
  %v1398 = vpop.xlane.xlu0 %1397
  %v1399 = vadd.f32 %v798, %v800
  %1400 = vadd.xlane.f32.xlu0 %v1399
  %v1401 = vpop.xlane.xlu0 %1400
  %v1402 = vadd.f32 %v804, %v806
  %1403 = vadd.xlane.f32.xlu0 %v1402
  %v1404 = vpop.xlane.xlu0 %1403
  %v1405 = vadd.f32 %v810, %v812
  %1406 = vadd.xlane.f32.xlu0 %v1405
  %v1407 = vpop.xlane.xlu0 %1406
  %v1408 = vadd.f32 %v816, %v818
  %1409 = vadd.xlane.f32.xlu0 %v1408
  %v1410 = vpop.xlane.xlu0 %1409
  %v1411 = vadd.f32 %v822, %v824
  %1412 = vadd.xlane.f32.xlu0 %v1411
  %v1413 = vpop.xlane.xlu0 %1412
  %v1414 = vadd.f32 %v828, %v830
  %1415 = vadd.xlane.f32.xlu0 %v1414
  %v1416 = vpop.xlane.xlu0 %1415
  %v1417 = vadd.f32 %v834, %v836
  %1418 = vadd.xlane.f32.xlu0 %v1417
  %v1419 = vpop.xlane.xlu0 %1418
  %v1420 = vadd.f32 %v840, %v842
  %1421 = vadd.xlane.f32.xlu0 %v1420
  %v1422 = vpop.xlane.xlu0 %1421
  %v1423 = vadd.f32 %v846, %v848
  %1424 = vadd.xlane.f32.xlu0 %v1423
  %v1425 = vpop.xlane.xlu0 %1424
  %v1426 = vadd.f32 %v852, %v854
  %1427 = vadd.xlane.f32.xlu0 %v1426
  %v1428 = vpop.xlane.xlu0 %1427
  %v1429 = vadd.f32 %v858, %v860
  %1430 = vadd.xlane.f32.xlu0 %v1429
  %v1431 = vpop.xlane.xlu0 %1430
  %v1432 = vadd.f32 %v864, %v866
  %1433 = vadd.xlane.f32.xlu0 %v1432
  %v1434 = vpop.xlane.xlu0 %1433
  %v1435 = vadd.f32 %v870, %v872
  %1436 = vadd.xlane.f32.xlu0 %v1435
  %v1437 = vpop.xlane.xlu0 %1436
  %v1438 = vadd.f32 %v876, %v878
  %1439 = vadd.xlane.f32.xlu0 %v1438
  %v1440 = vpop.xlane.xlu0 %1439
  %v1441 = vadd.f32 %v882, %v884
  %1442 = vadd.xlane.f32.xlu0 %v1441
  %v1443 = vpop.xlane.xlu0 %1442
  %v1444 = vadd.f32 %v888, %v890
  %1445 = vadd.xlane.f32.xlu0 %v1444
  %v1446 = vpop.xlane.xlu0 %1445
  %v1447 = vadd.f32 %v894, %v896
  %1448 = vadd.xlane.f32.xlu0 %v1447
  %v1449 = vpop.xlane.xlu0 %1448
  %v1450 = vadd.f32 %v900, %v902
  %1451 = vadd.xlane.f32.xlu0 %v1450
  %v1452 = vpop.xlane.xlu0 %1451
  %v1453 = vadd.f32 %v906, %v908
  %1454 = vadd.xlane.f32.xlu0 %v1453
  %v1455 = vpop.xlane.xlu0 %1454
  %v1456 = vadd.f32 %v912, %v914
  %1457 = vadd.xlane.f32.xlu0 %v1456
  %v1458 = vpop.xlane.xlu0 %1457
  %v1459 = vadd.f32 %v918, %v920
  %1460 = vadd.xlane.f32.xlu0 %v1459
  %v1461 = vpop.xlane.xlu0 %1460
  %v1462 = vadd.f32 %v924, %v926
  %1463 = vadd.xlane.f32.xlu0 %v1462
  %v1464 = vpop.xlane.xlu0 %1463
  %v1465 = vadd.f32 %v930, %v932
  %1466 = vadd.xlane.f32.xlu0 %v1465
  %v1467 = vpop.xlane.xlu0 %1466
  %v1468 = vadd.f32 %v936, %v938
  %1469 = vadd.xlane.f32.xlu0 %v1468
  %v1470 = vpop.xlane.xlu0 %1469
  %v1471 = vadd.f32 %v942, %v944
  %1472 = vadd.xlane.f32.xlu0 %v1471
  %v1473 = vpop.xlane.xlu0 %1472
  %v1474 = vadd.f32 %v948, %v950
  %1475 = vadd.xlane.f32.xlu0 %v1474
  %v1476 = vpop.xlane.xlu0 %1475
  %v1477 = vadd.f32 %v954, %v956
  %1478 = vadd.xlane.f32.xlu0 %v1477
  %v1479 = vpop.xlane.xlu0 %1478
  %v1480 = vadd.f32 %v960, %v962
  %1481 = vadd.xlane.f32.xlu0 %v1480
  %v1482 = vpop.xlane.xlu0 %1481
  %v1483 = vadd.f32 %v966, %v968
  %1484 = vadd.xlane.f32.xlu0 %v1483
  %v1485 = vpop.xlane.xlu0 %1484
  %v1486 = vadd.f32 %v972, %v974
  %1487 = vadd.xlane.f32.xlu0 %v1486
  %v1488 = vpop.xlane.xlu0 %1487
  %v1489 = vadd.f32 %v978, %v980
  %1490 = vadd.xlane.f32.xlu0 %v1489
  %v1491 = vpop.xlane.xlu0 %1490
  %v1492 = vadd.f32 %v984, %v986
  %1493 = vadd.xlane.f32.xlu0 %v1492
  %v1494 = vpop.xlane.xlu0 %1493
  %v1495 = vadd.f32 %v990, %v992
  %1496 = vadd.xlane.f32.xlu0 %v1495
  %v1497 = vpop.xlane.xlu0 %1496
  %v1498 = vadd.f32 %v996, %v998
  %1499 = vadd.xlane.f32.xlu0 %v1498
  %v1500 = vpop.xlane.xlu0 %1499
  %v1501 = vadd.f32 %v1002, %v1004
  %1502 = vadd.xlane.f32.xlu0 %v1501
  %v1503 = vpop.xlane.xlu0 %1502
  %v1504 = vadd.f32 %v1008, %v1010
  %1505 = vadd.xlane.f32.xlu0 %v1504
  %v1506 = vpop.xlane.xlu0 %1505
  %v1507 = vadd.f32 %v1014, %v1016
  %1508 = vadd.xlane.f32.xlu0 %v1507
  %v1509 = vpop.xlane.xlu0 %1508
  %v1510 = vadd.f32 %v1020, %v1022
  %1511 = vadd.xlane.f32.xlu0 %v1510
  %v1512 = vpop.xlane.xlu0 %1511
  %v1513 = vadd.f32 %v1026, %v1028
  %1514 = vadd.xlane.f32.xlu0 %v1513
  %v1515 = vpop.xlane.xlu0 %1514
  %v1516 = vadd.f32 %v1032, %v1034
  %1517 = vadd.xlane.f32.xlu0 %v1516
  %v1518 = vpop.xlane.xlu0 %1517
  %v1519 = vadd.f32 %v1038, %v1040
  %1520 = vadd.xlane.f32.xlu0 %v1519
  %v1521 = vpop.xlane.xlu0 %1520
  %v1522 = vadd.f32 %v1044, %v1046
  %1523 = vadd.xlane.f32.xlu0 %v1522
  %v1524 = vpop.xlane.xlu0 %1523
  %v1525 = vadd.f32 %v1050, %v1052
  %1526 = vadd.xlane.f32.xlu0 %v1525
  %v1527 = vpop.xlane.xlu0 %1526
  %v1528 = vadd.f32 %v1056, %v1058
  %1529 = vadd.xlane.f32.xlu0 %v1528
  %v1530 = vpop.xlane.xlu0 %1529
  %v1531 = vadd.f32 %v1062, %v1064
  %1532 = vadd.xlane.f32.xlu0 %v1531
  %v1533 = vpop.xlane.xlu0 %1532
  %v1534 = vadd.f32 %v1068, %v1070
  %1535 = vadd.xlane.f32.xlu0 %v1534
  %v1536 = vpop.xlane.xlu0 %1535
  %v1537 = vadd.f32 %v1074, %v1076
  %1538 = vadd.xlane.f32.xlu0 %v1537
  %v1539 = vpop.xlane.xlu0 %1538
  %v1540 = vadd.f32 %v1080, %v1082
  %1541 = vadd.xlane.f32.xlu0 %v1540
  %v1542 = vpop.xlane.xlu0 %1541
  %v1543 = vadd.f32 %v1086, %v1088
  %1544 = vadd.xlane.f32.xlu0 %v1543
  %v1545 = vpop.xlane.xlu0 %1544
  %v1546 = vadd.f32 %v1092, %v1094
  %1547 = vadd.xlane.f32.xlu0 %v1546
  %v1548 = vpop.xlane.xlu0 %1547
  %v1549 = vadd.f32 %v1098, %v1100
  %1550 = vadd.xlane.f32.xlu0 %v1549
  %v1551 = vpop.xlane.xlu0 %1550
  %v1552 = vadd.f32 %v1104, %v1106
  %1553 = vadd.xlane.f32.xlu0 %v1552
  %v1554 = vpop.xlane.xlu0 %1553
  %v1555 = vadd.f32 %v1110, %v1112
  %1556 = vadd.xlane.f32.xlu0 %v1555
  %v1557 = vpop.xlane.xlu0 %1556
  %v1558 = vadd.f32 %v1116, %v1118
  %1559 = vadd.xlane.f32.xlu0 %v1558
  %v1560 = vpop.xlane.xlu0 %1559
  %v1561 = vadd.f32 %v1122, %v1124
  %1562 = vadd.xlane.f32.xlu0 %v1561
  %v1563 = vpop.xlane.xlu0 %1562
  %v1564 = vadd.f32 %v1128, %v1130
  %1565 = vadd.xlane.f32.xlu0 %v1564
  %v1566 = vpop.xlane.xlu0 %1565
  %v1567 = vadd.f32 %v1134, %v1136
  %1568 = vadd.xlane.f32.xlu0 %v1567
  %v1569 = vpop.xlane.xlu0 %1568
  %v1570 = vadd.f32 %v1140, %v1142
  %1571 = vadd.xlane.f32.xlu0 %v1570
  %v1572 = vpop.xlane.xlu0 %1571
  %v1573 = vadd.f32 %v1146, %v1148
  %1574 = vadd.xlane.f32.xlu0 %v1573
  %v1575 = vpop.xlane.xlu0 %1574
  %v1576 = vadd.f32 %v1152, %v1154
  %1577 = vadd.xlane.f32.xlu0 %v1576
  %v1578 = vpop.xlane.xlu0 %1577
  %v1579 = vadd.f32 %v1158, %v1160
  %1580 = vadd.xlane.f32.xlu0 %v1579
  %v1581 = vpop.xlane.xlu0 %1580
  %v1582 = vadd.f32 %v1164, %v1166
  %1583 = vadd.xlane.f32.xlu0 %v1582
  %v1584 = vpop.xlane.xlu0 %1583
  %v1585 = vadd.f32 %v1170, %v1172
  %1586 = vadd.xlane.f32.xlu0 %v1585
  %v1587 = vpop.xlane.xlu0 %1586
  %v1588 = vadd.f32 %v1176, %v1178
  %1589 = vadd.xlane.f32.xlu0 %v1588
  %v1590 = vpop.xlane.xlu0 %1589
  %v1591 = vadd.f32 %v1182, %v1184
  %1592 = vadd.xlane.f32.xlu0 %v1591
  %v1593 = vpop.xlane.xlu0 %1592
  %v1594 = vadd.f32 %v1188, %v1190
  %1595 = vadd.xlane.f32.xlu0 %v1594
  %v1596 = vpop.xlane.xlu0 %1595
  %v1597 = vadd.f32 %v1194, %v1196
  %1598 = vadd.xlane.f32.xlu0 %v1597
  %v1599 = vpop.xlane.xlu0 %1598
  %v1600 = vadd.f32 %v1200, %v1202
  %1601 = vadd.xlane.f32.xlu0 %v1600
  %v1602 = vpop.xlane.xlu0 %1601
  %v1603 = vadd.f32 %v1206, %v1208
  %1604 = vadd.xlane.f32.xlu0 %v1603
  %v1605 = vpop.xlane.xlu0 %1604
  %v1606 = vadd.f32 %v1212, %v1214
  %1607 = vadd.xlane.f32.xlu0 %v1606
  %v1608 = vpop.xlane.xlu0 %1607
  %v1609 = vadd.f32 %v1218, %v1220
  %1610 = vadd.xlane.f32.xlu0 %v1609
  %v1611 = vpop.xlane.xlu0 %1610
  %v1612 = vadd.f32 %v1224, %v1226
  %1613 = vadd.xlane.f32.xlu0 %v1612
  %v1614 = vpop.xlane.xlu0 %1613
  %v1615 = vadd.f32 %v1230, %v1232
  %1616 = vadd.xlane.f32.xlu0 %v1615
  %v1617 = vpop.xlane.xlu0 %1616
  %v1618 = vmul.f32 %v1236, 0.0051020407
  %v1619 = vmul.f32 %v1239, 0.0051020407
  %v1620 = vmul.f32 %v1242, 0.0051020407
  %v1621 = vmul.f32 %v1245, 0.0051020407
  %v1622 = vmul.f32 %v1248, 0.0051020407
  %v1623 = vmul.f32 %v1251, 0.0051020407
  %v1624 = vmul.f32 %v1254, 0.0051020407
  %v1625 = vmul.f32 %v1257, 0.0051020407
  %v1626 = vmul.f32 %v1260, 0.0051020407
  %v1627 = vmul.f32 %v1263, 0.0051020407
  %v1628 = vmul.f32 %v1266, 0.0051020407
  %v1629 = vmul.f32 %v1269, 0.0051020407
  %v1630 = vmul.f32 %v1272, 0.0051020407
  %v1631 = vmul.f32 %v1275, 0.0051020407
  %v1632 = vmul.f32 %v1278, 0.0051020407
  %v1633 = vmul.f32 %v1281, 0.0051020407
  %v1634 = vmul.f32 %v1284, 0.0051020407
  %v1635 = vmul.f32 %v1287, 0.0051020407
  %v1636 = vmul.f32 %v1290, 0.0051020407
  %v1637 = vmul.f32 %v1293, 0.0051020407
  %v1638 = vmul.f32 %v1296, 0.0051020407
  %v1639 = vmul.f32 %v1299, 0.0051020407
  %v1640 = vmul.f32 %v1302, 0.0051020407
  %v1641 = vmul.f32 %v1305, 0.0051020407
  %v1642 = vmul.f32 %v1308, 0.0051020407
  %v1643 = vmul.f32 %v1311, 0.0051020407
  %v1644 = vmul.f32 %v1314, 0.0051020407
  %v1645 = vmul.f32 %v1317, 0.0051020407
  %v1646 = vmul.f32 %v1320, 0.0051020407
  %v1647 = vmul.f32 %v1323, 0.0051020407
  %v1648 = vmul.f32 %v1326, 0.0051020407
  %v1649 = vmul.f32 %v1329, 0.0051020407
  %v1650 = vmul.f32 %v1332, 0.0051020407
  %v1651 = vmul.f32 %v1335, 0.0051020407
  %v1652 = vmul.f32 %v1338, 0.0051020407
  %v1653 = vmul.f32 %v1341, 0.0051020407
  %v1654 = vmul.f32 %v1344, 0.0051020407
  %v1655 = vmul.f32 %v1347, 0.0051020407
  %v1656 = vmul.f32 %v1350, 0.0051020407
  %v1657 = vmul.f32 %v1353, 0.0051020407
  %v1658 = vmul.f32 %v1356, 0.0051020407
  %v1659 = vmul.f32 %v1359, 0.0051020407
  %v1660 = vmul.f32 %v1362, 0.0051020407
  %v1661 = vmul.f32 %v1365, 0.0051020407
  %v1662 = vmul.f32 %v1368, 0.0051020407
  %v1663 = vmul.f32 %v1371, 0.0051020407
  %v1664 = vmul.f32 %v1374, 0.0051020407
  %v1665 = vmul.f32 %v1377, 0.0051020407
  %v1666 = vmul.f32 %v1380, 0.0051020407
  %v1667 = vmul.f32 %v1383, 0.0051020407
  %v1668 = vmul.f32 %v1386, 0.0051020407
  %v1669 = vmul.f32 %v1389, 0.0051020407
  %v1670 = vmul.f32 %v1392, 0.0051020407
  %v1671 = vmul.f32 %v1395, 0.0051020407
  %v1672 = vmul.f32 %v1398, 0.0051020407
  %v1673 = vmul.f32 %v1401, 0.0051020407
  %v1674 = vmul.f32 %v1404, 0.0051020407
  %v1675 = vmul.f32 %v1407, 0.0051020407
  %v1676 = vmul.f32 %v1410, 0.0051020407
  %v1677 = vmul.f32 %v1413, 0.0051020407
  %v1678 = vmul.f32 %v1416, 0.0051020407
  %v1679 = vmul.f32 %v1419, 0.0051020407
  %v1680 = vmul.f32 %v1422, 0.0051020407
  %v1681 = vmul.f32 %v1425, 0.0051020407
  %v1682 = vmul.f32 %v1428, 0.0051020407
  %v1683 = vmul.f32 %v1431, 0.0051020407
  %v1684 = vmul.f32 %v1434, 0.0051020407
  %v1685 = vmul.f32 %v1437, 0.0051020407
  %v1686 = vmul.f32 %v1440, 0.0051020407
  %v1687 = vmul.f32 %v1443, 0.0051020407
  %v1688 = vmul.f32 %v1446, 0.0051020407
  %v1689 = vmul.f32 %v1449, 0.0051020407
  %v1690 = vmul.f32 %v1452, 0.0051020407
  %v1691 = vmul.f32 %v1455, 0.0051020407
  %v1692 = vmul.f32 %v1458, 0.0051020407
  %v1693 = vmul.f32 %v1461, 0.0051020407
  %v1694 = vmul.f32 %v1464, 0.0051020407
  %v1695 = vmul.f32 %v1467, 0.0051020407
  %v1696 = vmul.f32 %v1470, 0.0051020407
  %v1697 = vmul.f32 %v1473, 0.0051020407
  %v1698 = vmul.f32 %v1476, 0.0051020407
  %v1699 = vmul.f32 %v1479, 0.0051020407
  %v1700 = vmul.f32 %v1482, 0.0051020407
  %v1701 = vmul.f32 %v1485, 0.0051020407
  %v1702 = vmul.f32 %v1488, 0.0051020407
  %v1703 = vmul.f32 %v1491, 0.0051020407
  %v1704 = vmul.f32 %v1494, 0.0051020407
  %v1705 = vmul.f32 %v1497, 0.0051020407
  %v1706 = vmul.f32 %v1500, 0.0051020407
  %v1707 = vmul.f32 %v1503, 0.0051020407
  %v1708 = vmul.f32 %v1506, 0.0051020407
  %v1709 = vmul.f32 %v1509, 0.0051020407
  %v1710 = vmul.f32 %v1512, 0.0051020407
  %v1711 = vmul.f32 %v1515, 0.0051020407
  %v1712 = vmul.f32 %v1518, 0.0051020407
  %v1713 = vmul.f32 %v1521, 0.0051020407
  %v1714 = vmul.f32 %v1524, 0.0051020407
  %v1715 = vmul.f32 %v1527, 0.0051020407
  %v1716 = vmul.f32 %v1530, 0.0051020407
  %v1717 = vmul.f32 %v1533, 0.0051020407
  %v1718 = vmul.f32 %v1536, 0.0051020407
  %v1719 = vmul.f32 %v1539, 0.0051020407
  %v1720 = vmul.f32 %v1542, 0.0051020407
  %v1721 = vmul.f32 %v1545, 0.0051020407
  %v1722 = vmul.f32 %v1548, 0.0051020407
  %v1723 = vmul.f32 %v1551, 0.0051020407
  %v1724 = vmul.f32 %v1554, 0.0051020407
  %v1725 = vmul.f32 %v1557, 0.0051020407
  %v1726 = vmul.f32 %v1560, 0.0051020407
  %v1727 = vmul.f32 %v1563, 0.0051020407
  %v1728 = vmul.f32 %v1566, 0.0051020407
  %v1729 = vmul.f32 %v1569, 0.0051020407
  %v1730 = vmul.f32 %v1572, 0.0051020407
  %v1731 = vmul.f32 %v1575, 0.0051020407
  %v1732 = vmul.f32 %v1578, 0.0051020407
  %v1733 = vmul.f32 %v1581, 0.0051020407
  %v1734 = vmul.f32 %v1584, 0.0051020407
  %v1735 = vmul.f32 %v1587, 0.0051020407
  %v1736 = vmul.f32 %v1590, 0.0051020407
  %v1737 = vmul.f32 %v1593, 0.0051020407
  %v1738 = vmul.f32 %v1596, 0.0051020407
  %v1739 = vmul.f32 %v1599, 0.0051020407
  %v1740 = vmul.f32 %v1602, 0.0051020407
  %v1741 = vmul.f32 %v1605, 0.0051020407
  %v1742 = vmul.f32 %v1608, 0.0051020407
  %v1743 = vmul.f32 %v1611, 0.0051020407
  %v1744 = vmul.f32 %v1614, 0.0051020407
  %v1745 = vmul.f32 %v1617, 0.0051020407
  %v1746 = vlaneseq
  %v1747 = vand.u32 %v1746, 127
  %v1748 = vadd.s32 %v1747, 128
  %vm1749 = vcmp.lt.s32.totalorder %v1747, 196
  %vm1750 = vcmp.lt.s32.totalorder %v1748, 196
  %v1751 = vsub.f32 %v468, %v1618
  %v1752 = vsub.f32 %v470, %v1618
  %v1753 = vsub.f32 %v474, %v1619
  %v1754 = vsub.f32 %v476, %v1619
  %v1755 = vsub.f32 %v480, %v1620
  %v1756 = vsub.f32 %v482, %v1620
  %v1757 = vsub.f32 %v486, %v1621
  %v1758 = vsub.f32 %v488, %v1621
  %v1759 = vsub.f32 %v492, %v1622
  %v1760 = vsub.f32 %v494, %v1622
  %v1761 = vsub.f32 %v498, %v1623
  %v1762 = vsub.f32 %v500, %v1623
  %v1763 = vsub.f32 %v504, %v1624
  %v1764 = vsub.f32 %v506, %v1624
  %v1765 = vsub.f32 %v510, %v1625
  %v1766 = vsub.f32 %v512, %v1625
  %v1767 = vsub.f32 %v516, %v1626
  %v1768 = vsub.f32 %v518, %v1626
  %v1769 = vsub.f32 %v522, %v1627
  %v1770 = vsub.f32 %v524, %v1627
  %v1771 = vsub.f32 %v528, %v1628
  %v1772 = vsub.f32 %v530, %v1628
  %v1773 = vsub.f32 %v534, %v1629
  %v1774 = vsub.f32 %v536, %v1629
  %v1775 = vsub.f32 %v540, %v1630
  %v1776 = vsub.f32 %v542, %v1630
  %v1777 = vsub.f32 %v546, %v1631
  %v1778 = vsub.f32 %v548, %v1631
  %v1779 = vsub.f32 %v552, %v1632
  %v1780 = vsub.f32 %v554, %v1632
  %v1781 = vsub.f32 %v558, %v1633
  %v1782 = vsub.f32 %v560, %v1633
  %v1783 = vsub.f32 %v564, %v1634
  %v1784 = vsub.f32 %v566, %v1634
  %v1785 = vsub.f32 %v570, %v1635
  %v1786 = vsub.f32 %v572, %v1635
  %v1787 = vsub.f32 %v576, %v1636
  %v1788 = vsub.f32 %v578, %v1636
  %v1789 = vsub.f32 %v582, %v1637
  %v1790 = vsub.f32 %v584, %v1637
  %v1791 = vsub.f32 %v588, %v1638
  %v1792 = vsub.f32 %v590, %v1638
  %v1793 = vsub.f32 %v594, %v1639
  %v1794 = vsub.f32 %v596, %v1639
  %v1795 = vsub.f32 %v600, %v1640
  %v1796 = vsub.f32 %v602, %v1640
  %v1797 = vsub.f32 %v606, %v1641
  %v1798 = vsub.f32 %v608, %v1641
  %v1799 = vsub.f32 %v612, %v1642
  %v1800 = vsub.f32 %v614, %v1642
  %v1801 = vsub.f32 %v618, %v1643
  %v1802 = vsub.f32 %v620, %v1643
  %v1803 = vsub.f32 %v624, %v1644
  %v1804 = vsub.f32 %v626, %v1644
  %v1805 = vsub.f32 %v630, %v1645
  %v1806 = vsub.f32 %v632, %v1645
  %v1807 = vsub.f32 %v636, %v1646
  %v1808 = vsub.f32 %v638, %v1646
  %v1809 = vsub.f32 %v642, %v1647
  %v1810 = vsub.f32 %v644, %v1647
  %v1811 = vsub.f32 %v648, %v1648
  %v1812 = vsub.f32 %v650, %v1648
  %v1813 = vsub.f32 %v654, %v1649
  %v1814 = vsub.f32 %v656, %v1649
  %v1815 = vsub.f32 %v660, %v1650
  %v1816 = vsub.f32 %v662, %v1650
  %v1817 = vsub.f32 %v666, %v1651
  %v1818 = vsub.f32 %v668, %v1651
  %v1819 = vsub.f32 %v672, %v1652
  %v1820 = vsub.f32 %v674, %v1652
  %v1821 = vsub.f32 %v678, %v1653
  %v1822 = vsub.f32 %v680, %v1653
  %v1823 = vsub.f32 %v684, %v1654
  %v1824 = vsub.f32 %v686, %v1654
  %v1825 = vsub.f32 %v690, %v1655
  %v1826 = vsub.f32 %v692, %v1655
  %v1827 = vsub.f32 %v696, %v1656
  %v1828 = vsub.f32 %v698, %v1656
  %v1829 = vsub.f32 %v702, %v1657
  %v1830 = vsub.f32 %v704, %v1657
  %v1831 = vsub.f32 %v708, %v1658
  %v1832 = vsub.f32 %v710, %v1658
  %v1833 = vsub.f32 %v714, %v1659
  %v1834 = vsub.f32 %v716, %v1659
  %v1835 = vsub.f32 %v720, %v1660
  %v1836 = vsub.f32 %v722, %v1660
  %v1837 = vsub.f32 %v726, %v1661
  %v1838 = vsub.f32 %v728, %v1661
  %v1839 = vsub.f32 %v732, %v1662
  %v1840 = vsub.f32 %v734, %v1662
  %v1841 = vsub.f32 %v738, %v1663
  %v1842 = vsub.f32 %v740, %v1663
  %v1843 = vsub.f32 %v744, %v1664
  %v1844 = vsub.f32 %v746, %v1664
  %v1845 = vsub.f32 %v750, %v1665
  %v1846 = vsub.f32 %v752, %v1665
  %v1847 = vsub.f32 %v756, %v1666
  %v1848 = vsub.f32 %v758, %v1666
  %v1849 = vsub.f32 %v762, %v1667
  %v1850 = vsub.f32 %v764, %v1667
  %v1851 = vsub.f32 %v768, %v1668
  %v1852 = vsub.f32 %v770, %v1668
  %v1853 = vsub.f32 %v774, %v1669
  %v1854 = vsub.f32 %v776, %v1669
  %v1855 = vsub.f32 %v780, %v1670
  %v1856 = vsub.f32 %v782, %v1670
  %v1857 = vsub.f32 %v786, %v1671
  %v1858 = vsub.f32 %v788, %v1671
  %v1859 = vsub.f32 %v792, %v1672
  %v1860 = vsub.f32 %v794, %v1672
  %v1861 = vsub.f32 %v798, %v1673
  %v1862 = vsub.f32 %v800, %v1673
  %v1863 = vsub.f32 %v804, %v1674
  %v1864 = vsub.f32 %v806, %v1674
  %v1865 = vsub.f32 %v810, %v1675
  %v1866 = vsub.f32 %v812, %v1675
  %v1867 = vsub.f32 %v816, %v1676
  %v1868 = vsub.f32 %v818, %v1676
  %v1869 = vsub.f32 %v822, %v1677
  %v1870 = vsub.f32 %v824, %v1677
  %v1871 = vsub.f32 %v828, %v1678
  %v1872 = vsub.f32 %v830, %v1678
  %v1873 = vsub.f32 %v834, %v1679
  %v1874 = vsub.f32 %v836, %v1679
  %v1875 = vsub.f32 %v840, %v1680
  %v1876 = vsub.f32 %v842, %v1680
  %v1877 = vsub.f32 %v846, %v1681
  %v1878 = vsub.f32 %v848, %v1681
  %v1879 = vsub.f32 %v852, %v1682
  %v1880 = vsub.f32 %v854, %v1682
  %v1881 = vsub.f32 %v858, %v1683
  %v1882 = vsub.f32 %v860, %v1683
  %v1883 = vsub.f32 %v864, %v1684
  %v1884 = vsub.f32 %v866, %v1684
  %v1885 = vsub.f32 %v870, %v1685
  %v1886 = vsub.f32 %v872, %v1685
  %v1887 = vsub.f32 %v876, %v1686
  %v1888 = vsub.f32 %v878, %v1686
  %v1889 = vsub.f32 %v882, %v1687
  %v1890 = vsub.f32 %v884, %v1687
  %v1891 = vsub.f32 %v888, %v1688
  %v1892 = vsub.f32 %v890, %v1688
  %v1893 = vsub.f32 %v894, %v1689
  %v1894 = vsub.f32 %v896, %v1689
  %v1895 = vsub.f32 %v900, %v1690
  %v1896 = vsub.f32 %v902, %v1690
  %v1897 = vsub.f32 %v906, %v1691
  %v1898 = vsub.f32 %v908, %v1691
  %v1899 = vsub.f32 %v912, %v1692
  %v1900 = vsub.f32 %v914, %v1692
  %v1901 = vsub.f32 %v918, %v1693
  %v1902 = vsub.f32 %v920, %v1693
  %v1903 = vsub.f32 %v924, %v1694
  %v1904 = vsub.f32 %v926, %v1694
  %v1905 = vsub.f32 %v930, %v1695
  %v1906 = vsub.f32 %v932, %v1695
  %v1907 = vsub.f32 %v936, %v1696
  %v1908 = vsub.f32 %v938, %v1696
  %v1909 = vsub.f32 %v942, %v1697
  %v1910 = vsub.f32 %v944, %v1697
  %v1911 = vsub.f32 %v948, %v1698
  %v1912 = vsub.f32 %v950, %v1698
  %v1913 = vsub.f32 %v954, %v1699
  %v1914 = vsub.f32 %v956, %v1699
  %v1915 = vsub.f32 %v960, %v1700
  %v1916 = vsub.f32 %v962, %v1700
  %v1917 = vsub.f32 %v966, %v1701
  %v1918 = vsub.f32 %v968, %v1701
  %v1919 = vsub.f32 %v972, %v1702
  %v1920 = vsub.f32 %v974, %v1702
  %v1921 = vsub.f32 %v978, %v1703
  %v1922 = vsub.f32 %v980, %v1703
  %v1923 = vsub.f32 %v984, %v1704
  %v1924 = vsub.f32 %v986, %v1704
  %v1925 = vsub.f32 %v990, %v1705
  %v1926 = vsub.f32 %v992, %v1705
  %v1927 = vsub.f32 %v996, %v1706
  %v1928 = vsub.f32 %v998, %v1706
  %v1929 = vsub.f32 %v1002, %v1707
  %v1930 = vsub.f32 %v1004, %v1707
  %v1931 = vsub.f32 %v1008, %v1708
  %v1932 = vsub.f32 %v1010, %v1708
  %v1933 = vsub.f32 %v1014, %v1709
  %v1934 = vsub.f32 %v1016, %v1709
  %v1935 = vsub.f32 %v1020, %v1710
  %v1936 = vsub.f32 %v1022, %v1710
  %v1937 = vsub.f32 %v1026, %v1711
  %v1938 = vsub.f32 %v1028, %v1711
  %v1939 = vsub.f32 %v1032, %v1712
  %v1940 = vsub.f32 %v1034, %v1712
  %v1941 = vsub.f32 %v1038, %v1713
  %v1942 = vsub.f32 %v1040, %v1713
  %v1943 = vsub.f32 %v1044, %v1714
  %v1944 = vsub.f32 %v1046, %v1714
  %v1945 = vsub.f32 %v1050, %v1715
  %v1946 = vsub.f32 %v1052, %v1715
  %v1947 = vsub.f32 %v1056, %v1716
  %v1948 = vsub.f32 %v1058, %v1716
  %v1949 = vsub.f32 %v1062, %v1717
  %v1950 = vsub.f32 %v1064, %v1717
  %v1951 = vsub.f32 %v1068, %v1718
  %v1952 = vsub.f32 %v1070, %v1718
  %v1953 = vsub.f32 %v1074, %v1719
  %v1954 = vsub.f32 %v1076, %v1719
  %v1955 = vsub.f32 %v1080, %v1720
  %v1956 = vsub.f32 %v1082, %v1720
  %v1957 = vsub.f32 %v1086, %v1721
  %v1958 = vsub.f32 %v1088, %v1721
  %v1959 = vsub.f32 %v1092, %v1722
  %v1960 = vsub.f32 %v1094, %v1722
  %v1961 = vsub.f32 %v1098, %v1723
  %v1962 = vsub.f32 %v1100, %v1723
  %v1963 = vsub.f32 %v1104, %v1724
  %v1964 = vsub.f32 %v1106, %v1724
  %v1965 = vsub.f32 %v1110, %v1725
  %v1966 = vsub.f32 %v1112, %v1725
  %v1967 = vsub.f32 %v1116, %v1726
  %v1968 = vsub.f32 %v1118, %v1726
  %v1969 = vsub.f32 %v1122, %v1727
  %v1970 = vsub.f32 %v1124, %v1727
  %v1971 = vsub.f32 %v1128, %v1728
  %v1972 = vsub.f32 %v1130, %v1728
  %v1973 = vsub.f32 %v1134, %v1729
  %v1974 = vsub.f32 %v1136, %v1729
  %v1975 = vsub.f32 %v1140, %v1730
  %v1976 = vsub.f32 %v1142, %v1730
  %v1977 = vsub.f32 %v1146, %v1731
  %v1978 = vsub.f32 %v1148, %v1731
  %v1979 = vsub.f32 %v1152, %v1732
  %v1980 = vsub.f32 %v1154, %v1732
  %v1981 = vsub.f32 %v1158, %v1733
  %v1982 = vsub.f32 %v1160, %v1733
  %v1983 = vsub.f32 %v1164, %v1734
  %v1984 = vsub.f32 %v1166, %v1734
  %v1985 = vsub.f32 %v1170, %v1735
  %v1986 = vsub.f32 %v1172, %v1735
  %v1987 = vsub.f32 %v1176, %v1736
  %v1988 = vsub.f32 %v1178, %v1736
  %v1989 = vsub.f32 %v1182, %v1737
  %v1990 = vsub.f32 %v1184, %v1737
  %v1991 = vsub.f32 %v1188, %v1738
  %v1992 = vsub.f32 %v1190, %v1738
  %v1993 = vsub.f32 %v1194, %v1739
  %v1994 = vsub.f32 %v1196, %v1739
  %v1995 = vsub.f32 %v1200, %v1740
  %v1996 = vsub.f32 %v1202, %v1740
  %v1997 = vsub.f32 %v1206, %v1741
  %v1998 = vsub.f32 %v1208, %v1741
  %v1999 = vsub.f32 %v1212, %v1742
  %v2000 = vsub.f32 %v1214, %v1742
  %v2001 = vsub.f32 %v1218, %v1743
  %v2002 = vsub.f32 %v1220, %v1743
  %v2003 = vsub.f32 %v1224, %v1744
  %v2004 = vsub.f32 %v1226, %v1744
  %v2005 = vsub.f32 %v1230, %v1745
  %v2006 = vsub.f32 %v1232, %v1745
  %v2007 = vsel %vm1749, 1, 0
  %v2008 = vsel %vm1750, 1, 0
  %vm2009 = vcmp.eq.s32.totalorder %v2007, 1
  %vm2010 = vcmp.eq.s32.totalorder %v2008, 1
  %v2011 = vsel %vm2009, %v1751, 0.0
  %v2012 = vsel %vm2010, %v1752, 0.0
  %v2013 = vsel %vm2009, %v1753, 0.0
  %v2014 = vsel %vm2010, %v1754, 0.0
  %v2015 = vsel %vm2009, %v1755, 0.0
  %v2016 = vsel %vm2010, %v1756, 0.0
  %v2017 = vsel %vm2009, %v1757, 0.0
  %v2018 = vsel %vm2010, %v1758, 0.0
  %v2019 = vsel %vm2009, %v1759, 0.0
  %v2020 = vsel %vm2010, %v1760, 0.0
  %v2021 = vsel %vm2009, %v1761, 0.0
  %v2022 = vsel %vm2010, %v1762, 0.0
  %v2023 = vsel %vm2009, %v1763, 0.0
  %v2024 = vsel %vm2010, %v1764, 0.0
  %v2025 = vsel %vm2009, %v1765, 0.0
  %v2026 = vsel %vm2010, %v1766, 0.0
  %v2027 = vsel %vm2009, %v1767, 0.0
  %v2028 = vsel %vm2010, %v1768, 0.0
  %v2029 = vsel %vm2009, %v1769, 0.0
  %v2030 = vsel %vm2010, %v1770, 0.0
  %v2031 = vsel %vm2009, %v1771, 0.0
  %v2032 = vsel %vm2010, %v1772, 0.0
  %v2033 = vsel %vm2009, %v1773, 0.0
  %v2034 = vsel %vm2010, %v1774, 0.0
  %v2035 = vsel %vm2009, %v1775, 0.0
  %v2036 = vsel %vm2010, %v1776, 0.0
  %v2037 = vsel %vm2009, %v1777, 0.0
  %v2038 = vsel %vm2010, %v1778, 0.0
  %v2039 = vsel %vm2009, %v1779, 0.0
  %v2040 = vsel %vm2010, %v1780, 0.0
  %v2041 = vsel %vm2009, %v1781, 0.0
  %v2042 = vsel %vm2010, %v1782, 0.0
  %v2043 = vsel %vm2009, %v1783, 0.0
  %v2044 = vsel %vm2010, %v1784, 0.0
  %v2045 = vsel %vm2009, %v1785, 0.0
  %v2046 = vsel %vm2010, %v1786, 0.0
  %v2047 = vsel %vm2009, %v1787, 0.0
  %v2048 = vsel %vm2010, %v1788, 0.0
  %v2049 = vsel %vm2009, %v1789, 0.0
  %v2050 = vsel %vm2010, %v1790, 0.0
  %v2051 = vsel %vm2009, %v1791, 0.0
  %v2052 = vsel %vm2010, %v1792, 0.0
  %v2053 = vsel %vm2009, %v1793, 0.0
  %v2054 = vsel %vm2010, %v1794, 0.0
  %v2055 = vsel %vm2009, %v1795, 0.0
  %v2056 = vsel %vm2010, %v1796, 0.0
  %v2057 = vsel %vm2009, %v1797, 0.0
  %v2058 = vsel %vm2010, %v1798, 0.0
  %v2059 = vsel %vm2009, %v1799, 0.0
  %v2060 = vsel %vm2010, %v1800, 0.0
  %v2061 = vsel %vm2009, %v1801, 0.0
  %v2062 = vsel %vm2010, %v1802, 0.0
  %v2063 = vsel %vm2009, %v1803, 0.0
  %v2064 = vsel %vm2010, %v1804, 0.0
  %v2065 = vsel %vm2009, %v1805, 0.0
  %v2066 = vsel %vm2010, %v1806, 0.0
  %v2067 = vsel %vm2009, %v1807, 0.0
  %v2068 = vsel %vm2010, %v1808, 0.0
  %v2069 = vsel %vm2009, %v1809, 0.0
  %v2070 = vsel %vm2010, %v1810, 0.0
  %v2071 = vsel %vm2009, %v1811, 0.0
  %v2072 = vsel %vm2010, %v1812, 0.0
  %v2073 = vsel %vm2009, %v1813, 0.0
  %v2074 = vsel %vm2010, %v1814, 0.0
  %v2075 = vsel %vm2009, %v1815, 0.0
  %v2076 = vsel %vm2010, %v1816, 0.0
  %v2077 = vsel %vm2009, %v1817, 0.0
  %v2078 = vsel %vm2010, %v1818, 0.0
  %v2079 = vsel %vm2009, %v1819, 0.0
  %v2080 = vsel %vm2010, %v1820, 0.0
  %v2081 = vsel %vm2009, %v1821, 0.0
  %v2082 = vsel %vm2010, %v1822, 0.0
  %v2083 = vsel %vm2009, %v1823, 0.0
  %v2084 = vsel %vm2010, %v1824, 0.0
  %v2085 = vsel %vm2009, %v1825, 0.0
  %v2086 = vsel %vm2010, %v1826, 0.0
  %v2087 = vsel %vm2009, %v1827, 0.0
  %v2088 = vsel %vm2010, %v1828, 0.0
  %v2089 = vsel %vm2009, %v1829, 0.0
  %v2090 = vsel %vm2010, %v1830, 0.0
  %v2091 = vsel %vm2009, %v1831, 0.0
  %v2092 = vsel %vm2010, %v1832, 0.0
  %v2093 = vsel %vm2009, %v1833, 0.0
  %v2094 = vsel %vm2010, %v1834, 0.0
  %v2095 = vsel %vm2009, %v1835, 0.0
  %v2096 = vsel %vm2010, %v1836, 0.0
  %v2097 = vsel %vm2009, %v1837, 0.0
  %v2098 = vsel %vm2010, %v1838, 0.0
  %v2099 = vsel %vm2009, %v1839, 0.0
  %v2100 = vsel %vm2010, %v1840, 0.0
  %v2101 = vsel %vm2009, %v1841, 0.0
  %v2102 = vsel %vm2010, %v1842, 0.0
  %v2103 = vsel %vm2009, %v1843, 0.0
  %v2104 = vsel %vm2010, %v1844, 0.0
  %v2105 = vsel %vm2009, %v1845, 0.0
  %v2106 = vsel %vm2010, %v1846, 0.0
  %v2107 = vsel %vm2009, %v1847, 0.0
  %v2108 = vsel %vm2010, %v1848, 0.0
  %v2109 = vsel %vm2009, %v1849, 0.0
  %v2110 = vsel %vm2010, %v1850, 0.0
  %v2111 = vsel %vm2009, %v1851, 0.0
  %v2112 = vsel %vm2010, %v1852, 0.0
  %v2113 = vsel %vm2009, %v1853, 0.0
  %v2114 = vsel %vm2010, %v1854, 0.0
  %v2115 = vsel %vm2009, %v1855, 0.0
  %v2116 = vsel %vm2010, %v1856, 0.0
  %v2117 = vsel %vm2009, %v1857, 0.0
  %v2118 = vsel %vm2010, %v1858, 0.0
  %v2119 = vsel %vm2009, %v1859, 0.0
  %v2120 = vsel %vm2010, %v1860, 0.0
  %v2121 = vsel %vm2009, %v1861, 0.0
  %v2122 = vsel %vm2010, %v1862, 0.0
  %v2123 = vsel %vm2009, %v1863, 0.0
  %v2124 = vsel %vm2010, %v1864, 0.0
  %v2125 = vsel %vm2009, %v1865, 0.0
  %v2126 = vsel %vm2010, %v1866, 0.0
  %v2127 = vsel %vm2009, %v1867, 0.0
  %v2128 = vsel %vm2010, %v1868, 0.0
  %v2129 = vsel %vm2009, %v1869, 0.0
  %v2130 = vsel %vm2010, %v1870, 0.0
  %v2131 = vsel %vm2009, %v1871, 0.0
  %v2132 = vsel %vm2010, %v1872, 0.0
  %v2133 = vsel %vm2009, %v1873, 0.0
  %v2134 = vsel %vm2010, %v1874, 0.0
  %v2135 = vsel %vm2009, %v1875, 0.0
  %v2136 = vsel %vm2010, %v1876, 0.0
  %v2137 = vsel %vm2009, %v1877, 0.0
  %v2138 = vsel %vm2010, %v1878, 0.0
  %v2139 = vsel %vm2009, %v1879, 0.0
  %v2140 = vsel %vm2010, %v1880, 0.0
  %v2141 = vsel %vm2009, %v1881, 0.0
  %v2142 = vsel %vm2010, %v1882, 0.0
  %v2143 = vsel %vm2009, %v1883, 0.0
  %v2144 = vsel %vm2010, %v1884, 0.0
  %v2145 = vsel %vm2009, %v1885, 0.0
  %v2146 = vsel %vm2010, %v1886, 0.0
  %v2147 = vsel %vm2009, %v1887, 0.0
  %v2148 = vsel %vm2010, %v1888, 0.0
  %v2149 = vsel %vm2009, %v1889, 0.0
  %v2150 = vsel %vm2010, %v1890, 0.0
  %v2151 = vsel %vm2009, %v1891, 0.0
  %v2152 = vsel %vm2010, %v1892, 0.0
  %v2153 = vsel %vm2009, %v1893, 0.0
  %v2154 = vsel %vm2010, %v1894, 0.0
  %v2155 = vsel %vm2009, %v1895, 0.0
  %v2156 = vsel %vm2010, %v1896, 0.0
  %v2157 = vsel %vm2009, %v1897, 0.0
  %v2158 = vsel %vm2010, %v1898, 0.0
  %v2159 = vsel %vm2009, %v1899, 0.0
  %v2160 = vsel %vm2010, %v1900, 0.0
  %v2161 = vsel %vm2009, %v1901, 0.0
  %v2162 = vsel %vm2010, %v1902, 0.0
  %v2163 = vsel %vm2009, %v1903, 0.0
  %v2164 = vsel %vm2010, %v1904, 0.0
  %v2165 = vsel %vm2009, %v1905, 0.0
  %v2166 = vsel %vm2010, %v1906, 0.0
  %v2167 = vsel %vm2009, %v1907, 0.0
  %v2168 = vsel %vm2010, %v1908, 0.0
  %v2169 = vsel %vm2009, %v1909, 0.0
  %v2170 = vsel %vm2010, %v1910, 0.0
  %v2171 = vsel %vm2009, %v1911, 0.0
  %v2172 = vsel %vm2010, %v1912, 0.0
  %v2173 = vsel %vm2009, %v1913, 0.0
  %v2174 = vsel %vm2010, %v1914, 0.0
  %v2175 = vsel %vm2009, %v1915, 0.0
  %v2176 = vsel %vm2010, %v1916, 0.0
  %v2177 = vsel %vm2009, %v1917, 0.0
  %v2178 = vsel %vm2010, %v1918, 0.0
  %v2179 = vsel %vm2009, %v1919, 0.0
  %v2180 = vsel %vm2010, %v1920, 0.0
  %v2181 = vsel %vm2009, %v1921, 0.0
  %v2182 = vsel %vm2010, %v1922, 0.0
  %v2183 = vsel %vm2009, %v1923, 0.0
  %v2184 = vsel %vm2010, %v1924, 0.0
  %v2185 = vsel %vm2009, %v1925, 0.0
  %v2186 = vsel %vm2010, %v1926, 0.0
  %v2187 = vsel %vm2009, %v1927, 0.0
  %v2188 = vsel %vm2010, %v1928, 0.0
  %v2189 = vsel %vm2009, %v1929, 0.0
  %v2190 = vsel %vm2010, %v1930, 0.0
  %v2191 = vsel %vm2009, %v1931, 0.0
  %v2192 = vsel %vm2010, %v1932, 0.0
  %v2193 = vsel %vm2009, %v1933, 0.0
  %v2194 = vsel %vm2010, %v1934, 0.0
  %v2195 = vsel %vm2009, %v1935, 0.0
  %v2196 = vsel %vm2010, %v1936, 0.0
  %v2197 = vsel %vm2009, %v1937, 0.0
  %v2198 = vsel %vm2010, %v1938, 0.0
  %v2199 = vsel %vm2009, %v1939, 0.0
  %v2200 = vsel %vm2010, %v1940, 0.0
  %v2201 = vsel %vm2009, %v1941, 0.0
  %v2202 = vsel %vm2010, %v1942, 0.0
  %v2203 = vsel %vm2009, %v1943, 0.0
  %v2204 = vsel %vm2010, %v1944, 0.0
  %v2205 = vsel %vm2009, %v1945, 0.0
  %v2206 = vsel %vm2010, %v1946, 0.0
  %v2207 = vsel %vm2009, %v1947, 0.0
  %v2208 = vsel %vm2010, %v1948, 0.0
  %v2209 = vsel %vm2009, %v1949, 0.0
  %v2210 = vsel %vm2010, %v1950, 0.0
  %v2211 = vsel %vm2009, %v1951, 0.0
  %v2212 = vsel %vm2010, %v1952, 0.0
  %v2213 = vsel %vm2009, %v1953, 0.0
  %v2214 = vsel %vm2010, %v1954, 0.0
  %v2215 = vsel %vm2009, %v1955, 0.0
  %v2216 = vsel %vm2010, %v1956, 0.0
  %v2217 = vsel %vm2009, %v1957, 0.0
  %v2218 = vsel %vm2010, %v1958, 0.0
  %v2219 = vsel %vm2009, %v1959, 0.0
  %v2220 = vsel %vm2010, %v1960, 0.0
  %v2221 = vsel %vm2009, %v1961, 0.0
  %v2222 = vsel %vm2010, %v1962, 0.0
  %v2223 = vsel %vm2009, %v1963, 0.0
  %v2224 = vsel %vm2010, %v1964, 0.0
  %v2225 = vsel %vm2009, %v1965, 0.0
  %v2226 = vsel %vm2010, %v1966, 0.0
  %v2227 = vsel %vm2009, %v1967, 0.0
  %v2228 = vsel %vm2010, %v1968, 0.0
  %v2229 = vsel %vm2009, %v1969, 0.0
  %v2230 = vsel %vm2010, %v1970, 0.0
  %v2231 = vsel %vm2009, %v1971, 0.0
  %v2232 = vsel %vm2010, %v1972, 0.0
  %v2233 = vsel %vm2009, %v1973, 0.0
  %v2234 = vsel %vm2010, %v1974, 0.0
  %v2235 = vsel %vm2009, %v1975, 0.0
  %v2236 = vsel %vm2010, %v1976, 0.0
  %v2237 = vsel %vm2009, %v1977, 0.0
  %v2238 = vsel %vm2010, %v1978, 0.0
  %v2239 = vsel %vm2009, %v1979, 0.0
  %v2240 = vsel %vm2010, %v1980, 0.0
  %v2241 = vsel %vm2009, %v1981, 0.0
  %v2242 = vsel %vm2010, %v1982, 0.0
  %v2243 = vsel %vm2009, %v1983, 0.0
  %v2244 = vsel %vm2010, %v1984, 0.0
  %v2245 = vsel %vm2009, %v1985, 0.0
  %v2246 = vsel %vm2010, %v1986, 0.0
  %v2247 = vsel %vm2009, %v1987, 0.0
  %v2248 = vsel %vm2010, %v1988, 0.0
  %v2249 = vsel %vm2009, %v1989, 0.0
  %v2250 = vsel %vm2010, %v1990, 0.0
  %v2251 = vsel %vm2009, %v1991, 0.0
  %v2252 = vsel %vm2010, %v1992, 0.0
  %v2253 = vsel %vm2009, %v1993, 0.0
  %v2254 = vsel %vm2010, %v1994, 0.0
  %v2255 = vsel %vm2009, %v1995, 0.0
  %v2256 = vsel %vm2010, %v1996, 0.0
  %v2257 = vsel %vm2009, %v1997, 0.0
  %v2258 = vsel %vm2010, %v1998, 0.0
  %v2259 = vsel %vm2009, %v1999, 0.0
  %v2260 = vsel %vm2010, %v2000, 0.0
  %v2261 = vsel %vm2009, %v2001, 0.0
  %v2262 = vsel %vm2010, %v2002, 0.0
  %v2263 = vsel %vm2009, %v2003, 0.0
  %v2264 = vsel %vm2010, %v2004, 0.0
  %v2265 = vsel %vm2009, %v2005, 0.0
  %v2266 = vsel %vm2010, %v2006, 0.0
  %v2267 = vmul.f32 %v2011, %v2011
  %v2268 = vmul.f32 %v2012, %v2012
  %v2269 = vmul.f32 %v2013, %v2013
  %v2270 = vmul.f32 %v2014, %v2014
  %v2271 = vmul.f32 %v2015, %v2015
  %v2272 = vmul.f32 %v2016, %v2016
  %v2273 = vmul.f32 %v2017, %v2017
  %v2274 = vmul.f32 %v2018, %v2018
  %v2275 = vmul.f32 %v2019, %v2019
  %v2276 = vmul.f32 %v2020, %v2020
  %v2277 = vmul.f32 %v2021, %v2021
  %v2278 = vmul.f32 %v2022, %v2022
  %v2279 = vmul.f32 %v2023, %v2023
  %v2280 = vmul.f32 %v2024, %v2024
  %v2281 = vmul.f32 %v2025, %v2025
  %v2282 = vmul.f32 %v2026, %v2026
  %v2283 = vmul.f32 %v2027, %v2027
  %v2284 = vmul.f32 %v2028, %v2028
  %v2285 = vmul.f32 %v2029, %v2029
  %v2286 = vmul.f32 %v2030, %v2030
  %v2287 = vmul.f32 %v2031, %v2031
  %v2288 = vmul.f32 %v2032, %v2032
  %v2289 = vmul.f32 %v2033, %v2033
  %v2290 = vmul.f32 %v2034, %v2034
  %v2291 = vmul.f32 %v2035, %v2035
  %v2292 = vmul.f32 %v2036, %v2036
  %v2293 = vmul.f32 %v2037, %v2037
  %v2294 = vmul.f32 %v2038, %v2038
  %v2295 = vmul.f32 %v2039, %v2039
  %v2296 = vmul.f32 %v2040, %v2040
  %v2297 = vmul.f32 %v2041, %v2041
  %v2298 = vmul.f32 %v2042, %v2042
  %v2299 = vmul.f32 %v2043, %v2043
  %v2300 = vmul.f32 %v2044, %v2044
  %v2301 = vmul.f32 %v2045, %v2045
  %v2302 = vmul.f32 %v2046, %v2046
  %v2303 = vmul.f32 %v2047, %v2047
  %v2304 = vmul.f32 %v2048, %v2048
  %v2305 = vmul.f32 %v2049, %v2049
  %v2306 = vmul.f32 %v2050, %v2050
  %v2307 = vmul.f32 %v2051, %v2051
  %v2308 = vmul.f32 %v2052, %v2052
  %v2309 = vmul.f32 %v2053, %v2053
  %v2310 = vmul.f32 %v2054, %v2054
  %v2311 = vmul.f32 %v2055, %v2055
  %v2312 = vmul.f32 %v2056, %v2056
  %v2313 = vmul.f32 %v2057, %v2057
  %v2314 = vmul.f32 %v2058, %v2058
  %v2315 = vmul.f32 %v2059, %v2059
  %v2316 = vmul.f32 %v2060, %v2060
  %v2317 = vmul.f32 %v2061, %v2061
  %v2318 = vmul.f32 %v2062, %v2062
  %v2319 = vmul.f32 %v2063, %v2063
  %v2320 = vmul.f32 %v2064, %v2064
  %v2321 = vmul.f32 %v2065, %v2065
  %v2322 = vmul.f32 %v2066, %v2066
  %v2323 = vmul.f32 %v2067, %v2067
  %v2324 = vmul.f32 %v2068, %v2068
  %v2325 = vmul.f32 %v2069, %v2069
  %v2326 = vmul.f32 %v2070, %v2070
  %v2327 = vmul.f32 %v2071, %v2071
  %v2328 = vmul.f32 %v2072, %v2072
  %v2329 = vmul.f32 %v2073, %v2073
  %v2330 = vmul.f32 %v2074, %v2074
  %v2331 = vmul.f32 %v2075, %v2075
  %v2332 = vmul.f32 %v2076, %v2076
  %v2333 = vmul.f32 %v2077, %v2077
  %v2334 = vmul.f32 %v2078, %v2078
  %v2335 = vmul.f32 %v2079, %v2079
  %v2336 = vmul.f32 %v2080, %v2080
  %v2337 = vmul.f32 %v2081, %v2081
  %v2338 = vmul.f32 %v2082, %v2082
  %v2339 = vmul.f32 %v2083, %v2083
  %v2340 = vmul.f32 %v2084, %v2084
  %v2341 = vmul.f32 %v2085, %v2085
  %v2342 = vmul.f32 %v2086, %v2086
  %v2343 = vmul.f32 %v2087, %v2087
  %v2344 = vmul.f32 %v2088, %v2088
  %v2345 = vmul.f32 %v2089, %v2089
  %v2346 = vmul.f32 %v2090, %v2090
  %v2347 = vmul.f32 %v2091, %v2091
  %v2348 = vmul.f32 %v2092, %v2092
  %v2349 = vmul.f32 %v2093, %v2093
  %v2350 = vmul.f32 %v2094, %v2094
  %v2351 = vmul.f32 %v2095, %v2095
  %v2352 = vmul.f32 %v2096, %v2096
  %v2353 = vmul.f32 %v2097, %v2097
  %v2354 = vmul.f32 %v2098, %v2098
  %v2355 = vmul.f32 %v2099, %v2099
  %v2356 = vmul.f32 %v2100, %v2100
  %v2357 = vmul.f32 %v2101, %v2101
  %v2358 = vmul.f32 %v2102, %v2102
  %v2359 = vmul.f32 %v2103, %v2103
  %v2360 = vmul.f32 %v2104, %v2104
  %v2361 = vmul.f32 %v2105, %v2105
  %v2362 = vmul.f32 %v2106, %v2106
  %v2363 = vmul.f32 %v2107, %v2107
  %v2364 = vmul.f32 %v2108, %v2108
  %v2365 = vmul.f32 %v2109, %v2109
  %v2366 = vmul.f32 %v2110, %v2110
  %v2367 = vmul.f32 %v2111, %v2111
  %v2368 = vmul.f32 %v2112, %v2112
  %v2369 = vmul.f32 %v2113, %v2113
  %v2370 = vmul.f32 %v2114, %v2114
  %v2371 = vmul.f32 %v2115, %v2115
  %v2372 = vmul.f32 %v2116, %v2116
  %v2373 = vmul.f32 %v2117, %v2117
  %v2374 = vmul.f32 %v2118, %v2118
  %v2375 = vmul.f32 %v2119, %v2119
  %v2376 = vmul.f32 %v2120, %v2120
  %v2377 = vmul.f32 %v2121, %v2121
  %v2378 = vmul.f32 %v2122, %v2122
  %v2379 = vmul.f32 %v2123, %v2123
  %v2380 = vmul.f32 %v2124, %v2124
  %v2381 = vmul.f32 %v2125, %v2125
  %v2382 = vmul.f32 %v2126, %v2126
  %v2383 = vmul.f32 %v2127, %v2127
  %v2384 = vmul.f32 %v2128, %v2128
  %v2385 = vmul.f32 %v2129, %v2129
  %v2386 = vmul.f32 %v2130, %v2130
  %v2387 = vmul.f32 %v2131, %v2131
  %v2388 = vmul.f32 %v2132, %v2132
  %v2389 = vmul.f32 %v2133, %v2133
  %v2390 = vmul.f32 %v2134, %v2134
  %v2391 = vmul.f32 %v2135, %v2135
  %v2392 = vmul.f32 %v2136, %v2136
  %v2393 = vmul.f32 %v2137, %v2137
  %v2394 = vmul.f32 %v2138, %v2138
  %v2395 = vmul.f32 %v2139, %v2139
  %v2396 = vmul.f32 %v2140, %v2140
  %v2397 = vmul.f32 %v2141, %v2141
  %v2398 = vmul.f32 %v2142, %v2142
  %v2399 = vmul.f32 %v2143, %v2143
  %v2400 = vmul.f32 %v2144, %v2144
  %v2401 = vmul.f32 %v2145, %v2145
  %v2402 = vmul.f32 %v2146, %v2146
  %v2403 = vmul.f32 %v2147, %v2147
  %v2404 = vmul.f32 %v2148, %v2148
  %v2405 = vmul.f32 %v2149, %v2149
  %v2406 = vmul.f32 %v2150, %v2150
  %v2407 = vmul.f32 %v2151, %v2151
  %v2408 = vmul.f32 %v2152, %v2152
  %v2409 = vmul.f32 %v2153, %v2153
  %v2410 = vmul.f32 %v2154, %v2154
  %v2411 = vmul.f32 %v2155, %v2155
  %v2412 = vmul.f32 %v2156, %v2156
  %v2413 = vmul.f32 %v2157, %v2157
  %v2414 = vmul.f32 %v2158, %v2158
  %v2415 = vmul.f32 %v2159, %v2159
  %v2416 = vmul.f32 %v2160, %v2160
  %v2417 = vmul.f32 %v2161, %v2161
  %v2418 = vmul.f32 %v2162, %v2162
  %v2419 = vmul.f32 %v2163, %v2163
  %v2420 = vmul.f32 %v2164, %v2164
  %v2421 = vmul.f32 %v2165, %v2165
  %v2422 = vmul.f32 %v2166, %v2166
  %v2423 = vmul.f32 %v2167, %v2167
  %v2424 = vmul.f32 %v2168, %v2168
  %v2425 = vmul.f32 %v2169, %v2169
  %v2426 = vmul.f32 %v2170, %v2170
  %v2427 = vmul.f32 %v2171, %v2171
  %v2428 = vmul.f32 %v2172, %v2172
  %v2429 = vmul.f32 %v2173, %v2173
  %v2430 = vmul.f32 %v2174, %v2174
  %v2431 = vmul.f32 %v2175, %v2175
  %v2432 = vmul.f32 %v2176, %v2176
  %v2433 = vmul.f32 %v2177, %v2177
  %v2434 = vmul.f32 %v2178, %v2178
  %v2435 = vmul.f32 %v2179, %v2179
  %v2436 = vmul.f32 %v2180, %v2180
  %v2437 = vmul.f32 %v2181, %v2181
  %v2438 = vmul.f32 %v2182, %v2182
  %v2439 = vmul.f32 %v2183, %v2183
  %v2440 = vmul.f32 %v2184, %v2184
  %v2441 = vmul.f32 %v2185, %v2185
  %v2442 = vmul.f32 %v2186, %v2186
  %v2443 = vmul.f32 %v2187, %v2187
  %v2444 = vmul.f32 %v2188, %v2188
  %v2445 = vmul.f32 %v2189, %v2189
  %v2446 = vmul.f32 %v2190, %v2190
  %v2447 = vmul.f32 %v2191, %v2191
  %v2448 = vmul.f32 %v2192, %v2192
  %v2449 = vmul.f32 %v2193, %v2193
  %v2450 = vmul.f32 %v2194, %v2194
  %v2451 = vmul.f32 %v2195, %v2195
  %v2452 = vmul.f32 %v2196, %v2196
  %v2453 = vmul.f32 %v2197, %v2197
  %v2454 = vmul.f32 %v2198, %v2198
  %v2455 = vmul.f32 %v2199, %v2199
  %v2456 = vmul.f32 %v2200, %v2200
  %v2457 = vmul.f32 %v2201, %v2201
  %v2458 = vmul.f32 %v2202, %v2202
  %v2459 = vmul.f32 %v2203, %v2203
  %v2460 = vmul.f32 %v2204, %v2204
  %v2461 = vmul.f32 %v2205, %v2205
  %v2462 = vmul.f32 %v2206, %v2206
  %v2463 = vmul.f32 %v2207, %v2207
  %v2464 = vmul.f32 %v2208, %v2208
  %v2465 = vmul.f32 %v2209, %v2209
  %v2466 = vmul.f32 %v2210, %v2210
  %v2467 = vmul.f32 %v2211, %v2211
  %v2468 = vmul.f32 %v2212, %v2212
  %v2469 = vmul.f32 %v2213, %v2213
  %v2470 = vmul.f32 %v2214, %v2214
  %v2471 = vmul.f32 %v2215, %v2215
  %v2472 = vmul.f32 %v2216, %v2216
  %v2473 = vmul.f32 %v2217, %v2217
  %v2474 = vmul.f32 %v2218, %v2218
  %v2475 = vmul.f32 %v2219, %v2219
  %v2476 = vmul.f32 %v2220, %v2220
  %v2477 = vmul.f32 %v2221, %v2221
  %v2478 = vmul.f32 %v2222, %v2222
  %v2479 = vmul.f32 %v2223, %v2223
  %v2480 = vmul.f32 %v2224, %v2224
  %v2481 = vmul.f32 %v2225, %v2225
  %v2482 = vmul.f32 %v2226, %v2226
  %v2483 = vmul.f32 %v2227, %v2227
  %v2484 = vmul.f32 %v2228, %v2228
  %v2485 = vmul.f32 %v2229, %v2229
  %v2486 = vmul.f32 %v2230, %v2230
  %v2487 = vmul.f32 %v2231, %v2231
  %v2488 = vmul.f32 %v2232, %v2232
  %v2489 = vmul.f32 %v2233, %v2233
  %v2490 = vmul.f32 %v2234, %v2234
  %v2491 = vmul.f32 %v2235, %v2235
  %v2492 = vmul.f32 %v2236, %v2236
  %v2493 = vmul.f32 %v2237, %v2237
  %v2494 = vmul.f32 %v2238, %v2238
  %v2495 = vmul.f32 %v2239, %v2239
  %v2496 = vmul.f32 %v2240, %v2240
  %v2497 = vmul.f32 %v2241, %v2241
  %v2498 = vmul.f32 %v2242, %v2242
  %v2499 = vmul.f32 %v2243, %v2243
  %v2500 = vmul.f32 %v2244, %v2244
  %v2501 = vmul.f32 %v2245, %v2245
  %v2502 = vmul.f32 %v2246, %v2246
  %v2503 = vmul.f32 %v2247, %v2247
  %v2504 = vmul.f32 %v2248, %v2248
  %v2505 = vmul.f32 %v2249, %v2249
  %v2506 = vmul.f32 %v2250, %v2250
  %v2507 = vmul.f32 %v2251, %v2251
  %v2508 = vmul.f32 %v2252, %v2252
  %v2509 = vmul.f32 %v2253, %v2253
  %v2510 = vmul.f32 %v2254, %v2254
  %v2511 = vmul.f32 %v2255, %v2255
  %v2512 = vmul.f32 %v2256, %v2256
  %v2513 = vmul.f32 %v2257, %v2257
  %v2514 = vmul.f32 %v2258, %v2258
  %v2515 = vmul.f32 %v2259, %v2259
  %v2516 = vmul.f32 %v2260, %v2260
  %v2517 = vmul.f32 %v2261, %v2261
  %v2518 = vmul.f32 %v2262, %v2262
  %v2519 = vmul.f32 %v2263, %v2263
  %v2520 = vmul.f32 %v2264, %v2264
  %v2521 = vmul.f32 %v2265, %v2265
  %v2522 = vmul.f32 %v2266, %v2266
  %v2523 = vadd.f32 %v2267, %v2268
  %2524 = vadd.xlane.f32.xlu0 %v2523
  %v2525 = vpop.xlane.xlu0 %2524
  %v2526 = vadd.f32 %v2269, %v2270
  %2527 = vadd.xlane.f32.xlu0 %v2526
  %v2528 = vpop.xlane.xlu0 %2527
  %v2529 = vadd.f32 %v2271, %v2272
  %2530 = vadd.xlane.f32.xlu0 %v2529
  %v2531 = vpop.xlane.xlu0 %2530
  %v2532 = vadd.f32 %v2273, %v2274
  %2533 = vadd.xlane.f32.xlu0 %v2532
  %v2534 = vpop.xlane.xlu0 %2533
  %v2535 = vadd.f32 %v2275, %v2276
  %2536 = vadd.xlane.f32.xlu0 %v2535
  %v2537 = vpop.xlane.xlu0 %2536
  %v2538 = vadd.f32 %v2277, %v2278
  %2539 = vadd.xlane.f32.xlu0 %v2538
  %v2540 = vpop.xlane.xlu0 %2539
  %v2541 = vadd.f32 %v2279, %v2280
  %2542 = vadd.xlane.f32.xlu0 %v2541
  %v2543 = vpop.xlane.xlu0 %2542
  %v2544 = vadd.f32 %v2281, %v2282
  %2545 = vadd.xlane.f32.xlu0 %v2544
  %v2546 = vpop.xlane.xlu0 %2545
  %v2547 = vadd.f32 %v2283, %v2284
  %2548 = vadd.xlane.f32.xlu0 %v2547
  %v2549 = vpop.xlane.xlu0 %2548
  %v2550 = vadd.f32 %v2285, %v2286
  %2551 = vadd.xlane.f32.xlu0 %v2550
  %v2552 = vpop.xlane.xlu0 %2551
  %v2553 = vadd.f32 %v2287, %v2288
  %2554 = vadd.xlane.f32.xlu0 %v2553
  %v2555 = vpop.xlane.xlu0 %2554
  %v2556 = vadd.f32 %v2289, %v2290
  %2557 = vadd.xlane.f32.xlu0 %v2556
  %v2558 = vpop.xlane.xlu0 %2557
  %v2559 = vadd.f32 %v2291, %v2292
  %2560 = vadd.xlane.f32.xlu0 %v2559
  %v2561 = vpop.xlane.xlu0 %2560
  %v2562 = vadd.f32 %v2293, %v2294
  %2563 = vadd.xlane.f32.xlu0 %v2562
  %v2564 = vpop.xlane.xlu0 %2563
  %v2565 = vadd.f32 %v2295, %v2296
  %2566 = vadd.xlane.f32.xlu0 %v2565
  %v2567 = vpop.xlane.xlu0 %2566
  %v2568 = vadd.f32 %v2297, %v2298
  %2569 = vadd.xlane.f32.xlu0 %v2568
  %v2570 = vpop.xlane.xlu0 %2569
  %v2571 = vadd.f32 %v2299, %v2300
  %2572 = vadd.xlane.f32.xlu0 %v2571
  %v2573 = vpop.xlane.xlu0 %2572
  %v2574 = vadd.f32 %v2301, %v2302
  %2575 = vadd.xlane.f32.xlu0 %v2574
  %v2576 = vpop.xlane.xlu0 %2575
  %v2577 = vadd.f32 %v2303, %v2304
  %2578 = vadd.xlane.f32.xlu0 %v2577
  %v2579 = vpop.xlane.xlu0 %2578
  %v2580 = vadd.f32 %v2305, %v2306
  %2581 = vadd.xlane.f32.xlu0 %v2580
  %v2582 = vpop.xlane.xlu0 %2581
  %v2583 = vadd.f32 %v2307, %v2308
  %2584 = vadd.xlane.f32.xlu0 %v2583
  %v2585 = vpop.xlane.xlu0 %2584
  %v2586 = vadd.f32 %v2309, %v2310
  %2587 = vadd.xlane.f32.xlu0 %v2586
  %v2588 = vpop.xlane.xlu0 %2587
  %v2589 = vadd.f32 %v2311, %v2312
  %2590 = vadd.xlane.f32.xlu0 %v2589
  %v2591 = vpop.xlane.xlu0 %2590
  %v2592 = vadd.f32 %v2313, %v2314
  %2593 = vadd.xlane.f32.xlu0 %v2592
  %v2594 = vpop.xlane.xlu0 %2593
  %v2595 = vadd.f32 %v2315, %v2316
  %2596 = vadd.xlane.f32.xlu0 %v2595
  %v2597 = vpop.xlane.xlu0 %2596
  %v2598 = vadd.f32 %v2317, %v2318
  %2599 = vadd.xlane.f32.xlu0 %v2598
  %v2600 = vpop.xlane.xlu0 %2599
  %v2601 = vadd.f32 %v2319, %v2320
  %2602 = vadd.xlane.f32.xlu0 %v2601
  %v2603 = vpop.xlane.xlu0 %2602
  %v2604 = vadd.f32 %v2321, %v2322
  %2605 = vadd.xlane.f32.xlu0 %v2604
  %v2606 = vpop.xlane.xlu0 %2605
  %v2607 = vadd.f32 %v2323, %v2324
  %2608 = vadd.xlane.f32.xlu0 %v2607
  %v2609 = vpop.xlane.xlu0 %2608
  %v2610 = vadd.f32 %v2325, %v2326
  %2611 = vadd.xlane.f32.xlu0 %v2610
  %v2612 = vpop.xlane.xlu0 %2611
  %v2613 = vadd.f32 %v2327, %v2328
  %2614 = vadd.xlane.f32.xlu0 %v2613
  %v2615 = vpop.xlane.xlu0 %2614
  %v2616 = vadd.f32 %v2329, %v2330
  %2617 = vadd.xlane.f32.xlu0 %v2616
  %v2618 = vpop.xlane.xlu0 %2617
  %v2619 = vadd.f32 %v2331, %v2332
  %2620 = vadd.xlane.f32.xlu0 %v2619
  %v2621 = vpop.xlane.xlu0 %2620
  %v2622 = vadd.f32 %v2333, %v2334
  %2623 = vadd.xlane.f32.xlu0 %v2622
  %v2624 = vpop.xlane.xlu0 %2623
  %v2625 = vadd.f32 %v2335, %v2336
  %2626 = vadd.xlane.f32.xlu0 %v2625
  %v2627 = vpop.xlane.xlu0 %2626
  %v2628 = vadd.f32 %v2337, %v2338
  %2629 = vadd.xlane.f32.xlu0 %v2628
  %v2630 = vpop.xlane.xlu0 %2629
  %v2631 = vadd.f32 %v2339, %v2340
  %2632 = vadd.xlane.f32.xlu0 %v2631
  %v2633 = vpop.xlane.xlu0 %2632
  %v2634 = vadd.f32 %v2341, %v2342
  %2635 = vadd.xlane.f32.xlu0 %v2634
  %v2636 = vpop.xlane.xlu0 %2635
  %v2637 = vadd.f32 %v2343, %v2344
  %2638 = vadd.xlane.f32.xlu0 %v2637
  %v2639 = vpop.xlane.xlu0 %2638
  %v2640 = vadd.f32 %v2345, %v2346
  %2641 = vadd.xlane.f32.xlu0 %v2640
  %v2642 = vpop.xlane.xlu0 %2641
  %v2643 = vadd.f32 %v2347, %v2348
  %2644 = vadd.xlane.f32.xlu0 %v2643
  %v2645 = vpop.xlane.xlu0 %2644
  %v2646 = vadd.f32 %v2349, %v2350
  %2647 = vadd.xlane.f32.xlu0 %v2646
  %v2648 = vpop.xlane.xlu0 %2647
  %v2649 = vadd.f32 %v2351, %v2352
  %2650 = vadd.xlane.f32.xlu0 %v2649
  %v2651 = vpop.xlane.xlu0 %2650
  %v2652 = vadd.f32 %v2353, %v2354
  %2653 = vadd.xlane.f32.xlu0 %v2652
  %v2654 = vpop.xlane.xlu0 %2653
  %v2655 = vadd.f32 %v2355, %v2356
  %2656 = vadd.xlane.f32.xlu0 %v2655
  %v2657 = vpop.xlane.xlu0 %2656
  %v2658 = vadd.f32 %v2357, %v2358
  %2659 = vadd.xlane.f32.xlu0 %v2658
  %v2660 = vpop.xlane.xlu0 %2659
  %v2661 = vadd.f32 %v2359, %v2360
  %2662 = vadd.xlane.f32.xlu0 %v2661
  %v2663 = vpop.xlane.xlu0 %2662
  %v2664 = vadd.f32 %v2361, %v2362
  %2665 = vadd.xlane.f32.xlu0 %v2664
  %v2666 = vpop.xlane.xlu0 %2665
  %v2667 = vadd.f32 %v2363, %v2364
  %2668 = vadd.xlane.f32.xlu0 %v2667
  %v2669 = vpop.xlane.xlu0 %2668
  %v2670 = vadd.f32 %v2365, %v2366
  %2671 = vadd.xlane.f32.xlu0 %v2670
  %v2672 = vpop.xlane.xlu0 %2671
  %v2673 = vadd.f32 %v2367, %v2368
  %2674 = vadd.xlane.f32.xlu0 %v2673
  %v2675 = vpop.xlane.xlu0 %2674
  %v2676 = vadd.f32 %v2369, %v2370
  %2677 = vadd.xlane.f32.xlu0 %v2676
  %v2678 = vpop.xlane.xlu0 %2677
  %v2679 = vadd.f32 %v2371, %v2372
  %2680 = vadd.xlane.f32.xlu0 %v2679
  %v2681 = vpop.xlane.xlu0 %2680
  %v2682 = vadd.f32 %v2373, %v2374
  %2683 = vadd.xlane.f32.xlu0 %v2682
  %v2684 = vpop.xlane.xlu0 %2683
  %v2685 = vadd.f32 %v2375, %v2376
  %2686 = vadd.xlane.f32.xlu0 %v2685
  %v2687 = vpop.xlane.xlu0 %2686
  %v2688 = vadd.f32 %v2377, %v2378
  %2689 = vadd.xlane.f32.xlu0 %v2688
  %v2690 = vpop.xlane.xlu0 %2689
  %v2691 = vadd.f32 %v2379, %v2380
  %2692 = vadd.xlane.f32.xlu0 %v2691
  %v2693 = vpop.xlane.xlu0 %2692
  %v2694 = vadd.f32 %v2381, %v2382
  %2695 = vadd.xlane.f32.xlu0 %v2694
  %v2696 = vpop.xlane.xlu0 %2695
  %v2697 = vadd.f32 %v2383, %v2384
  %2698 = vadd.xlane.f32.xlu0 %v2697
  %v2699 = vpop.xlane.xlu0 %2698
  %v2700 = vadd.f32 %v2385, %v2386
  %2701 = vadd.xlane.f32.xlu0 %v2700
  %v2702 = vpop.xlane.xlu0 %2701
  %v2703 = vadd.f32 %v2387, %v2388
  %2704 = vadd.xlane.f32.xlu0 %v2703
  %v2705 = vpop.xlane.xlu0 %2704
  %v2706 = vadd.f32 %v2389, %v2390
  %2707 = vadd.xlane.f32.xlu0 %v2706
  %v2708 = vpop.xlane.xlu0 %2707
  %v2709 = vadd.f32 %v2391, %v2392
  %2710 = vadd.xlane.f32.xlu0 %v2709
  %v2711 = vpop.xlane.xlu0 %2710
  %v2712 = vadd.f32 %v2393, %v2394
  %2713 = vadd.xlane.f32.xlu0 %v2712
  %v2714 = vpop.xlane.xlu0 %2713
  %v2715 = vadd.f32 %v2395, %v2396
  %2716 = vadd.xlane.f32.xlu0 %v2715
  %v2717 = vpop.xlane.xlu0 %2716
  %v2718 = vadd.f32 %v2397, %v2398
  %2719 = vadd.xlane.f32.xlu0 %v2718
  %v2720 = vpop.xlane.xlu0 %2719
  %v2721 = vadd.f32 %v2399, %v2400
  %2722 = vadd.xlane.f32.xlu0 %v2721
  %v2723 = vpop.xlane.xlu0 %2722
  %v2724 = vadd.f32 %v2401, %v2402
  %2725 = vadd.xlane.f32.xlu0 %v2724
  %v2726 = vpop.xlane.xlu0 %2725
  %v2727 = vadd.f32 %v2403, %v2404
  %2728 = vadd.xlane.f32.xlu0 %v2727
  %v2729 = vpop.xlane.xlu0 %2728
  %v2730 = vadd.f32 %v2405, %v2406
  %2731 = vadd.xlane.f32.xlu0 %v2730
  %v2732 = vpop.xlane.xlu0 %2731
  %v2733 = vadd.f32 %v2407, %v2408
  %2734 = vadd.xlane.f32.xlu0 %v2733
  %v2735 = vpop.xlane.xlu0 %2734
  %v2736 = vadd.f32 %v2409, %v2410
  %2737 = vadd.xlane.f32.xlu0 %v2736
  %v2738 = vpop.xlane.xlu0 %2737
  %v2739 = vadd.f32 %v2411, %v2412
  %2740 = vadd.xlane.f32.xlu0 %v2739
  %v2741 = vpop.xlane.xlu0 %2740
  %v2742 = vadd.f32 %v2413, %v2414
  %2743 = vadd.xlane.f32.xlu0 %v2742
  %v2744 = vpop.xlane.xlu0 %2743
  %v2745 = vadd.f32 %v2415, %v2416
  %2746 = vadd.xlane.f32.xlu0 %v2745
  %v2747 = vpop.xlane.xlu0 %2746
  %v2748 = vadd.f32 %v2417, %v2418
  %2749 = vadd.xlane.f32.xlu0 %v2748
  %v2750 = vpop.xlane.xlu0 %2749
  %v2751 = vadd.f32 %v2419, %v2420
  %2752 = vadd.xlane.f32.xlu0 %v2751
  %v2753 = vpop.xlane.xlu0 %2752
  %v2754 = vadd.f32 %v2421, %v2422
  %2755 = vadd.xlane.f32.xlu0 %v2754
  %v2756 = vpop.xlane.xlu0 %2755
  %v2757 = vadd.f32 %v2423, %v2424
  %2758 = vadd.xlane.f32.xlu0 %v2757
  %v2759 = vpop.xlane.xlu0 %2758
  %v2760 = vadd.f32 %v2425, %v2426
  %2761 = vadd.xlane.f32.xlu0 %v2760
  %v2762 = vpop.xlane.xlu0 %2761
  %v2763 = vadd.f32 %v2427, %v2428
  %2764 = vadd.xlane.f32.xlu0 %v2763
  %v2765 = vpop.xlane.xlu0 %2764
  %v2766 = vadd.f32 %v2429, %v2430
  %2767 = vadd.xlane.f32.xlu0 %v2766
  %v2768 = vpop.xlane.xlu0 %2767
  %v2769 = vadd.f32 %v2431, %v2432
  %2770 = vadd.xlane.f32.xlu0 %v2769
  %v2771 = vpop.xlane.xlu0 %2770
  %v2772 = vadd.f32 %v2433, %v2434
  %2773 = vadd.xlane.f32.xlu0 %v2772
  %v2774 = vpop.xlane.xlu0 %2773
  %v2775 = vadd.f32 %v2435, %v2436
  %2776 = vadd.xlane.f32.xlu0 %v2775
  %v2777 = vpop.xlane.xlu0 %2776
  %v2778 = vadd.f32 %v2437, %v2438
  %2779 = vadd.xlane.f32.xlu0 %v2778
  %v2780 = vpop.xlane.xlu0 %2779
  %v2781 = vadd.f32 %v2439, %v2440
  %2782 = vadd.xlane.f32.xlu0 %v2781
  %v2783 = vpop.xlane.xlu0 %2782
  %v2784 = vadd.f32 %v2441, %v2442
  %2785 = vadd.xlane.f32.xlu0 %v2784
  %v2786 = vpop.xlane.xlu0 %2785
  %v2787 = vadd.f32 %v2443, %v2444
  %2788 = vadd.xlane.f32.xlu0 %v2787
  %v2789 = vpop.xlane.xlu0 %2788
  %v2790 = vadd.f32 %v2445, %v2446
  %2791 = vadd.xlane.f32.xlu0 %v2790
  %v2792 = vpop.xlane.xlu0 %2791
  %v2793 = vadd.f32 %v2447, %v2448
  %2794 = vadd.xlane.f32.xlu0 %v2793
  %v2795 = vpop.xlane.xlu0 %2794
  %v2796 = vadd.f32 %v2449, %v2450
  %2797 = vadd.xlane.f32.xlu0 %v2796
  %v2798 = vpop.xlane.xlu0 %2797
  %v2799 = vadd.f32 %v2451, %v2452
  %2800 = vadd.xlane.f32.xlu0 %v2799
  %v2801 = vpop.xlane.xlu0 %2800
  %v2802 = vadd.f32 %v2453, %v2454
  %2803 = vadd.xlane.f32.xlu0 %v2802
  %v2804 = vpop.xlane.xlu0 %2803
  %v2805 = vadd.f32 %v2455, %v2456
  %2806 = vadd.xlane.f32.xlu0 %v2805
  %v2807 = vpop.xlane.xlu0 %2806
  %v2808 = vadd.f32 %v2457, %v2458
  %2809 = vadd.xlane.f32.xlu0 %v2808
  %v2810 = vpop.xlane.xlu0 %2809
  %v2811 = vadd.f32 %v2459, %v2460
  %2812 = vadd.xlane.f32.xlu0 %v2811
  %v2813 = vpop.xlane.xlu0 %2812
  %v2814 = vadd.f32 %v2461, %v2462
  %2815 = vadd.xlane.f32.xlu0 %v2814
  %v2816 = vpop.xlane.xlu0 %2815
  %v2817 = vadd.f32 %v2463, %v2464
  %2818 = vadd.xlane.f32.xlu0 %v2817
  %v2819 = vpop.xlane.xlu0 %2818
  %v2820 = vadd.f32 %v2465, %v2466
  %2821 = vadd.xlane.f32.xlu0 %v2820
  %v2822 = vpop.xlane.xlu0 %2821
  %v2823 = vadd.f32 %v2467, %v2468
  %2824 = vadd.xlane.f32.xlu0 %v2823
  %v2825 = vpop.xlane.xlu0 %2824
  %v2826 = vadd.f32 %v2469, %v2470
  %2827 = vadd.xlane.f32.xlu0 %v2826
  %v2828 = vpop.xlane.xlu0 %2827
  %v2829 = vadd.f32 %v2471, %v2472
  %2830 = vadd.xlane.f32.xlu0 %v2829
  %v2831 = vpop.xlane.xlu0 %2830
  %v2832 = vadd.f32 %v2473, %v2474
  %2833 = vadd.xlane.f32.xlu0 %v2832
  %v2834 = vpop.xlane.xlu0 %2833
  %v2835 = vadd.f32 %v2475, %v2476
  %2836 = vadd.xlane.f32.xlu0 %v2835
  %v2837 = vpop.xlane.xlu0 %2836
  %v2838 = vadd.f32 %v2477, %v2478
  %2839 = vadd.xlane.f32.xlu0 %v2838
  %v2840 = vpop.xlane.xlu0 %2839
  %v2841 = vadd.f32 %v2479, %v2480
  %2842 = vadd.xlane.f32.xlu0 %v2841
  %v2843 = vpop.xlane.xlu0 %2842
  %v2844 = vadd.f32 %v2481, %v2482
  %2845 = vadd.xlane.f32.xlu0 %v2844
  %v2846 = vpop.xlane.xlu0 %2845
  %v2847 = vadd.f32 %v2483, %v2484
  %2848 = vadd.xlane.f32.xlu0 %v2847
  %v2849 = vpop.xlane.xlu0 %2848
  %v2850 = vadd.f32 %v2485, %v2486
  %2851 = vadd.xlane.f32.xlu0 %v2850
  %v2852 = vpop.xlane.xlu0 %2851
  %v2853 = vadd.f32 %v2487, %v2488
  %2854 = vadd.xlane.f32.xlu0 %v2853
  %v2855 = vpop.xlane.xlu0 %2854
  %v2856 = vadd.f32 %v2489, %v2490
  %2857 = vadd.xlane.f32.xlu0 %v2856
  %v2858 = vpop.xlane.xlu0 %2857
  %v2859 = vadd.f32 %v2491, %v2492
  %2860 = vadd.xlane.f32.xlu0 %v2859
  %v2861 = vpop.xlane.xlu0 %2860
  %v2862 = vadd.f32 %v2493, %v2494
  %2863 = vadd.xlane.f32.xlu0 %v2862
  %v2864 = vpop.xlane.xlu0 %2863
  %v2865 = vadd.f32 %v2495, %v2496
  %2866 = vadd.xlane.f32.xlu0 %v2865
  %v2867 = vpop.xlane.xlu0 %2866
  %v2868 = vadd.f32 %v2497, %v2498
  %2869 = vadd.xlane.f32.xlu0 %v2868
  %v2870 = vpop.xlane.xlu0 %2869
  %v2871 = vadd.f32 %v2499, %v2500
  %2872 = vadd.xlane.f32.xlu0 %v2871
  %v2873 = vpop.xlane.xlu0 %2872
  %v2874 = vadd.f32 %v2501, %v2502
  %2875 = vadd.xlane.f32.xlu0 %v2874
  %v2876 = vpop.xlane.xlu0 %2875
  %v2877 = vadd.f32 %v2503, %v2504
  %2878 = vadd.xlane.f32.xlu0 %v2877
  %v2879 = vpop.xlane.xlu0 %2878
  %v2880 = vadd.f32 %v2505, %v2506
  %2881 = vadd.xlane.f32.xlu0 %v2880
  %v2882 = vpop.xlane.xlu0 %2881
  %v2883 = vadd.f32 %v2507, %v2508
  %2884 = vadd.xlane.f32.xlu0 %v2883
  %v2885 = vpop.xlane.xlu0 %2884
  %v2886 = vadd.f32 %v2509, %v2510
  %2887 = vadd.xlane.f32.xlu0 %v2886
  %v2888 = vpop.xlane.xlu0 %2887
  %v2889 = vadd.f32 %v2511, %v2512
  %2890 = vadd.xlane.f32.xlu0 %v2889
  %v2891 = vpop.xlane.xlu0 %2890
  %v2892 = vadd.f32 %v2513, %v2514
  %2893 = vadd.xlane.f32.xlu0 %v2892
  %v2894 = vpop.xlane.xlu0 %2893
  %v2895 = vadd.f32 %v2515, %v2516
  %2896 = vadd.xlane.f32.xlu0 %v2895
  %v2897 = vpop.xlane.xlu0 %2896
  %v2898 = vadd.f32 %v2517, %v2518
  %2899 = vadd.xlane.f32.xlu0 %v2898
  %v2900 = vpop.xlane.xlu0 %2899
  %v2901 = vadd.f32 %v2519, %v2520
  %2902 = vadd.xlane.f32.xlu0 %v2901
  %v2903 = vpop.xlane.xlu0 %2902
  %v2904 = vadd.f32 %v2521, %v2522
  %2905 = vadd.xlane.f32.xlu0 %v2904
  %v2906 = vpop.xlane.xlu0 %2905
  %v2907 = vmul.f32 %v2525, 0.0051020407
  %v2908 = vmul.f32 %v2528, 0.0051020407
  %v2909 = vmul.f32 %v2531, 0.0051020407
  %v2910 = vmul.f32 %v2534, 0.0051020407
  %v2911 = vmul.f32 %v2537, 0.0051020407
  %v2912 = vmul.f32 %v2540, 0.0051020407
  %v2913 = vmul.f32 %v2543, 0.0051020407
  %v2914 = vmul.f32 %v2546, 0.0051020407
  %v2915 = vmul.f32 %v2549, 0.0051020407
  %v2916 = vmul.f32 %v2552, 0.0051020407
  %v2917 = vmul.f32 %v2555, 0.0051020407
  %v2918 = vmul.f32 %v2558, 0.0051020407
  %v2919 = vmul.f32 %v2561, 0.0051020407
  %v2920 = vmul.f32 %v2564, 0.0051020407
  %v2921 = vmul.f32 %v2567, 0.0051020407
  %v2922 = vmul.f32 %v2570, 0.0051020407
  %v2923 = vmul.f32 %v2573, 0.0051020407
  %v2924 = vmul.f32 %v2576, 0.0051020407
  %v2925 = vmul.f32 %v2579, 0.0051020407
  %v2926 = vmul.f32 %v2582, 0.0051020407
  %v2927 = vmul.f32 %v2585, 0.0051020407
  %v2928 = vmul.f32 %v2588, 0.0051020407
  %v2929 = vmul.f32 %v2591, 0.0051020407
  %v2930 = vmul.f32 %v2594, 0.0051020407
  %v2931 = vmul.f32 %v2597, 0.0051020407
  %v2932 = vmul.f32 %v2600, 0.0051020407
  %v2933 = vmul.f32 %v2603, 0.0051020407
  %v2934 = vmul.f32 %v2606, 0.0051020407
  %v2935 = vmul.f32 %v2609, 0.0051020407
  %v2936 = vmul.f32 %v2612, 0.0051020407
  %v2937 = vmul.f32 %v2615, 0.0051020407
  %v2938 = vmul.f32 %v2618, 0.0051020407
  %v2939 = vmul.f32 %v2621, 0.0051020407
  %v2940 = vmul.f32 %v2624, 0.0051020407
  %v2941 = vmul.f32 %v2627, 0.0051020407
  %v2942 = vmul.f32 %v2630, 0.0051020407
  %v2943 = vmul.f32 %v2633, 0.0051020407
  %v2944 = vmul.f32 %v2636, 0.0051020407
  %v2945 = vmul.f32 %v2639, 0.0051020407
  %v2946 = vmul.f32 %v2642, 0.0051020407
  %v2947 = vmul.f32 %v2645, 0.0051020407
  %v2948 = vmul.f32 %v2648, 0.0051020407
  %v2949 = vmul.f32 %v2651, 0.0051020407
  %v2950 = vmul.f32 %v2654, 0.0051020407
  %v2951 = vmul.f32 %v2657, 0.0051020407
  %v2952 = vmul.f32 %v2660, 0.0051020407
  %v2953 = vmul.f32 %v2663, 0.0051020407
  %v2954 = vmul.f32 %v2666, 0.0051020407
  %v2955 = vmul.f32 %v2669, 0.0051020407
  %v2956 = vmul.f32 %v2672, 0.0051020407
  %v2957 = vmul.f32 %v2675, 0.0051020407
  %v2958 = vmul.f32 %v2678, 0.0051020407
  %v2959 = vmul.f32 %v2681, 0.0051020407
  %v2960 = vmul.f32 %v2684, 0.0051020407
  %v2961 = vmul.f32 %v2687, 0.0051020407
  %v2962 = vmul.f32 %v2690, 0.0051020407
  %v2963 = vmul.f32 %v2693, 0.0051020407
  %v2964 = vmul.f32 %v2696, 0.0051020407
  %v2965 = vmul.f32 %v2699, 0.0051020407
  %v2966 = vmul.f32 %v2702, 0.0051020407
  %v2967 = vmul.f32 %v2705, 0.0051020407
  %v2968 = vmul.f32 %v2708, 0.0051020407
  %v2969 = vmul.f32 %v2711, 0.0051020407
  %v2970 = vmul.f32 %v2714, 0.0051020407
  %v2971 = vmul.f32 %v2717, 0.0051020407
  %v2972 = vmul.f32 %v2720, 0.0051020407
  %v2973 = vmul.f32 %v2723, 0.0051020407
  %v2974 = vmul.f32 %v2726, 0.0051020407
  %v2975 = vmul.f32 %v2729, 0.0051020407
  %v2976 = vmul.f32 %v2732, 0.0051020407
  %v2977 = vmul.f32 %v2735, 0.0051020407
  %v2978 = vmul.f32 %v2738, 0.0051020407
  %v2979 = vmul.f32 %v2741, 0.0051020407
  %v2980 = vmul.f32 %v2744, 0.0051020407
  %v2981 = vmul.f32 %v2747, 0.0051020407
  %v2982 = vmul.f32 %v2750, 0.0051020407
  %v2983 = vmul.f32 %v2753, 0.0051020407
  %v2984 = vmul.f32 %v2756, 0.0051020407
  %v2985 = vmul.f32 %v2759, 0.0051020407
  %v2986 = vmul.f32 %v2762, 0.0051020407
  %v2987 = vmul.f32 %v2765, 0.0051020407
  %v2988 = vmul.f32 %v2768, 0.0051020407
  %v2989 = vmul.f32 %v2771, 0.0051020407
  %v2990 = vmul.f32 %v2774, 0.0051020407
  %v2991 = vmul.f32 %v2777, 0.0051020407
  %v2992 = vmul.f32 %v2780, 0.0051020407
  %v2993 = vmul.f32 %v2783, 0.0051020407
  %v2994 = vmul.f32 %v2786, 0.0051020407
  %v2995 = vmul.f32 %v2789, 0.0051020407
  %v2996 = vmul.f32 %v2792, 0.0051020407
  %v2997 = vmul.f32 %v2795, 0.0051020407
  %v2998 = vmul.f32 %v2798, 0.0051020407
  %v2999 = vmul.f32 %v2801, 0.0051020407
  %v3000 = vmul.f32 %v2804, 0.0051020407
  %v3001 = vmul.f32 %v2807, 0.0051020407
  %v3002 = vmul.f32 %v2810, 0.0051020407
  %v3003 = vmul.f32 %v2813, 0.0051020407
  %v3004 = vmul.f32 %v2816, 0.0051020407
  %v3005 = vmul.f32 %v2819, 0.0051020407
  %v3006 = vmul.f32 %v2822, 0.0051020407
  %v3007 = vmul.f32 %v2825, 0.0051020407
  %v3008 = vmul.f32 %v2828, 0.0051020407
  %v3009 = vmul.f32 %v2831, 0.0051020407
  %v3010 = vmul.f32 %v2834, 0.0051020407
  %v3011 = vmul.f32 %v2837, 0.0051020407
  %v3012 = vmul.f32 %v2840, 0.0051020407
  %v3013 = vmul.f32 %v2843, 0.0051020407
  %v3014 = vmul.f32 %v2846, 0.0051020407
  %v3015 = vmul.f32 %v2849, 0.0051020407
  %v3016 = vmul.f32 %v2852, 0.0051020407
  %v3017 = vmul.f32 %v2855, 0.0051020407
  %v3018 = vmul.f32 %v2858, 0.0051020407
  %v3019 = vmul.f32 %v2861, 0.0051020407
  %v3020 = vmul.f32 %v2864, 0.0051020407
  %v3021 = vmul.f32 %v2867, 0.0051020407
  %v3022 = vmul.f32 %v2870, 0.0051020407
  %v3023 = vmul.f32 %v2873, 0.0051020407
  %v3024 = vmul.f32 %v2876, 0.0051020407
  %v3025 = vmul.f32 %v2879, 0.0051020407
  %v3026 = vmul.f32 %v2882, 0.0051020407
  %v3027 = vmul.f32 %v2885, 0.0051020407
  %v3028 = vmul.f32 %v2888, 0.0051020407
  %v3029 = vmul.f32 %v2891, 0.0051020407
  %v3030 = vmul.f32 %v2894, 0.0051020407
  %v3031 = vmul.f32 %v2897, 0.0051020407
  %v3032 = vmul.f32 %v2900, 0.0051020407
  %v3033 = vmul.f32 %v2903, 0.0051020407
  %v3034 = vmul.f32 %v2906, 0.0051020407
  %v3035 = vld [vmem:[%s2] sm:$0xff]
  %v3036 = vld [vmem:[%s2 + $0x8] sm:$0xff]
  %v3037 = vld [vmem:[%s2 + $0x10] sm:$0xff]
  %v3038 = vld [vmem:[%s2 + $0x18] sm:$0xff]
  %v3039 = vld [vmem:[%s2 + $0x20] sm:$0xff]
  %v3040 = vld [vmem:[%s2 + $0x28] sm:$0xff]
  %v3041 = vld [vmem:[%s2 + $0x30] sm:$0xff]
  %v3042 = vld [vmem:[%s2 + $0x38] sm:$0xff]
  %v3043 = vld [vmem:[%s2 + $0x40] sm:$0xff]
  %v3044 = vld [vmem:[%s2 + $0x48] sm:$0xff]
  %v3045 = vld [vmem:[%s2 + $0x50] sm:$0xff]
  %v3046 = vld [vmem:[%s2 + $0x58] sm:$0xff]
  %v3047 = vld [vmem:[%s2 + $0x60] sm:$0xff]
  %v3048 = vld [vmem:[%s2 + $0x68] sm:$0xff]
  %v3049 = vld [vmem:[%s2 + $0x70] sm:$0xff]
  %v3050 = vld [vmem:[%s2 + $0x78] sm:$0xff]
  %v3051 = vld [vmem:[%s2 + $0x80] sm:$0xff]
  %v3052 = vld [vmem:[%s2 + $0x88] sm:$0xff]
  %v3053 = vld [vmem:[%s2 + $0x90] sm:$0xff]
  %v3054 = vld [vmem:[%s2 + $0x98] sm:$0xff]
  %v3055 = vld [vmem:[%s2 + $0xa0] sm:$0xff]
  %v3056 = vld [vmem:[%s2 + $0xa8] sm:$0xff]
  %v3057 = vld [vmem:[%s2 + $0xb0] sm:$0xff]
  %v3058 = vld [vmem:[%s2 + $0xb8] sm:$0xff]
  %v3059 = vld [vmem:[%s2 + $0xc0] sm:$0xff]
  %v3060 = vld [vmem:[%s2 + $0xc8] sm:$0xff]
  %v3061 = vld [vmem:[%s2 + $0xd0] sm:$0xff]
  %v3062 = vld [vmem:[%s2 + $0xd8] sm:$0xff]
  %v3063 = vld [vmem:[%s2 + $0xe0] sm:$0xff]
  %v3064 = vld [vmem:[%s2 + $0xe8] sm:$0xff]
  %v3065 = vld [vmem:[%s2 + $0xf0] sm:$0xff]
  %v3066 = vld [vmem:[%s2 + $0xf8] sm:$0xff]
  %v3067 = vld [vmem:[%s2 + $0x100] sm:$0xff]
  %v3068 = vld [vmem:[%s2 + $0x108] sm:$0xff]
  %v3069 = vld [vmem:[%s2 + $0x110] sm:$0xff]
  %v3070 = vld [vmem:[%s2 + $0x118] sm:$0xff]
  %v3071 = vld [vmem:[%s2 + $0x120] sm:$0xff]
  %v3072 = vld [vmem:[%s2 + $0x128] sm:$0xff]
  %v3073 = vld [vmem:[%s2 + $0x130] sm:$0xff]
  %v3074 = vld [vmem:[%s2 + $0x138] sm:$0xff]
  %v3075 = vld [vmem:[%s2 + $0x140] sm:$0xff]
  %v3076 = vld [vmem:[%s2 + $0x148] sm:$0xff]
  %v3077 = vld [vmem:[%s2 + $0x150] sm:$0xff]
  %v3078 = vld [vmem:[%s2 + $0x158] sm:$0xff]
  %v3079 = vld [vmem:[%s2 + $0x160] sm:$0xff]
  %v3080 = vld [vmem:[%s2 + $0x168] sm:$0xff]
  %v3081 = vld [vmem:[%s2 + $0x170] sm:$0xff]
  %v3082 = vld [vmem:[%s2 + $0x178] sm:$0xff]
  %v3083 = vld [vmem:[%s2 + $0x180] sm:$0xff]
  %v3084 = vld [vmem:[%s2 + $0x188] sm:$0xff]
  %v3085 = vld [vmem:[%s2 + $0x190] sm:$0xff]
  %v3086 = vld [vmem:[%s2 + $0x198] sm:$0xff]
  %v3087 = vld [vmem:[%s2 + $0x1a0] sm:$0xff]
  %v3088 = vld [vmem:[%s2 + $0x1a8] sm:$0xff]
  %v3089 = vld [vmem:[%s2 + $0x1b0] sm:$0xff]
  %v3090 = vld [vmem:[%s2 + $0x1b8] sm:$0xff]
  %v3091 = vld [vmem:[%s2 + $0x1c0] sm:$0xff]
  %v3092 = vld [vmem:[%s2 + $0x1c8] sm:$0xff]
  %v3093 = vld [vmem:[%s2 + $0x1d0] sm:$0xff]
  %v3094 = vld [vmem:[%s2 + $0x1d8] sm:$0xff]
  %v3095 = vld [vmem:[%s2 + $0x1e0] sm:$0xff]
  %v3096 = vld [vmem:[%s2 + $0x1e8] sm:$0xff]
  %v3097 = vld [vmem:[%s2 + $0x1f0] sm:$0xff]
  %v3098 = vld [vmem:[%s2 + $0x1f8] sm:$0xff]
  %v3099 = vld [vmem:[%s2 + $0x200] sm:$0xff]
  %v3100 = vld [vmem:[%s2 + $0x208] sm:$0xff]
  %v3101 = vld [vmem:[%s2 + $0x210] sm:$0xff]
  %v3102 = vld [vmem:[%s2 + $0x218] sm:$0xff]
  %v3103 = vld [vmem:[%s2 + $0x220] sm:$0xff]
  %v3104 = vld [vmem:[%s2 + $0x228] sm:$0xff]
  %v3105 = vld [vmem:[%s2 + $0x230] sm:$0xff]
  %v3106 = vld [vmem:[%s2 + $0x238] sm:$0xff]
  %v3107 = vld [vmem:[%s2 + $0x240] sm:$0xff]
  %v3108 = vld [vmem:[%s2 + $0x248] sm:$0xff]
  %v3109 = vld [vmem:[%s2 + $0x250] sm:$0xff]
  %v3110 = vld [vmem:[%s2 + $0x258] sm:$0xff]
  %v3111 = vld [vmem:[%s2 + $0x260] sm:$0xff]
  %v3112 = vld [vmem:[%s2 + $0x268] sm:$0xff]
  %v3113 = vld [vmem:[%s2 + $0x270] sm:$0xff]
  %v3114 = vld [vmem:[%s2 + $0x278] sm:$0xff]
  %v3115 = vld [vmem:[%s2 + $0x280] sm:$0xff]
  %v3116 = vld [vmem:[%s2 + $0x288] sm:$0xff]
  %v3117 = vld [vmem:[%s2 + $0x290] sm:$0xff]
  %v3118 = vld [vmem:[%s2 + $0x298] sm:$0xff]
  %v3119 = vld [vmem:[%s2 + $0x2a0] sm:$0xff]
  %v3120 = vld [vmem:[%s2 + $0x2a8] sm:$0xff]
  %v3121 = vld [vmem:[%s2 + $0x2b0] sm:$0xff]
  %v3122 = vld [vmem:[%s2 + $0x2b8] sm:$0xff]
  %v3123 = vld [vmem:[%s2 + $0x2c0] sm:$0xff]
  %v3124 = vld [vmem:[%s2 + $0x2c8] sm:$0xff]
  %v3125 = vld [vmem:[%s2 + $0x2d0] sm:$0xff]
  %v3126 = vld [vmem:[%s2 + $0x2d8] sm:$0xff]
  %v3127 = vld [vmem:[%s2 + $0x2e0] sm:$0xff]
  %v3128 = vld [vmem:[%s2 + $0x2e8] sm:$0xff]
  %v3129 = vld [vmem:[%s2 + $0x2f0] sm:$0xff]
  %v3130 = vld [vmem:[%s2 + $0x2f8] sm:$0xff]
  %v3131 = vld [vmem:[%s2 + $0x300] sm:$0xff]
  %v3132 = vld [vmem:[%s2 + $0x308] sm:$0xff]
  %v3133 = vld [vmem:[%s2 + $0x310] sm:$0xff]
  %v3134 = vld [vmem:[%s2 + $0x318] sm:$0xff]
  %v3135 = vld [vmem:[%s2 + $0x320] sm:$0xff]
  %v3136 = vld [vmem:[%s2 + $0x328] sm:$0xff]
  %v3137 = vld [vmem:[%s2 + $0x330] sm:$0xff]
  %v3138 = vld [vmem:[%s2 + $0x338] sm:$0xff]
  %v3139 = vld [vmem:[%s2 + $0x340] sm:$0xff]
  %v3140 = vld [vmem:[%s2 + $0x348] sm:$0xff]
  %v3141 = vld [vmem:[%s2 + $0x350] sm:$0xff]
  %v3142 = vld [vmem:[%s2 + $0x358] sm:$0xff]
  %v3143 = vld [vmem:[%s2 + $0x360] sm:$0xff]
  %v3144 = vld [vmem:[%s2 + $0x368] sm:$0xff]
  %v3145 = vld [vmem:[%s2 + $0x370] sm:$0xff]
  %v3146 = vld [vmem:[%s2 + $0x378] sm:$0xff]
  %v3147 = vld [vmem:[%s2 + $0x380] sm:$0xff]
  %v3148 = vld [vmem:[%s2 + $0x388] sm:$0xff]
  %v3149 = vld [vmem:[%s2 + $0x390] sm:$0xff]
  %v3150 = vld [vmem:[%s2 + $0x398] sm:$0xff]
  %v3151 = vld [vmem:[%s2 + $0x3a0] sm:$0xff]
  %v3152 = vld [vmem:[%s2 + $0x3a8] sm:$0xff]
  %v3153 = vld [vmem:[%s2 + $0x3b0] sm:$0xff]
  %v3154 = vld [vmem:[%s2 + $0x3b8] sm:$0xff]
  %v3155 = vld [vmem:[%s2 + $0x3c0] sm:$0xff]
  %v3156 = vld [vmem:[%s2 + $0x3c8] sm:$0xff]
  %v3157 = vld [vmem:[%s2 + $0x3d0] sm:$0xff]
  %v3158 = vld [vmem:[%s2 + $0x3d8] sm:$0xff]
  %v3159 = vld [vmem:[%s2 + $0x3e0] sm:$0xff]
  %v3160 = vld [vmem:[%s2 + $0x3e8] sm:$0xff]
  %v3161 = vld [vmem:[%s2 + $0x3f0] sm:$0xff]
  %v3162 = vld [vmem:[%s2 + $0x3f8] sm:$0xff]
  %v3163 = vadd.f32 %v2907, 1e-05
  %v3164 = vadd.f32 %v2908, 1e-05
  %v3165 = vadd.f32 %v2909, 1e-05
  %v3166 = vadd.f32 %v2910, 1e-05
  %v3167 = vadd.f32 %v2911, 1e-05
  %v3168 = vadd.f32 %v2912, 1e-05
  %v3169 = vadd.f32 %v2913, 1e-05
  %v3170 = vadd.f32 %v2914, 1e-05
  %v3171 = vadd.f32 %v2915, 1e-05
  %v3172 = vadd.f32 %v2916, 1e-05
  %v3173 = vadd.f32 %v2917, 1e-05
  %v3174 = vadd.f32 %v2918, 1e-05
  %v3175 = vadd.f32 %v2919, 1e-05
  %v3176 = vadd.f32 %v2920, 1e-05
  %v3177 = vadd.f32 %v2921, 1e-05
  %v3178 = vadd.f32 %v2922, 1e-05
  %v3179 = vadd.f32 %v2923, 1e-05
  %v3180 = vadd.f32 %v2924, 1e-05
  %v3181 = vadd.f32 %v2925, 1e-05
  %v3182 = vadd.f32 %v2926, 1e-05
  %v3183 = vadd.f32 %v2927, 1e-05
  %v3184 = vadd.f32 %v2928, 1e-05
  %v3185 = vadd.f32 %v2929, 1e-05
  %v3186 = vadd.f32 %v2930, 1e-05
  %v3187 = vadd.f32 %v2931, 1e-05
  %v3188 = vadd.f32 %v2932, 1e-05
  %v3189 = vadd.f32 %v2933, 1e-05
  %v3190 = vadd.f32 %v2934, 1e-05
  %v3191 = vadd.f32 %v2935, 1e-05
  %v3192 = vadd.f32 %v2936, 1e-05
  %v3193 = vadd.f32 %v2937, 1e-05
  %v3194 = vadd.f32 %v2938, 1e-05
  %v3195 = vadd.f32 %v2939, 1e-05
  %v3196 = vadd.f32 %v2940, 1e-05
  %v3197 = vadd.f32 %v2941, 1e-05
  %v3198 = vadd.f32 %v2942, 1e-05
  %v3199 = vadd.f32 %v2943, 1e-05
  %v3200 = vadd.f32 %v2944, 1e-05
  %v3201 = vadd.f32 %v2945, 1e-05
  %v3202 = vadd.f32 %v2946, 1e-05
  %v3203 = vadd.f32 %v2947, 1e-05
  %v3204 = vadd.f32 %v2948, 1e-05
  %v3205 = vadd.f32 %v2949, 1e-05
  %v3206 = vadd.f32 %v2950, 1e-05
  %v3207 = vadd.f32 %v2951, 1e-05
  %v3208 = vadd.f32 %v2952, 1e-05
  %v3209 = vadd.f32 %v2953, 1e-05
  %v3210 = vadd.f32 %v2954, 1e-05
  %v3211 = vadd.f32 %v2955, 1e-05
  %v3212 = vadd.f32 %v2956, 1e-05
  %v3213 = vadd.f32 %v2957, 1e-05
  %v3214 = vadd.f32 %v2958, 1e-05
  %v3215 = vadd.f32 %v2959, 1e-05
  %v3216 = vadd.f32 %v2960, 1e-05
  %v3217 = vadd.f32 %v2961, 1e-05
  %v3218 = vadd.f32 %v2962, 1e-05
  %v3219 = vadd.f32 %v2963, 1e-05
  %v3220 = vadd.f32 %v2964, 1e-05
  %v3221 = vadd.f32 %v2965, 1e-05
  %v3222 = vadd.f32 %v2966, 1e-05
  %v3223 = vadd.f32 %v2967, 1e-05
  %v3224 = vadd.f32 %v2968, 1e-05
  %v3225 = vadd.f32 %v2969, 1e-05
  %v3226 = vadd.f32 %v2970, 1e-05
  %v3227 = vadd.f32 %v2971, 1e-05
  %v3228 = vadd.f32 %v2972, 1e-05
  %v3229 = vadd.f32 %v2973, 1e-05
  %v3230 = vadd.f32 %v2974, 1e-05
  %v3231 = vadd.f32 %v2975, 1e-05
  %v3232 = vadd.f32 %v2976, 1e-05
  %v3233 = vadd.f32 %v2977, 1e-05
  %v3234 = vadd.f32 %v2978, 1e-05
  %v3235 = vadd.f32 %v2979, 1e-05
  %v3236 = vadd.f32 %v2980, 1e-05
  %v3237 = vadd.f32 %v2981, 1e-05
  %v3238 = vadd.f32 %v2982, 1e-05
  %v3239 = vadd.f32 %v2983, 1e-05
  %v3240 = vadd.f32 %v2984, 1e-05
  %v3241 = vadd.f32 %v2985, 1e-05
  %v3242 = vadd.f32 %v2986, 1e-05
  %v3243 = vadd.f32 %v2987, 1e-05
  %v3244 = vadd.f32 %v2988, 1e-05
  %v3245 = vadd.f32 %v2989, 1e-05
  %v3246 = vadd.f32 %v2990, 1e-05
  %v3247 = vadd.f32 %v2991, 1e-05
  %v3248 = vadd.f32 %v2992, 1e-05
  %v3249 = vadd.f32 %v2993, 1e-05
  %v3250 = vadd.f32 %v2994, 1e-05
  %v3251 = vadd.f32 %v2995, 1e-05
  %v3252 = vadd.f32 %v2996, 1e-05
  %v3253 = vadd.f32 %v2997, 1e-05
  %v3254 = vadd.f32 %v2998, 1e-05
  %v3255 = vadd.f32 %v2999, 1e-05
  %v3256 = vadd.f32 %v3000, 1e-05
  %v3257 = vadd.f32 %v3001, 1e-05
  %v3258 = vadd.f32 %v3002, 1e-05
  %v3259 = vadd.f32 %v3003, 1e-05
  %v3260 = vadd.f32 %v3004, 1e-05
  %v3261 = vadd.f32 %v3005, 1e-05
  %v3262 = vadd.f32 %v3006, 1e-05
  %v3263 = vadd.f32 %v3007, 1e-05
  %v3264 = vadd.f32 %v3008, 1e-05
  %v3265 = vadd.f32 %v3009, 1e-05
  %v3266 = vadd.f32 %v3010, 1e-05
  %v3267 = vadd.f32 %v3011, 1e-05
  %v3268 = vadd.f32 %v3012, 1e-05
  %v3269 = vadd.f32 %v3013, 1e-05
  %v3270 = vadd.f32 %v3014, 1e-05
  %v3271 = vadd.f32 %v3015, 1e-05
  %v3272 = vadd.f32 %v3016, 1e-05
  %v3273 = vadd.f32 %v3017, 1e-05
  %v3274 = vadd.f32 %v3018, 1e-05
  %v3275 = vadd.f32 %v3019, 1e-05
  %v3276 = vadd.f32 %v3020, 1e-05
  %v3277 = vadd.f32 %v3021, 1e-05
  %v3278 = vadd.f32 %v3022, 1e-05
  %v3279 = vadd.f32 %v3023, 1e-05
  %v3280 = vadd.f32 %v3024, 1e-05
  %v3281 = vadd.f32 %v3025, 1e-05
  %v3282 = vadd.f32 %v3026, 1e-05
  %v3283 = vadd.f32 %v3027, 1e-05
  %v3284 = vadd.f32 %v3028, 1e-05
  %v3285 = vadd.f32 %v3029, 1e-05
  %v3286 = vadd.f32 %v3030, 1e-05
  %v3287 = vadd.f32 %v3031, 1e-05
  %v3288 = vadd.f32 %v3032, 1e-05
  %v3289 = vadd.f32 %v3033, 1e-05
  %v3290 = vadd.f32 %v3034, 1e-05
  %v3291 = vrsqrt.pop %v3163
  %v3292 = vrsqrt.pop %v3164
  %v3293 = vrsqrt.pop %v3165
  %v3294 = vrsqrt.pop %v3166
  %v3295 = vrsqrt.pop %v3167
  %v3296 = vrsqrt.pop %v3168
  %v3297 = vrsqrt.pop %v3169
  %v3298 = vrsqrt.pop %v3170
  %v3299 = vrsqrt.pop %v3171
  %v3300 = vrsqrt.pop %v3172
  %v3301 = vrsqrt.pop %v3173
  %v3302 = vrsqrt.pop %v3174
  %v3303 = vrsqrt.pop %v3175
  %v3304 = vrsqrt.pop %v3176
  %v3305 = vrsqrt.pop %v3177
  %v3306 = vrsqrt.pop %v3178
  %v3307 = vrsqrt.pop %v3179
  %v3308 = vrsqrt.pop %v3180
  %v3309 = vrsqrt.pop %v3181
  %v3310 = vrsqrt.pop %v3182
  %v3311 = vrsqrt.pop %v3183
  %v3312 = vrsqrt.pop %v3184
  %v3313 = vrsqrt.pop %v3185
  %v3314 = vrsqrt.pop %v3186
  %v3315 = vrsqrt.pop %v3187
  %v3316 = vrsqrt.pop %v3188
  %v3317 = vrsqrt.pop %v3189
  %v3318 = vrsqrt.pop %v3190
  %v3319 = vrsqrt.pop %v3191
  %v3320 = vrsqrt.pop %v3192
  %v3321 = vrsqrt.pop %v3193
  %v3322 = vrsqrt.pop %v3194
  %v3323 = vrsqrt.pop %v3195
  %v3324 = vrsqrt.pop %v3196
  %v3325 = vrsqrt.pop %v3197
  %v3326 = vrsqrt.pop %v3198
  %v3327 = vrsqrt.pop %v3199
  %v3328 = vrsqrt.pop %v3200
  %v3329 = vrsqrt.pop %v3201
  %v3330 = vrsqrt.pop %v3202
  %v3331 = vrsqrt.pop %v3203
  %v3332 = vrsqrt.pop %v3204
  %v3333 = vrsqrt.pop %v3205
  %v3334 = vrsqrt.pop %v3206
  %v3335 = vrsqrt.pop %v3207
  %v3336 = vrsqrt.pop %v3208
  %v3337 = vrsqrt.pop %v3209
  %v3338 = vrsqrt.pop %v3210
  %v3339 = vrsqrt.pop %v3211
  %v3340 = vrsqrt.pop %v3212
  %v3341 = vrsqrt.pop %v3213
  %v3342 = vrsqrt.pop %v3214
  %v3343 = vrsqrt.pop %v3215
  %v3344 = vrsqrt.pop %v3216
  %v3345 = vrsqrt.pop %v3217
  %v3346 = vrsqrt.pop %v3218
  %v3347 = vrsqrt.pop %v3219
  %v3348 = vrsqrt.pop %v3220
  %v3349 = vrsqrt.pop %v3221
  %v3350 = vrsqrt.pop %v3222
  %v3351 = vrsqrt.pop %v3223
  %v3352 = vrsqrt.pop %v3224
  %v3353 = vrsqrt.pop %v3225
  %v3354 = vrsqrt.pop %v3226
  %v3355 = vrsqrt.pop %v3227
  %v3356 = vrsqrt.pop %v3228
  %v3357 = vrsqrt.pop %v3229
  %v3358 = vrsqrt.pop %v3230
  %v3359 = vrsqrt.pop %v3231
  %v3360 = vrsqrt.pop %v3232
  %v3361 = vrsqrt.pop %v3233
  %v3362 = vrsqrt.pop %v3234
  %v3363 = vrsqrt.pop %v3235
  %v3364 = vrsqrt.pop %v3236
  %v3365 = vrsqrt.pop %v3237
  %v3366 = vrsqrt.pop %v3238
  %v3367 = vrsqrt.pop %v3239
  %v3368 = vrsqrt.pop %v3240
  %v3369 = vrsqrt.pop %v3241
  %v3370 = vrsqrt.pop %v3242
  %v3371 = vrsqrt.pop %v3243
  %v3372 = vrsqrt.pop %v3244
  %v3373 = vrsqrt.pop %v3245
  %v3374 = vrsqrt.pop %v3246
  %v3375 = vrsqrt.pop %v3247
  %v3376 = vrsqrt.pop %v3248
  %v3377 = vrsqrt.pop %v3249
  %v3378 = vrsqrt.pop %v3250
  %v3379 = vrsqrt.pop %v3251
  %v3380 = vrsqrt.pop %v3252
  %v3381 = vrsqrt.pop %v3253
  %v3382 = vrsqrt.pop %v3254
  %v3383 = vrsqrt.pop %v3255
  %v3384 = vrsqrt.pop %v3256
  %v3385 = vrsqrt.pop %v3257
  %v3386 = vrsqrt.pop %v3258
  %v3387 = vrsqrt.pop %v3259
  %v3388 = vrsqrt.pop %v3260
  %v3389 = vrsqrt.pop %v3261
  %v3390 = vrsqrt.pop %v3262
  %v3391 = vrsqrt.pop %v3263
  %v3392 = vrsqrt.pop %v3264
  %v3393 = vrsqrt.pop %v3265
  %v3394 = vrsqrt.pop %v3266
  %v3395 = vrsqrt.pop %v3267
  %v3396 = vrsqrt.pop %v3268
  %v3397 = vrsqrt.pop %v3269
  %v3398 = vrsqrt.pop %v3270
  %v3399 = vrsqrt.pop %v3271
  %v3400 = vrsqrt.pop %v3272
  %v3401 = vrsqrt.pop %v3273
  %v3402 = vrsqrt.pop %v3274
  %v3403 = vrsqrt.pop %v3275
  %v3404 = vrsqrt.pop %v3276
  %v3405 = vrsqrt.pop %v3277
  %v3406 = vrsqrt.pop %v3278
  %v3407 = vrsqrt.pop %v3279
  %v3408 = vrsqrt.pop %v3280
  %v3409 = vrsqrt.pop %v3281
  %v3410 = vrsqrt.pop %v3282
  %v3411 = vrsqrt.pop %v3283
  %v3412 = vrsqrt.pop %v3284
  %v3413 = vrsqrt.pop %v3285
  %v3414 = vrsqrt.pop %v3286
  %v3415 = vrsqrt.pop %v3287
  %v3416 = vrsqrt.pop %v3288
  %v3417 = vrsqrt.pop %v3289
  %v3418 = vrsqrt.pop %v3290
  %v3419 = vmul.f32 %v3035, %v3291
  %v3420 = vmul.f32 %v3036, %v3292
  %v3421 = vmul.f32 %v3037, %v3293
  %v3422 = vmul.f32 %v3038, %v3294
  %v3423 = vmul.f32 %v3039, %v3295
  %v3424 = vmul.f32 %v3040, %v3296
  %v3425 = vmul.f32 %v3041, %v3297
  %v3426 = vmul.f32 %v3042, %v3298
  %v3427 = vmul.f32 %v3043, %v3299
  %v3428 = vmul.f32 %v3044, %v3300
  %v3429 = vmul.f32 %v3045, %v3301
  %v3430 = vmul.f32 %v3046, %v3302
  %v3431 = vmul.f32 %v3047, %v3303
  %v3432 = vmul.f32 %v3048, %v3304
  %v3433 = vmul.f32 %v3049, %v3305
  %v3434 = vmul.f32 %v3050, %v3306
  %v3435 = vmul.f32 %v3051, %v3307
  %v3436 = vmul.f32 %v3052, %v3308
  %v3437 = vmul.f32 %v3053, %v3309
  %v3438 = vmul.f32 %v3054, %v3310
  %v3439 = vmul.f32 %v3055, %v3311
  %v3440 = vmul.f32 %v3056, %v3312
  %v3441 = vmul.f32 %v3057, %v3313
  %v3442 = vmul.f32 %v3058, %v3314
  %v3443 = vmul.f32 %v3059, %v3315
  %v3444 = vmul.f32 %v3060, %v3316
  %v3445 = vmul.f32 %v3061, %v3317
  %v3446 = vmul.f32 %v3062, %v3318
  %v3447 = vmul.f32 %v3063, %v3319
  %v3448 = vmul.f32 %v3064, %v3320
  %v3449 = vmul.f32 %v3065, %v3321
  %v3450 = vmul.f32 %v3066, %v3322
  %v3451 = vmul.f32 %v3067, %v3323
  %v3452 = vmul.f32 %v3068, %v3324
  %v3453 = vmul.f32 %v3069, %v3325
  %v3454 = vmul.f32 %v3070, %v3326
  %v3455 = vmul.f32 %v3071, %v3327
  %v3456 = vmul.f32 %v3072, %v3328
  %v3457 = vmul.f32 %v3073, %v3329
  %v3458 = vmul.f32 %v3074, %v3330
  %v3459 = vmul.f32 %v3075, %v3331
  %v3460 = vmul.f32 %v3076, %v3332
  %v3461 = vmul.f32 %v3077, %v3333
  %v3462 = vmul.f32 %v3078, %v3334
  %v3463 = vmul.f32 %v3079, %v3335
  %v3464 = vmul.f32 %v3080, %v3336
  %v3465 = vmul.f32 %v3081, %v3337
  %v3466 = vmul.f32 %v3082, %v3338
  %v3467 = vmul.f32 %v3083, %v3339
  %v3468 = vmul.f32 %v3084, %v3340
  %v3469 = vmul.f32 %v3085, %v3341
  %v3470 = vmul.f32 %v3086, %v3342
  %v3471 = vmul.f32 %v3087, %v3343
  %v3472 = vmul.f32 %v3088, %v3344
  %v3473 = vmul.f32 %v3089, %v3345
  %v3474 = vmul.f32 %v3090, %v3346
  %v3475 = vmul.f32 %v3091, %v3347
  %v3476 = vmul.f32 %v3092, %v3348
  %v3477 = vmul.f32 %v3093, %v3349
  %v3478 = vmul.f32 %v3094, %v3350
  %v3479 = vmul.f32 %v3095, %v3351
  %v3480 = vmul.f32 %v3096, %v3352
  %v3481 = vmul.f32 %v3097, %v3353
  %v3482 = vmul.f32 %v3098, %v3354
  %v3483 = vmul.f32 %v3099, %v3355
  %v3484 = vmul.f32 %v3100, %v3356
  %v3485 = vmul.f32 %v3101, %v3357
  %v3486 = vmul.f32 %v3102, %v3358
  %v3487 = vmul.f32 %v3103, %v3359
  %v3488 = vmul.f32 %v3104, %v3360
  %v3489 = vmul.f32 %v3105, %v3361
  %v3490 = vmul.f32 %v3106, %v3362
  %v3491 = vmul.f32 %v3107, %v3363
  %v3492 = vmul.f32 %v3108, %v3364
  %v3493 = vmul.f32 %v3109, %v3365
  %v3494 = vmul.f32 %v3110, %v3366
  %v3495 = vmul.f32 %v3111, %v3367
  %v3496 = vmul.f32 %v3112, %v3368
  %v3497 = vmul.f32 %v3113, %v3369
  %v3498 = vmul.f32 %v3114, %v3370
  %v3499 = vmul.f32 %v3115, %v3371
  %v3500 = vmul.f32 %v3116, %v3372
  %v3501 = vmul.f32 %v3117, %v3373
  %v3502 = vmul.f32 %v3118, %v3374
  %v3503 = vmul.f32 %v3119, %v3375
  %v3504 = vmul.f32 %v3120, %v3376
  %v3505 = vmul.f32 %v3121, %v3377
  %v3506 = vmul.f32 %v3122, %v3378
  %v3507 = vmul.f32 %v3123, %v3379
  %v3508 = vmul.f32 %v3124, %v3380
  %v3509 = vmul.f32 %v3125, %v3381
  %v3510 = vmul.f32 %v3126, %v3382
  %v3511 = vmul.f32 %v3127, %v3383
  %v3512 = vmul.f32 %v3128, %v3384
  %v3513 = vmul.f32 %v3129, %v3385
  %v3514 = vmul.f32 %v3130, %v3386
  %v3515 = vmul.f32 %v3131, %v3387
  %v3516 = vmul.f32 %v3132, %v3388
  %v3517 = vmul.f32 %v3133, %v3389
  %v3518 = vmul.f32 %v3134, %v3390
  %v3519 = vmul.f32 %v3135, %v3391
  %v3520 = vmul.f32 %v3136, %v3392
  %v3521 = vmul.f32 %v3137, %v3393
  %v3522 = vmul.f32 %v3138, %v3394
  %v3523 = vmul.f32 %v3139, %v3395
  %v3524 = vmul.f32 %v3140, %v3396
  %v3525 = vmul.f32 %v3141, %v3397
  %v3526 = vmul.f32 %v3142, %v3398
  %v3527 = vmul.f32 %v3143, %v3399
  %v3528 = vmul.f32 %v3144, %v3400
  %v3529 = vmul.f32 %v3145, %v3401
  %v3530 = vmul.f32 %v3146, %v3402
  %v3531 = vmul.f32 %v3147, %v3403
  %v3532 = vmul.f32 %v3148, %v3404
  %v3533 = vmul.f32 %v3149, %v3405
  %v3534 = vmul.f32 %v3150, %v3406
  %v3535 = vmul.f32 %v3151, %v3407
  %v3536 = vmul.f32 %v3152, %v3408
  %v3537 = vmul.f32 %v3153, %v3409
  %v3538 = vmul.f32 %v3154, %v3410
  %v3539 = vmul.f32 %v3155, %v3411
  %v3540 = vmul.f32 %v3156, %v3412
  %v3541 = vmul.f32 %v3157, %v3413
  %v3542 = vmul.f32 %v3158, %v3414
  %v3543 = vmul.f32 %v3159, %v3415
  %v3544 = vmul.f32 %v3160, %v3416
  %v3545 = vmul.f32 %v3161, %v3417
  %v3546 = vmul.f32 %v3162, %v3418
  %v3547 = vld [vmem:[%s3] sm:$0xff]
  %v3548 = vld [vmem:[%s3 + $0x8] sm:$0xff]
  %v3549 = vld [vmem:[%s3 + $0x10] sm:$0xff]
  %v3550 = vld [vmem:[%s3 + $0x18] sm:$0xff]
  %v3551 = vld [vmem:[%s3 + $0x20] sm:$0xff]
  %v3552 = vld [vmem:[%s3 + $0x28] sm:$0xff]
  %v3553 = vld [vmem:[%s3 + $0x30] sm:$0xff]
  %v3554 = vld [vmem:[%s3 + $0x38] sm:$0xff]
  %v3555 = vld [vmem:[%s3 + $0x40] sm:$0xff]
  %v3556 = vld [vmem:[%s3 + $0x48] sm:$0xff]
  %v3557 = vld [vmem:[%s3 + $0x50] sm:$0xff]
  %v3558 = vld [vmem:[%s3 + $0x58] sm:$0xff]
  %v3559 = vld [vmem:[%s3 + $0x60] sm:$0xff]
  %v3560 = vld [vmem:[%s3 + $0x68] sm:$0xff]
  %v3561 = vld [vmem:[%s3 + $0x70] sm:$0xff]
  %v3562 = vld [vmem:[%s3 + $0x78] sm:$0xff]
  %v3563 = vld [vmem:[%s3 + $0x80] sm:$0xff]
  %v3564 = vld [vmem:[%s3 + $0x88] sm:$0xff]
  %v3565 = vld [vmem:[%s3 + $0x90] sm:$0xff]
  %v3566 = vld [vmem:[%s3 + $0x98] sm:$0xff]
  %v3567 = vld [vmem:[%s3 + $0xa0] sm:$0xff]
  %v3568 = vld [vmem:[%s3 + $0xa8] sm:$0xff]
  %v3569 = vld [vmem:[%s3 + $0xb0] sm:$0xff]
  %v3570 = vld [vmem:[%s3 + $0xb8] sm:$0xff]
  %v3571 = vld [vmem:[%s3 + $0xc0] sm:$0xff]
  %v3572 = vld [vmem:[%s3 + $0xc8] sm:$0xff]
  %v3573 = vld [vmem:[%s3 + $0xd0] sm:$0xff]
  %v3574 = vld [vmem:[%s3 + $0xd8] sm:$0xff]
  %v3575 = vld [vmem:[%s3 + $0xe0] sm:$0xff]
  %v3576 = vld [vmem:[%s3 + $0xe8] sm:$0xff]
  %v3577 = vld [vmem:[%s3 + $0xf0] sm:$0xff]
  %v3578 = vld [vmem:[%s3 + $0xf8] sm:$0xff]
  %v3579 = vld [vmem:[%s3 + $0x100] sm:$0xff]
  %v3580 = vld [vmem:[%s3 + $0x108] sm:$0xff]
  %v3581 = vld [vmem:[%s3 + $0x110] sm:$0xff]
  %v3582 = vld [vmem:[%s3 + $0x118] sm:$0xff]
  %v3583 = vld [vmem:[%s3 + $0x120] sm:$0xff]
  %v3584 = vld [vmem:[%s3 + $0x128] sm:$0xff]
  %v3585 = vld [vmem:[%s3 + $0x130] sm:$0xff]
  %v3586 = vld [vmem:[%s3 + $0x138] sm:$0xff]
  %v3587 = vld [vmem:[%s3 + $0x140] sm:$0xff]
  %v3588 = vld [vmem:[%s3 + $0x148] sm:$0xff]
  %v3589 = vld [vmem:[%s3 + $0x150] sm:$0xff]
  %v3590 = vld [vmem:[%s3 + $0x158] sm:$0xff]
  %v3591 = vld [vmem:[%s3 + $0x160] sm:$0xff]
  %v3592 = vld [vmem:[%s3 + $0x168] sm:$0xff]
  %v3593 = vld [vmem:[%s3 + $0x170] sm:$0xff]
  %v3594 = vld [vmem:[%s3 + $0x178] sm:$0xff]
  %v3595 = vld [vmem:[%s3 + $0x180] sm:$0xff]
  %v3596 = vld [vmem:[%s3 + $0x188] sm:$0xff]
  %v3597 = vld [vmem:[%s3 + $0x190] sm:$0xff]
  %v3598 = vld [vmem:[%s3 + $0x198] sm:$0xff]
  %v3599 = vld [vmem:[%s3 + $0x1a0] sm:$0xff]
  %v3600 = vld [vmem:[%s3 + $0x1a8] sm:$0xff]
  %v3601 = vld [vmem:[%s3 + $0x1b0] sm:$0xff]
  %v3602 = vld [vmem:[%s3 + $0x1b8] sm:$0xff]
  %v3603 = vld [vmem:[%s3 + $0x1c0] sm:$0xff]
  %v3604 = vld [vmem:[%s3 + $0x1c8] sm:$0xff]
  %v3605 = vld [vmem:[%s3 + $0x1d0] sm:$0xff]
  %v3606 = vld [vmem:[%s3 + $0x1d8] sm:$0xff]
  %v3607 = vld [vmem:[%s3 + $0x1e0] sm:$0xff]
  %v3608 = vld [vmem:[%s3 + $0x1e8] sm:$0xff]
  %v3609 = vld [vmem:[%s3 + $0x1f0] sm:$0xff]
  %v3610 = vld [vmem:[%s3 + $0x1f8] sm:$0xff]
  %v3611 = vld [vmem:[%s3 + $0x200] sm:$0xff]
  %v3612 = vld [vmem:[%s3 + $0x208] sm:$0xff]
  %v3613 = vld [vmem:[%s3 + $0x210] sm:$0xff]
  %v3614 = vld [vmem:[%s3 + $0x218] sm:$0xff]
  %v3615 = vld [vmem:[%s3 + $0x220] sm:$0xff]
  %v3616 = vld [vmem:[%s3 + $0x228] sm:$0xff]
  %v3617 = vld [vmem:[%s3 + $0x230] sm:$0xff]
  %v3618 = vld [vmem:[%s3 + $0x238] sm:$0xff]
  %v3619 = vld [vmem:[%s3 + $0x240] sm:$0xff]
  %v3620 = vld [vmem:[%s3 + $0x248] sm:$0xff]
  %v3621 = vld [vmem:[%s3 + $0x250] sm:$0xff]
  %v3622 = vld [vmem:[%s3 + $0x258] sm:$0xff]
  %v3623 = vld [vmem:[%s3 + $0x260] sm:$0xff]
  %v3624 = vld [vmem:[%s3 + $0x268] sm:$0xff]
  %v3625 = vld [vmem:[%s3 + $0x270] sm:$0xff]
  %v3626 = vld [vmem:[%s3 + $0x278] sm:$0xff]
  %v3627 = vld [vmem:[%s3 + $0x280] sm:$0xff]
  %v3628 = vld [vmem:[%s3 + $0x288] sm:$0xff]
  %v3629 = vld [vmem:[%s3 + $0x290] sm:$0xff]
  %v3630 = vld [vmem:[%s3 + $0x298] sm:$0xff]
  %v3631 = vld [vmem:[%s3 + $0x2a0] sm:$0xff]
  %v3632 = vld [vmem:[%s3 + $0x2a8] sm:$0xff]
  %v3633 = vld [vmem:[%s3 + $0x2b0] sm:$0xff]
  %v3634 = vld [vmem:[%s3 + $0x2b8] sm:$0xff]
  %v3635 = vld [vmem:[%s3 + $0x2c0] sm:$0xff]
  %v3636 = vld [vmem:[%s3 + $0x2c8] sm:$0xff]
  %v3637 = vld [vmem:[%s3 + $0x2d0] sm:$0xff]
  %v3638 = vld [vmem:[%s3 + $0x2d8] sm:$0xff]
  %v3639 = vld [vmem:[%s3 + $0x2e0] sm:$0xff]
  %v3640 = vld [vmem:[%s3 + $0x2e8] sm:$0xff]
  %v3641 = vld [vmem:[%s3 + $0x2f0] sm:$0xff]
  %v3642 = vld [vmem:[%s3 + $0x2f8] sm:$0xff]
  %v3643 = vld [vmem:[%s3 + $0x300] sm:$0xff]
  %v3644 = vld [vmem:[%s3 + $0x308] sm:$0xff]
  %v3645 = vld [vmem:[%s3 + $0x310] sm:$0xff]
  %v3646 = vld [vmem:[%s3 + $0x318] sm:$0xff]
  %v3647 = vld [vmem:[%s3 + $0x320] sm:$0xff]
  %v3648 = vld [vmem:[%s3 + $0x328] sm:$0xff]
  %v3649 = vld [vmem:[%s3 + $0x330] sm:$0xff]
  %v3650 = vld [vmem:[%s3 + $0x338] sm:$0xff]
  %v3651 = vld [vmem:[%s3 + $0x340] sm:$0xff]
  %v3652 = vld [vmem:[%s3 + $0x348] sm:$0xff]
  %v3653 = vld [vmem:[%s3 + $0x350] sm:$0xff]
  %v3654 = vld [vmem:[%s3 + $0x358] sm:$0xff]
  %v3655 = vld [vmem:[%s3 + $0x360] sm:$0xff]
  %v3656 = vld [vmem:[%s3 + $0x368] sm:$0xff]
  %v3657 = vld [vmem:[%s3 + $0x370] sm:$0xff]
  %v3658 = vld [vmem:[%s3 + $0x378] sm:$0xff]
  %v3659 = vld [vmem:[%s3 + $0x380] sm:$0xff]
  %v3660 = vld [vmem:[%s3 + $0x388] sm:$0xff]
  %v3661 = vld [vmem:[%s3 + $0x390] sm:$0xff]
  %v3662 = vld [vmem:[%s3 + $0x398] sm:$0xff]
  %v3663 = vld [vmem:[%s3 + $0x3a0] sm:$0xff]
  %v3664 = vld [vmem:[%s3 + $0x3a8] sm:$0xff]
  %v3665 = vld [vmem:[%s3 + $0x3b0] sm:$0xff]
  %v3666 = vld [vmem:[%s3 + $0x3b8] sm:$0xff]
  %v3667 = vld [vmem:[%s3 + $0x3c0] sm:$0xff]
  %v3668 = vld [vmem:[%s3 + $0x3c8] sm:$0xff]
  %v3669 = vld [vmem:[%s3 + $0x3d0] sm:$0xff]
  %v3670 = vld [vmem:[%s3 + $0x3d8] sm:$0xff]
  %v3671 = vld [vmem:[%s3 + $0x3e0] sm:$0xff]
  %v3672 = vld [vmem:[%s3 + $0x3e8] sm:$0xff]
  %v3673 = vld [vmem:[%s3 + $0x3f0] sm:$0xff]
  %v3674 = vld [vmem:[%s3 + $0x3f8] sm:$0xff]
  %v3675 = vmul.f32 %v1618, %v3419
  %v3676 = vmul.f32 %v1619, %v3420
  %v3677 = vmul.f32 %v1620, %v3421
  %v3678 = vmul.f32 %v1621, %v3422
  %v3679 = vmul.f32 %v1622, %v3423
  %v3680 = vmul.f32 %v1623, %v3424
  %v3681 = vmul.f32 %v1624, %v3425
  %v3682 = vmul.f32 %v1625, %v3426
  %v3683 = vmul.f32 %v1626, %v3427
  %v3684 = vmul.f32 %v1627, %v3428
  %v3685 = vmul.f32 %v1628, %v3429
  %v3686 = vmul.f32 %v1629, %v3430
  %v3687 = vmul.f32 %v1630, %v3431
  %v3688 = vmul.f32 %v1631, %v3432
  %v3689 = vmul.f32 %v1632, %v3433
  %v3690 = vmul.f32 %v1633, %v3434
  %v3691 = vmul.f32 %v1634, %v3435
  %v3692 = vmul.f32 %v1635, %v3436
  %v3693 = vmul.f32 %v1636, %v3437
  %v3694 = vmul.f32 %v1637, %v3438
  %v3695 = vmul.f32 %v1638, %v3439
  %v3696 = vmul.f32 %v1639, %v3440
  %v3697 = vmul.f32 %v1640, %v3441
  %v3698 = vmul.f32 %v1641, %v3442
  %v3699 = vmul.f32 %v1642, %v3443
  %v3700 = vmul.f32 %v1643, %v3444
  %v3701 = vmul.f32 %v1644, %v3445
  %v3702 = vmul.f32 %v1645, %v3446
  %v3703 = vmul.f32 %v1646, %v3447
  %v3704 = vmul.f32 %v1647, %v3448
  %v3705 = vmul.f32 %v1648, %v3449
  %v3706 = vmul.f32 %v1649, %v3450
  %v3707 = vmul.f32 %v1650, %v3451
  %v3708 = vmul.f32 %v1651, %v3452
  %v3709 = vmul.f32 %v1652, %v3453
  %v3710 = vmul.f32 %v1653, %v3454
  %v3711 = vmul.f32 %v1654, %v3455
  %v3712 = vmul.f32 %v1655, %v3456
  %v3713 = vmul.f32 %v1656, %v3457
  %v3714 = vmul.f32 %v1657, %v3458
  %v3715 = vmul.f32 %v1658, %v3459
  %v3716 = vmul.f32 %v1659, %v3460
  %v3717 = vmul.f32 %v1660, %v3461
  %v3718 = vmul.f32 %v1661, %v3462
  %v3719 = vmul.f32 %v1662, %v3463
  %v3720 = vmul.f32 %v1663, %v3464
  %v3721 = vmul.f32 %v1664, %v3465
  %v3722 = vmul.f32 %v1665, %v3466
  %v3723 = vmul.f32 %v1666, %v3467
  %v3724 = vmul.f32 %v1667, %v3468
  %v3725 = vmul.f32 %v1668, %v3469
  %v3726 = vmul.f32 %v1669, %v3470
  %v3727 = vmul.f32 %v1670, %v3471
  %v3728 = vmul.f32 %v1671, %v3472
  %v3729 = vmul.f32 %v1672, %v3473
  %v3730 = vmul.f32 %v1673, %v3474
  %v3731 = vmul.f32 %v1674, %v3475
  %v3732 = vmul.f32 %v1675, %v3476
  %v3733 = vmul.f32 %v1676, %v3477
  %v3734 = vmul.f32 %v1677, %v3478
  %v3735 = vmul.f32 %v1678, %v3479
  %v3736 = vmul.f32 %v1679, %v3480
  %v3737 = vmul.f32 %v1680, %v3481
  %v3738 = vmul.f32 %v1681, %v3482
  %v3739 = vmul.f32 %v1682, %v3483
  %v3740 = vmul.f32 %v1683, %v3484
  %v3741 = vmul.f32 %v1684, %v3485
  %v3742 = vmul.f32 %v1685, %v3486
  %v3743 = vmul.f32 %v1686, %v3487
  %v3744 = vmul.f32 %v1687, %v3488
  %v3745 = vmul.f32 %v1688, %v3489
  %v3746 = vmul.f32 %v1689, %v3490
  %v3747 = vmul.f32 %v1690, %v3491
  %v3748 = vmul.f32 %v1691, %v3492
  %v3749 = vmul.f32 %v1692, %v3493
  %v3750 = vmul.f32 %v1693, %v3494
  %v3751 = vmul.f32 %v1694, %v3495
  %v3752 = vmul.f32 %v1695, %v3496
  %v3753 = vmul.f32 %v1696, %v3497
  %v3754 = vmul.f32 %v1697, %v3498
  %v3755 = vmul.f32 %v1698, %v3499
  %v3756 = vmul.f32 %v1699, %v3500
  %v3757 = vmul.f32 %v1700, %v3501
  %v3758 = vmul.f32 %v1701, %v3502
  %v3759 = vmul.f32 %v1702, %v3503
  %v3760 = vmul.f32 %v1703, %v3504
  %v3761 = vmul.f32 %v1704, %v3505
  %v3762 = vmul.f32 %v1705, %v3506
  %v3763 = vmul.f32 %v1706, %v3507
  %v3764 = vmul.f32 %v1707, %v3508
  %v3765 = vmul.f32 %v1708, %v3509
  %v3766 = vmul.f32 %v1709, %v3510
  %v3767 = vmul.f32 %v1710, %v3511
  %v3768 = vmul.f32 %v1711, %v3512
  %v3769 = vmul.f32 %v1712, %v3513
  %v3770 = vmul.f32 %v1713, %v3514
  %v3771 = vmul.f32 %v1714, %v3515
  %v3772 = vmul.f32 %v1715, %v3516
  %v3773 = vmul.f32 %v1716, %v3517
  %v3774 = vmul.f32 %v1717, %v3518
  %v3775 = vmul.f32 %v1718, %v3519
  %v3776 = vmul.f32 %v1719, %v3520
  %v3777 = vmul.f32 %v1720, %v3521
  %v3778 = vmul.f32 %v1721, %v3522
  %v3779 = vmul.f32 %v1722, %v3523
  %v3780 = vmul.f32 %v1723, %v3524
  %v3781 = vmul.f32 %v1724, %v3525
  %v3782 = vmul.f32 %v1725, %v3526
  %v3783 = vmul.f32 %v1726, %v3527
  %v3784 = vmul.f32 %v1727, %v3528
  %v3785 = vmul.f32 %v1728, %v3529
  %v3786 = vmul.f32 %v1729, %v3530
  %v3787 = vmul.f32 %v1730, %v3531
  %v3788 = vmul.f32 %v1731, %v3532
  %v3789 = vmul.f32 %v1732, %v3533
  %v3790 = vmul.f32 %v1733, %v3534
  %v3791 = vmul.f32 %v1734, %v3535
  %v3792 = vmul.f32 %v1735, %v3536
  %v3793 = vmul.f32 %v1736, %v3537
  %v3794 = vmul.f32 %v1737, %v3538
  %v3795 = vmul.f32 %v1738, %v3539
  %v3796 = vmul.f32 %v1739, %v3540
  %v3797 = vmul.f32 %v1740, %v3541
  %v3798 = vmul.f32 %v1741, %v3542
  %v3799 = vmul.f32 %v1742, %v3543
  %v3800 = vmul.f32 %v1743, %v3544
  %v3801 = vmul.f32 %v1744, %v3545
  %v3802 = vmul.f32 %v1745, %v3546
  %v3803 = vsub.f32 %v3547, %v3675
  %v3804 = vsub.f32 %v3548, %v3676
  %v3805 = vsub.f32 %v3549, %v3677
  %v3806 = vsub.f32 %v3550, %v3678
  %v3807 = vsub.f32 %v3551, %v3679
  %v3808 = vsub.f32 %v3552, %v3680
  %v3809 = vsub.f32 %v3553, %v3681
  %v3810 = vsub.f32 %v3554, %v3682
  %v3811 = vsub.f32 %v3555, %v3683
  %v3812 = vsub.f32 %v3556, %v3684
  %v3813 = vsub.f32 %v3557, %v3685
  %v3814 = vsub.f32 %v3558, %v3686
  %v3815 = vsub.f32 %v3559, %v3687
  %v3816 = vsub.f32 %v3560, %v3688
  %v3817 = vsub.f32 %v3561, %v3689
  %v3818 = vsub.f32 %v3562, %v3690
  %v3819 = vsub.f32 %v3563, %v3691
  %v3820 = vsub.f32 %v3564, %v3692
  %v3821 = vsub.f32 %v3565, %v3693
  %v3822 = vsub.f32 %v3566, %v3694
  %v3823 = vsub.f32 %v3567, %v3695
  %v3824 = vsub.f32 %v3568, %v3696
  %v3825 = vsub.f32 %v3569, %v3697
  %v3826 = vsub.f32 %v3570, %v3698
  %v3827 = vsub.f32 %v3571, %v3699
  %v3828 = vsub.f32 %v3572, %v3700
  %v3829 = vsub.f32 %v3573, %v3701
  %v3830 = vsub.f32 %v3574, %v3702
  %v3831 = vsub.f32 %v3575, %v3703
  %v3832 = vsub.f32 %v3576, %v3704
  %v3833 = vsub.f32 %v3577, %v3705
  %v3834 = vsub.f32 %v3578, %v3706
  %v3835 = vsub.f32 %v3579, %v3707
  %v3836 = vsub.f32 %v3580, %v3708
  %v3837 = vsub.f32 %v3581, %v3709
  %v3838 = vsub.f32 %v3582, %v3710
  %v3839 = vsub.f32 %v3583, %v3711
  %v3840 = vsub.f32 %v3584, %v3712
  %v3841 = vsub.f32 %v3585, %v3713
  %v3842 = vsub.f32 %v3586, %v3714
  %v3843 = vsub.f32 %v3587, %v3715
  %v3844 = vsub.f32 %v3588, %v3716
  %v3845 = vsub.f32 %v3589, %v3717
  %v3846 = vsub.f32 %v3590, %v3718
  %v3847 = vsub.f32 %v3591, %v3719
  %v3848 = vsub.f32 %v3592, %v3720
  %v3849 = vsub.f32 %v3593, %v3721
  %v3850 = vsub.f32 %v3594, %v3722
  %v3851 = vsub.f32 %v3595, %v3723
  %v3852 = vsub.f32 %v3596, %v3724
  %v3853 = vsub.f32 %v3597, %v3725
  %v3854 = vsub.f32 %v3598, %v3726
  %v3855 = vsub.f32 %v3599, %v3727
  %v3856 = vsub.f32 %v3600, %v3728
  %v3857 = vsub.f32 %v3601, %v3729
  %v3858 = vsub.f32 %v3602, %v3730
  %v3859 = vsub.f32 %v3603, %v3731
  %v3860 = vsub.f32 %v3604, %v3732
  %v3861 = vsub.f32 %v3605, %v3733
  %v3862 = vsub.f32 %v3606, %v3734
  %v3863 = vsub.f32 %v3607, %v3735
  %v3864 = vsub.f32 %v3608, %v3736
  %v3865 = vsub.f32 %v3609, %v3737
  %v3866 = vsub.f32 %v3610, %v3738
  %v3867 = vsub.f32 %v3611, %v3739
  %v3868 = vsub.f32 %v3612, %v3740
  %v3869 = vsub.f32 %v3613, %v3741
  %v3870 = vsub.f32 %v3614, %v3742
  %v3871 = vsub.f32 %v3615, %v3743
  %v3872 = vsub.f32 %v3616, %v3744
  %v3873 = vsub.f32 %v3617, %v3745
  %v3874 = vsub.f32 %v3618, %v3746
  %v3875 = vsub.f32 %v3619, %v3747
  %v3876 = vsub.f32 %v3620, %v3748
  %v3877 = vsub.f32 %v3621, %v3749
  %v3878 = vsub.f32 %v3622, %v3750
  %v3879 = vsub.f32 %v3623, %v3751
  %v3880 = vsub.f32 %v3624, %v3752
  %v3881 = vsub.f32 %v3625, %v3753
  %v3882 = vsub.f32 %v3626, %v3754
  %v3883 = vsub.f32 %v3627, %v3755
  %v3884 = vsub.f32 %v3628, %v3756
  %v3885 = vsub.f32 %v3629, %v3757
  %v3886 = vsub.f32 %v3630, %v3758
  %v3887 = vsub.f32 %v3631, %v3759
  %v3888 = vsub.f32 %v3632, %v3760
  %v3889 = vsub.f32 %v3633, %v3761
  %v3890 = vsub.f32 %v3634, %v3762
  %v3891 = vsub.f32 %v3635, %v3763
  %v3892 = vsub.f32 %v3636, %v3764
  %v3893 = vsub.f32 %v3637, %v3765
  %v3894 = vsub.f32 %v3638, %v3766
  %v3895 = vsub.f32 %v3639, %v3767
  %v3896 = vsub.f32 %v3640, %v3768
  %v3897 = vsub.f32 %v3641, %v3769
  %v3898 = vsub.f32 %v3642, %v3770
  %v3899 = vsub.f32 %v3643, %v3771
  %v3900 = vsub.f32 %v3644, %v3772
  %v3901 = vsub.f32 %v3645, %v3773
  %v3902 = vsub.f32 %v3646, %v3774
  %v3903 = vsub.f32 %v3647, %v3775
  %v3904 = vsub.f32 %v3648, %v3776
  %v3905 = vsub.f32 %v3649, %v3777
  %v3906 = vsub.f32 %v3650, %v3778
  %v3907 = vsub.f32 %v3651, %v3779
  %v3908 = vsub.f32 %v3652, %v3780
  %v3909 = vsub.f32 %v3653, %v3781
  %v3910 = vsub.f32 %v3654, %v3782
  %v3911 = vsub.f32 %v3655, %v3783
  %v3912 = vsub.f32 %v3656, %v3784
  %v3913 = vsub.f32 %v3657, %v3785
  %v3914 = vsub.f32 %v3658, %v3786
  %v3915 = vsub.f32 %v3659, %v3787
  %v3916 = vsub.f32 %v3660, %v3788
  %v3917 = vsub.f32 %v3661, %v3789
  %v3918 = vsub.f32 %v3662, %v3790
  %v3919 = vsub.f32 %v3663, %v3791
  %v3920 = vsub.f32 %v3664, %v3792
  %v3921 = vsub.f32 %v3665, %v3793
  %v3922 = vsub.f32 %v3666, %v3794
  %v3923 = vsub.f32 %v3667, %v3795
  %v3924 = vsub.f32 %v3668, %v3796
  %v3925 = vsub.f32 %v3669, %v3797
  %v3926 = vsub.f32 %v3670, %v3798
  %v3927 = vsub.f32 %v3671, %v3799
  %v3928 = vsub.f32 %v3672, %v3800
  %v3929 = vsub.f32 %v3673, %v3801
  %v3930 = vsub.f32 %v3674, %v3802
  %3932 = vset.pattern.permute.xlu0 0
  %3933 = vperm.xlu0 %3932, %v3419
  %v3934 = vpop.permute.xlu0 %3933
  %3937 = vset.pattern.permute.xlu0 0
  %3938 = vperm.xlu0 %3937, %v3420
  %v3939 = vpop.permute.xlu0 %3938
  %3942 = vset.pattern.permute.xlu0 0
  %3943 = vperm.xlu0 %3942, %v3421
  %v3944 = vpop.permute.xlu0 %3943
  %3947 = vset.pattern.permute.xlu0 0
  %3948 = vperm.xlu0 %3947, %v3422
  %v3949 = vpop.permute.xlu0 %3948
  %3952 = vset.pattern.permute.xlu0 0
  %3953 = vperm.xlu0 %3952, %v3423
  %v3954 = vpop.permute.xlu0 %3953
  %3957 = vset.pattern.permute.xlu0 0
  %3958 = vperm.xlu0 %3957, %v3424
  %v3959 = vpop.permute.xlu0 %3958
  %3962 = vset.pattern.permute.xlu0 0
  %3963 = vperm.xlu0 %3962, %v3425
  %v3964 = vpop.permute.xlu0 %3963
  %3967 = vset.pattern.permute.xlu0 0
  %3968 = vperm.xlu0 %3967, %v3426
  %v3969 = vpop.permute.xlu0 %3968
  %3972 = vset.pattern.permute.xlu0 0
  %3973 = vperm.xlu0 %3972, %v3427
  %v3974 = vpop.permute.xlu0 %3973
  %3977 = vset.pattern.permute.xlu0 0
  %3978 = vperm.xlu0 %3977, %v3428
  %v3979 = vpop.permute.xlu0 %3978
  %3982 = vset.pattern.permute.xlu0 0
  %3983 = vperm.xlu0 %3982, %v3429
  %v3984 = vpop.permute.xlu0 %3983
  %3987 = vset.pattern.permute.xlu0 0
  %3988 = vperm.xlu0 %3987, %v3430
  %v3989 = vpop.permute.xlu0 %3988
  %3992 = vset.pattern.permute.xlu0 0
  %3993 = vperm.xlu0 %3992, %v3431
  %v3994 = vpop.permute.xlu0 %3993
  %3997 = vset.pattern.permute.xlu0 0
  %3998 = vperm.xlu0 %3997, %v3432
  %v3999 = vpop.permute.xlu0 %3998
  %4002 = vset.pattern.permute.xlu0 0
  %4003 = vperm.xlu0 %4002, %v3433
  %v4004 = vpop.permute.xlu0 %4003
  %4007 = vset.pattern.permute.xlu0 0
  %4008 = vperm.xlu0 %4007, %v3434
  %v4009 = vpop.permute.xlu0 %4008
  %4012 = vset.pattern.permute.xlu0 0
  %4013 = vperm.xlu0 %4012, %v3435
  %v4014 = vpop.permute.xlu0 %4013
  %4017 = vset.pattern.permute.xlu0 0
  %4018 = vperm.xlu0 %4017, %v3436
  %v4019 = vpop.permute.xlu0 %4018
  %4022 = vset.pattern.permute.xlu0 0
  %4023 = vperm.xlu0 %4022, %v3437
  %v4024 = vpop.permute.xlu0 %4023
  %4027 = vset.pattern.permute.xlu0 0
  %4028 = vperm.xlu0 %4027, %v3438
  %v4029 = vpop.permute.xlu0 %4028
  %4032 = vset.pattern.permute.xlu0 0
  %4033 = vperm.xlu0 %4032, %v3439
  %v4034 = vpop.permute.xlu0 %4033
  %4037 = vset.pattern.permute.xlu0 0
  %4038 = vperm.xlu0 %4037, %v3440
  %v4039 = vpop.permute.xlu0 %4038
  %4042 = vset.pattern.permute.xlu0 0
  %4043 = vperm.xlu0 %4042, %v3441
  %v4044 = vpop.permute.xlu0 %4043
  %4047 = vset.pattern.permute.xlu0 0
  %4048 = vperm.xlu0 %4047, %v3442
  %v4049 = vpop.permute.xlu0 %4048
  %4052 = vset.pattern.permute.xlu0 0
  %4053 = vperm.xlu0 %4052, %v3443
  %v4054 = vpop.permute.xlu0 %4053
  %4057 = vset.pattern.permute.xlu0 0
  %4058 = vperm.xlu0 %4057, %v3444
  %v4059 = vpop.permute.xlu0 %4058
  %4062 = vset.pattern.permute.xlu0 0
  %4063 = vperm.xlu0 %4062, %v3445
  %v4064 = vpop.permute.xlu0 %4063
  %4067 = vset.pattern.permute.xlu0 0
  %4068 = vperm.xlu0 %4067, %v3446
  %v4069 = vpop.permute.xlu0 %4068
  %4072 = vset.pattern.permute.xlu0 0
  %4073 = vperm.xlu0 %4072, %v3447
  %v4074 = vpop.permute.xlu0 %4073
  %4077 = vset.pattern.permute.xlu0 0
  %4078 = vperm.xlu0 %4077, %v3448
  %v4079 = vpop.permute.xlu0 %4078
  %4082 = vset.pattern.permute.xlu0 0
  %4083 = vperm.xlu0 %4082, %v3449
  %v4084 = vpop.permute.xlu0 %4083
  %4087 = vset.pattern.permute.xlu0 0
  %4088 = vperm.xlu0 %4087, %v3450
  %v4089 = vpop.permute.xlu0 %4088
  %4092 = vset.pattern.permute.xlu0 0
  %4093 = vperm.xlu0 %4092, %v3451
  %v4094 = vpop.permute.xlu0 %4093
  %4097 = vset.pattern.permute.xlu0 0
  %4098 = vperm.xlu0 %4097, %v3452
  %v4099 = vpop.permute.xlu0 %4098
  %4102 = vset.pattern.permute.xlu0 0
  %4103 = vperm.xlu0 %4102, %v3453
  %v4104 = vpop.permute.xlu0 %4103
  %4107 = vset.pattern.permute.xlu0 0
  %4108 = vperm.xlu0 %4107, %v3454
  %v4109 = vpop.permute.xlu0 %4108
  %4112 = vset.pattern.permute.xlu0 0
  %4113 = vperm.xlu0 %4112, %v3455
  %v4114 = vpop.permute.xlu0 %4113
  %4117 = vset.pattern.permute.xlu0 0
  %4118 = vperm.xlu0 %4117, %v3456
  %v4119 = vpop.permute.xlu0 %4118
  %4122 = vset.pattern.permute.xlu0 0
  %4123 = vperm.xlu0 %4122, %v3457
  %v4124 = vpop.permute.xlu0 %4123
  %4127 = vset.pattern.permute.xlu0 0
  %4128 = vperm.xlu0 %4127, %v3458
  %v4129 = vpop.permute.xlu0 %4128
  %4132 = vset.pattern.permute.xlu0 0
  %4133 = vperm.xlu0 %4132, %v3459
  %v4134 = vpop.permute.xlu0 %4133
  %4137 = vset.pattern.permute.xlu0 0
  %4138 = vperm.xlu0 %4137, %v3460
  %v4139 = vpop.permute.xlu0 %4138
  %4142 = vset.pattern.permute.xlu0 0
  %4143 = vperm.xlu0 %4142, %v3461
  %v4144 = vpop.permute.xlu0 %4143
  %4147 = vset.pattern.permute.xlu0 0
  %4148 = vperm.xlu0 %4147, %v3462
  %v4149 = vpop.permute.xlu0 %4148
  %4152 = vset.pattern.permute.xlu0 0
  %4153 = vperm.xlu0 %4152, %v3463
  %v4154 = vpop.permute.xlu0 %4153
  %4157 = vset.pattern.permute.xlu0 0
  %4158 = vperm.xlu0 %4157, %v3464
  %v4159 = vpop.permute.xlu0 %4158
  %4162 = vset.pattern.permute.xlu0 0
  %4163 = vperm.xlu0 %4162, %v3465
  %v4164 = vpop.permute.xlu0 %4163
  %4167 = vset.pattern.permute.xlu0 0
  %4168 = vperm.xlu0 %4167, %v3466
  %v4169 = vpop.permute.xlu0 %4168
  %4172 = vset.pattern.permute.xlu0 0
  %4173 = vperm.xlu0 %4172, %v3467
  %v4174 = vpop.permute.xlu0 %4173
  %4177 = vset.pattern.permute.xlu0 0
  %4178 = vperm.xlu0 %4177, %v3468
  %v4179 = vpop.permute.xlu0 %4178
  %4182 = vset.pattern.permute.xlu0 0
  %4183 = vperm.xlu0 %4182, %v3469
  %v4184 = vpop.permute.xlu0 %4183
  %4187 = vset.pattern.permute.xlu0 0
  %4188 = vperm.xlu0 %4187, %v3470
  %v4189 = vpop.permute.xlu0 %4188
  %4192 = vset.pattern.permute.xlu0 0
  %4193 = vperm.xlu0 %4192, %v3471
  %v4194 = vpop.permute.xlu0 %4193
  %4197 = vset.pattern.permute.xlu0 0
  %4198 = vperm.xlu0 %4197, %v3472
  %v4199 = vpop.permute.xlu0 %4198
  %4202 = vset.pattern.permute.xlu0 0
  %4203 = vperm.xlu0 %4202, %v3473
  %v4204 = vpop.permute.xlu0 %4203
  %4207 = vset.pattern.permute.xlu0 0
  %4208 = vperm.xlu0 %4207, %v3474
  %v4209 = vpop.permute.xlu0 %4208
  %4212 = vset.pattern.permute.xlu0 0
  %4213 = vperm.xlu0 %4212, %v3475
  %v4214 = vpop.permute.xlu0 %4213
  %4217 = vset.pattern.permute.xlu0 0
  %4218 = vperm.xlu0 %4217, %v3476
  %v4219 = vpop.permute.xlu0 %4218
  %4222 = vset.pattern.permute.xlu0 0
  %4223 = vperm.xlu0 %4222, %v3477
  %v4224 = vpop.permute.xlu0 %4223
  %4227 = vset.pattern.permute.xlu0 0
  %4228 = vperm.xlu0 %4227, %v3478
  %v4229 = vpop.permute.xlu0 %4228
  %4232 = vset.pattern.permute.xlu0 0
  %4233 = vperm.xlu0 %4232, %v3479
  %v4234 = vpop.permute.xlu0 %4233
  %4237 = vset.pattern.permute.xlu0 0
  %4238 = vperm.xlu0 %4237, %v3480
  %v4239 = vpop.permute.xlu0 %4238
  %4242 = vset.pattern.permute.xlu0 0
  %4243 = vperm.xlu0 %4242, %v3481
  %v4244 = vpop.permute.xlu0 %4243
  %4247 = vset.pattern.permute.xlu0 0
  %4248 = vperm.xlu0 %4247, %v3482
  %v4249 = vpop.permute.xlu0 %4248
  %4252 = vset.pattern.permute.xlu0 0
  %4253 = vperm.xlu0 %4252, %v3483
  %v4254 = vpop.permute.xlu0 %4253
  %4257 = vset.pattern.permute.xlu0 0
  %4258 = vperm.xlu0 %4257, %v3484
  %v4259 = vpop.permute.xlu0 %4258
  %4262 = vset.pattern.permute.xlu0 0
  %4263 = vperm.xlu0 %4262, %v3485
  %v4264 = vpop.permute.xlu0 %4263
  %4267 = vset.pattern.permute.xlu0 0
  %4268 = vperm.xlu0 %4267, %v3486
  %v4269 = vpop.permute.xlu0 %4268
  %4272 = vset.pattern.permute.xlu0 0
  %4273 = vperm.xlu0 %4272, %v3487
  %v4274 = vpop.permute.xlu0 %4273
  %4277 = vset.pattern.permute.xlu0 0
  %4278 = vperm.xlu0 %4277, %v3488
  %v4279 = vpop.permute.xlu0 %4278
  %4282 = vset.pattern.permute.xlu0 0
  %4283 = vperm.xlu0 %4282, %v3489
  %v4284 = vpop.permute.xlu0 %4283
  %4287 = vset.pattern.permute.xlu0 0
  %4288 = vperm.xlu0 %4287, %v3490
  %v4289 = vpop.permute.xlu0 %4288
  %4292 = vset.pattern.permute.xlu0 0
  %4293 = vperm.xlu0 %4292, %v3491
  %v4294 = vpop.permute.xlu0 %4293
  %4297 = vset.pattern.permute.xlu0 0
  %4298 = vperm.xlu0 %4297, %v3492
  %v4299 = vpop.permute.xlu0 %4298
  %4302 = vset.pattern.permute.xlu0 0
  %4303 = vperm.xlu0 %4302, %v3493
  %v4304 = vpop.permute.xlu0 %4303
  %4307 = vset.pattern.permute.xlu0 0
  %4308 = vperm.xlu0 %4307, %v3494
  %v4309 = vpop.permute.xlu0 %4308
  %4312 = vset.pattern.permute.xlu0 0
  %4313 = vperm.xlu0 %4312, %v3495
  %v4314 = vpop.permute.xlu0 %4313
  %4317 = vset.pattern.permute.xlu0 0
  %4318 = vperm.xlu0 %4317, %v3496
  %v4319 = vpop.permute.xlu0 %4318
  %4322 = vset.pattern.permute.xlu0 0
  %4323 = vperm.xlu0 %4322, %v3497
  %v4324 = vpop.permute.xlu0 %4323
  %4327 = vset.pattern.permute.xlu0 0
  %4328 = vperm.xlu0 %4327, %v3498
  %v4329 = vpop.permute.xlu0 %4328
  %4332 = vset.pattern.permute.xlu0 0
  %4333 = vperm.xlu0 %4332, %v3499
  %v4334 = vpop.permute.xlu0 %4333
  %4337 = vset.pattern.permute.xlu0 0
  %4338 = vperm.xlu0 %4337, %v3500
  %v4339 = vpop.permute.xlu0 %4338
  %4342 = vset.pattern.permute.xlu0 0
  %4343 = vperm.xlu0 %4342, %v3501
  %v4344 = vpop.permute.xlu0 %4343
  %4347 = vset.pattern.permute.xlu0 0
  %4348 = vperm.xlu0 %4347, %v3502
  %v4349 = vpop.permute.xlu0 %4348
  %4352 = vset.pattern.permute.xlu0 0
  %4353 = vperm.xlu0 %4352, %v3503
  %v4354 = vpop.permute.xlu0 %4353
  %4357 = vset.pattern.permute.xlu0 0
  %4358 = vperm.xlu0 %4357, %v3504
  %v4359 = vpop.permute.xlu0 %4358
  %4362 = vset.pattern.permute.xlu0 0
  %4363 = vperm.xlu0 %4362, %v3505
  %v4364 = vpop.permute.xlu0 %4363
  %4367 = vset.pattern.permute.xlu0 0
  %4368 = vperm.xlu0 %4367, %v3506
  %v4369 = vpop.permute.xlu0 %4368
  %4372 = vset.pattern.permute.xlu0 0
  %4373 = vperm.xlu0 %4372, %v3507
  %v4374 = vpop.permute.xlu0 %4373
  %4377 = vset.pattern.permute.xlu0 0
  %4378 = vperm.xlu0 %4377, %v3508
  %v4379 = vpop.permute.xlu0 %4378
  %4382 = vset.pattern.permute.xlu0 0
  %4383 = vperm.xlu0 %4382, %v3509
  %v4384 = vpop.permute.xlu0 %4383
  %4387 = vset.pattern.permute.xlu0 0
  %4388 = vperm.xlu0 %4387, %v3510
  %v4389 = vpop.permute.xlu0 %4388
  %4392 = vset.pattern.permute.xlu0 0
  %4393 = vperm.xlu0 %4392, %v3511
  %v4394 = vpop.permute.xlu0 %4393
  %4397 = vset.pattern.permute.xlu0 0
  %4398 = vperm.xlu0 %4397, %v3512
  %v4399 = vpop.permute.xlu0 %4398
  %4402 = vset.pattern.permute.xlu0 0
  %4403 = vperm.xlu0 %4402, %v3513
  %v4404 = vpop.permute.xlu0 %4403
  %4407 = vset.pattern.permute.xlu0 0
  %4408 = vperm.xlu0 %4407, %v3514
  %v4409 = vpop.permute.xlu0 %4408
  %4412 = vset.pattern.permute.xlu0 0
  %4413 = vperm.xlu0 %4412, %v3515
  %v4414 = vpop.permute.xlu0 %4413
  %4417 = vset.pattern.permute.xlu0 0
  %4418 = vperm.xlu0 %4417, %v3516
  %v4419 = vpop.permute.xlu0 %4418
  %4422 = vset.pattern.permute.xlu0 0
  %4423 = vperm.xlu0 %4422, %v3517
  %v4424 = vpop.permute.xlu0 %4423
  %4427 = vset.pattern.permute.xlu0 0
  %4428 = vperm.xlu0 %4427, %v3518
  %v4429 = vpop.permute.xlu0 %4428
  %4432 = vset.pattern.permute.xlu0 0
  %4433 = vperm.xlu0 %4432, %v3519
  %v4434 = vpop.permute.xlu0 %4433
  %4437 = vset.pattern.permute.xlu0 0
  %4438 = vperm.xlu0 %4437, %v3520
  %v4439 = vpop.permute.xlu0 %4438
  %4442 = vset.pattern.permute.xlu0 0
  %4443 = vperm.xlu0 %4442, %v3521
  %v4444 = vpop.permute.xlu0 %4443
  %4447 = vset.pattern.permute.xlu0 0
  %4448 = vperm.xlu0 %4447, %v3522
  %v4449 = vpop.permute.xlu0 %4448
  %4452 = vset.pattern.permute.xlu0 0
  %4453 = vperm.xlu0 %4452, %v3523
  %v4454 = vpop.permute.xlu0 %4453
  %4457 = vset.pattern.permute.xlu0 0
  %4458 = vperm.xlu0 %4457, %v3524
  %v4459 = vpop.permute.xlu0 %4458
  %4462 = vset.pattern.permute.xlu0 0
  %4463 = vperm.xlu0 %4462, %v3525
  %v4464 = vpop.permute.xlu0 %4463
  %4467 = vset.pattern.permute.xlu0 0
  %4468 = vperm.xlu0 %4467, %v3526
  %v4469 = vpop.permute.xlu0 %4468
  %4472 = vset.pattern.permute.xlu0 0
  %4473 = vperm.xlu0 %4472, %v3527
  %v4474 = vpop.permute.xlu0 %4473
  %4477 = vset.pattern.permute.xlu0 0
  %4478 = vperm.xlu0 %4477, %v3528
  %v4479 = vpop.permute.xlu0 %4478
  %4482 = vset.pattern.permute.xlu0 0
  %4483 = vperm.xlu0 %4482, %v3529
  %v4484 = vpop.permute.xlu0 %4483
  %4487 = vset.pattern.permute.xlu0 0
  %4488 = vperm.xlu0 %4487, %v3530
  %v4489 = vpop.permute.xlu0 %4488
  %4492 = vset.pattern.permute.xlu0 0
  %4493 = vperm.xlu0 %4492, %v3531
  %v4494 = vpop.permute.xlu0 %4493
  %4497 = vset.pattern.permute.xlu0 0
  %4498 = vperm.xlu0 %4497, %v3532
  %v4499 = vpop.permute.xlu0 %4498
  %4502 = vset.pattern.permute.xlu0 0
  %4503 = vperm.xlu0 %4502, %v3533
  %v4504 = vpop.permute.xlu0 %4503
  %4507 = vset.pattern.permute.xlu0 0
  %4508 = vperm.xlu0 %4507, %v3534
  %v4509 = vpop.permute.xlu0 %4508
  %4512 = vset.pattern.permute.xlu0 0
  %4513 = vperm.xlu0 %4512, %v3535
  %v4514 = vpop.permute.xlu0 %4513
  %4517 = vset.pattern.permute.xlu0 0
  %4518 = vperm.xlu0 %4517, %v3536
  %v4519 = vpop.permute.xlu0 %4518
  %4522 = vset.pattern.permute.xlu0 0
  %4523 = vperm.xlu0 %4522, %v3537
  %v4524 = vpop.permute.xlu0 %4523
  %4527 = vset.pattern.permute.xlu0 0
  %4528 = vperm.xlu0 %4527, %v3538
  %v4529 = vpop.permute.xlu0 %4528
  %4532 = vset.pattern.permute.xlu0 0
  %4533 = vperm.xlu0 %4532, %v3539
  %v4534 = vpop.permute.xlu0 %4533
  %4537 = vset.pattern.permute.xlu0 0
  %4538 = vperm.xlu0 %4537, %v3540
  %v4539 = vpop.permute.xlu0 %4538
  %4542 = vset.pattern.permute.xlu0 0
  %4543 = vperm.xlu0 %4542, %v3541
  %v4544 = vpop.permute.xlu0 %4543
  %4547 = vset.pattern.permute.xlu0 0
  %4548 = vperm.xlu0 %4547, %v3542
  %v4549 = vpop.permute.xlu0 %4548
  %4552 = vset.pattern.permute.xlu0 0
  %4553 = vperm.xlu0 %4552, %v3543
  %v4554 = vpop.permute.xlu0 %4553
  %4557 = vset.pattern.permute.xlu0 0
  %4558 = vperm.xlu0 %4557, %v3544
  %v4559 = vpop.permute.xlu0 %4558
  %4562 = vset.pattern.permute.xlu0 0
  %4563 = vperm.xlu0 %4562, %v3545
  %v4564 = vpop.permute.xlu0 %4563
  %4567 = vset.pattern.permute.xlu0 0
  %4568 = vperm.xlu0 %4567, %v3546
  %v4569 = vpop.permute.xlu0 %4568
  %v4571 = vmul.f32 %v468, %v3934
  %v4572 = vmul.f32 %v470, %v3934
  %v4573 = vmul.f32 %v474, %v3939
  %v4574 = vmul.f32 %v476, %v3939
  %v4575 = vmul.f32 %v480, %v3944
  %v4576 = vmul.f32 %v482, %v3944
  %v4577 = vmul.f32 %v486, %v3949
  %v4578 = vmul.f32 %v488, %v3949
  %v4579 = vmul.f32 %v492, %v3954
  %v4580 = vmul.f32 %v494, %v3954
  %v4581 = vmul.f32 %v498, %v3959
  %v4582 = vmul.f32 %v500, %v3959
  %v4583 = vmul.f32 %v504, %v3964
  %v4584 = vmul.f32 %v506, %v3964
  %v4585 = vmul.f32 %v510, %v3969
  %v4586 = vmul.f32 %v512, %v3969
  %v4587 = vmul.f32 %v516, %v3974
  %v4588 = vmul.f32 %v518, %v3974
  %v4589 = vmul.f32 %v522, %v3979
  %v4590 = vmul.f32 %v524, %v3979
  %v4591 = vmul.f32 %v528, %v3984
  %v4592 = vmul.f32 %v530, %v3984
  %v4593 = vmul.f32 %v534, %v3989
  %v4594 = vmul.f32 %v536, %v3989
  %v4595 = vmul.f32 %v540, %v3994
  %v4596 = vmul.f32 %v542, %v3994
  %v4597 = vmul.f32 %v546, %v3999
  %v4598 = vmul.f32 %v548, %v3999
  %v4599 = vmul.f32 %v552, %v4004
  %v4600 = vmul.f32 %v554, %v4004
  %v4601 = vmul.f32 %v558, %v4009
  %v4602 = vmul.f32 %v560, %v4009
  %v4603 = vmul.f32 %v564, %v4014
  %v4604 = vmul.f32 %v566, %v4014
  %v4605 = vmul.f32 %v570, %v4019
  %v4606 = vmul.f32 %v572, %v4019
  %v4607 = vmul.f32 %v576, %v4024
  %v4608 = vmul.f32 %v578, %v4024
  %v4609 = vmul.f32 %v582, %v4029
  %v4610 = vmul.f32 %v584, %v4029
  %v4611 = vmul.f32 %v588, %v4034
  %v4612 = vmul.f32 %v590, %v4034
  %v4613 = vmul.f32 %v594, %v4039
  %v4614 = vmul.f32 %v596, %v4039
  %v4615 = vmul.f32 %v600, %v4044
  %v4616 = vmul.f32 %v602, %v4044
  %v4617 = vmul.f32 %v606, %v4049
  %v4618 = vmul.f32 %v608, %v4049
  %v4619 = vmul.f32 %v612, %v4054
  %v4620 = vmul.f32 %v614, %v4054
  %v4621 = vmul.f32 %v618, %v4059
  %v4622 = vmul.f32 %v620, %v4059
  %v4623 = vmul.f32 %v624, %v4064
  %v4624 = vmul.f32 %v626, %v4064
  %v4625 = vmul.f32 %v630, %v4069
  %v4626 = vmul.f32 %v632, %v4069
  %v4627 = vmul.f32 %v636, %v4074
  %v4628 = vmul.f32 %v638, %v4074
  %v4629 = vmul.f32 %v642, %v4079
  %v4630 = vmul.f32 %v644, %v4079
  %v4631 = vmul.f32 %v648, %v4084
  %v4632 = vmul.f32 %v650, %v4084
  %v4633 = vmul.f32 %v654, %v4089
  %v4634 = vmul.f32 %v656, %v4089
  %v4635 = vmul.f32 %v660, %v4094
  %v4636 = vmul.f32 %v662, %v4094
  %v4637 = vmul.f32 %v666, %v4099
  %v4638 = vmul.f32 %v668, %v4099
  %v4639 = vmul.f32 %v672, %v4104
  %v4640 = vmul.f32 %v674, %v4104
  %v4641 = vmul.f32 %v678, %v4109
  %v4642 = vmul.f32 %v680, %v4109
  %v4643 = vmul.f32 %v684, %v4114
  %v4644 = vmul.f32 %v686, %v4114
  %v4645 = vmul.f32 %v690, %v4119
  %v4646 = vmul.f32 %v692, %v4119
  %v4647 = vmul.f32 %v696, %v4124
  %v4648 = vmul.f32 %v698, %v4124
  %v4649 = vmul.f32 %v702, %v4129
  %v4650 = vmul.f32 %v704, %v4129
  %v4651 = vmul.f32 %v708, %v4134
  %v4652 = vmul.f32 %v710, %v4134
  %v4653 = vmul.f32 %v714, %v4139
  %v4654 = vmul.f32 %v716, %v4139
  %v4655 = vmul.f32 %v720, %v4144
  %v4656 = vmul.f32 %v722, %v4144
  %v4657 = vmul.f32 %v726, %v4149
  %v4658 = vmul.f32 %v728, %v4149
  %v4659 = vmul.f32 %v732, %v4154
  %v4660 = vmul.f32 %v734, %v4154
  %v4661 = vmul.f32 %v738, %v4159
  %v4662 = vmul.f32 %v740, %v4159
  %v4663 = vmul.f32 %v744, %v4164
  %v4664 = vmul.f32 %v746, %v4164
  %v4665 = vmul.f32 %v750, %v4169
  %v4666 = vmul.f32 %v752, %v4169
  %v4667 = vmul.f32 %v756, %v4174
  %v4668 = vmul.f32 %v758, %v4174
  %v4669 = vmul.f32 %v762, %v4179
  %v4670 = vmul.f32 %v764, %v4179
  %v4671 = vmul.f32 %v768, %v4184
  %v4672 = vmul.f32 %v770, %v4184
  %v4673 = vmul.f32 %v774, %v4189
  %v4674 = vmul.f32 %v776, %v4189
  %v4675 = vmul.f32 %v780, %v4194
  %v4676 = vmul.f32 %v782, %v4194
  %v4677 = vmul.f32 %v786, %v4199
  %v4678 = vmul.f32 %v788, %v4199
  %v4679 = vmul.f32 %v792, %v4204
  %v4680 = vmul.f32 %v794, %v4204
  %v4681 = vmul.f32 %v798, %v4209
  %v4682 = vmul.f32 %v800, %v4209
  %v4683 = vmul.f32 %v804, %v4214
  %v4684 = vmul.f32 %v806, %v4214
  %v4685 = vmul.f32 %v810, %v4219
  %v4686 = vmul.f32 %v812, %v4219
  %v4687 = vmul.f32 %v816, %v4224
  %v4688 = vmul.f32 %v818, %v4224
  %v4689 = vmul.f32 %v822, %v4229
  %v4690 = vmul.f32 %v824, %v4229
  %v4691 = vmul.f32 %v828, %v4234
  %v4692 = vmul.f32 %v830, %v4234
  %v4693 = vmul.f32 %v834, %v4239
  %v4694 = vmul.f32 %v836, %v4239
  %v4695 = vmul.f32 %v840, %v4244
  %v4696 = vmul.f32 %v842, %v4244
  %v4697 = vmul.f32 %v846, %v4249
  %v4698 = vmul.f32 %v848, %v4249
  %v4699 = vmul.f32 %v852, %v4254
  %v4700 = vmul.f32 %v854, %v4254
  %v4701 = vmul.f32 %v858, %v4259
  %v4702 = vmul.f32 %v860, %v4259
  %v4703 = vmul.f32 %v864, %v4264
  %v4704 = vmul.f32 %v866, %v4264
  %v4705 = vmul.f32 %v870, %v4269
  %v4706 = vmul.f32 %v872, %v4269
  %v4707 = vmul.f32 %v876, %v4274
  %v4708 = vmul.f32 %v878, %v4274
  %v4709 = vmul.f32 %v882, %v4279
  %v4710 = vmul.f32 %v884, %v4279
  %v4711 = vmul.f32 %v888, %v4284
  %v4712 = vmul.f32 %v890, %v4284
  %v4713 = vmul.f32 %v894, %v4289
  %v4714 = vmul.f32 %v896, %v4289
  %v4715 = vmul.f32 %v900, %v4294
  %v4716 = vmul.f32 %v902, %v4294
  %v4717 = vmul.f32 %v906, %v4299
  %v4718 = vmul.f32 %v908, %v4299
  %v4719 = vmul.f32 %v912, %v4304
  %v4720 = vmul.f32 %v914, %v4304
  %v4721 = vmul.f32 %v918, %v4309
  %v4722 = vmul.f32 %v920, %v4309
  %v4723 = vmul.f32 %v924, %v4314
  %v4724 = vmul.f32 %v926, %v4314
  %v4725 = vmul.f32 %v930, %v4319
  %v4726 = vmul.f32 %v932, %v4319
  %v4727 = vmul.f32 %v936, %v4324
  %v4728 = vmul.f32 %v938, %v4324
  %v4729 = vmul.f32 %v942, %v4329
  %v4730 = vmul.f32 %v944, %v4329
  %v4731 = vmul.f32 %v948, %v4334
  %v4732 = vmul.f32 %v950, %v4334
  %v4733 = vmul.f32 %v954, %v4339
  %v4734 = vmul.f32 %v956, %v4339
  %v4735 = vmul.f32 %v960, %v4344
  %v4736 = vmul.f32 %v962, %v4344
  %v4737 = vmul.f32 %v966, %v4349
  %v4738 = vmul.f32 %v968, %v4349
  %v4739 = vmul.f32 %v972, %v4354
  %v4740 = vmul.f32 %v974, %v4354
  %v4741 = vmul.f32 %v978, %v4359
  %v4742 = vmul.f32 %v980, %v4359
  %v4743 = vmul.f32 %v984, %v4364
  %v4744 = vmul.f32 %v986, %v4364
  %v4745 = vmul.f32 %v990, %v4369
  %v4746 = vmul.f32 %v992, %v4369
  %v4747 = vmul.f32 %v996, %v4374
  %v4748 = vmul.f32 %v998, %v4374
  %v4749 = vmul.f32 %v1002, %v4379
  %v4750 = vmul.f32 %v1004, %v4379
  %v4751 = vmul.f32 %v1008, %v4384
  %v4752 = vmul.f32 %v1010, %v4384
  %v4753 = vmul.f32 %v1014, %v4389
  %v4754 = vmul.f32 %v1016, %v4389
  %v4755 = vmul.f32 %v1020, %v4394
  %v4756 = vmul.f32 %v1022, %v4394
  %v4757 = vmul.f32 %v1026, %v4399
  %v4758 = vmul.f32 %v1028, %v4399
  %v4759 = vmul.f32 %v1032, %v4404
  %v4760 = vmul.f32 %v1034, %v4404
  %v4761 = vmul.f32 %v1038, %v4409
  %v4762 = vmul.f32 %v1040, %v4409
  %v4763 = vmul.f32 %v1044, %v4414
  %v4764 = vmul.f32 %v1046, %v4414
  %v4765 = vmul.f32 %v1050, %v4419
  %v4766 = vmul.f32 %v1052, %v4419
  %v4767 = vmul.f32 %v1056, %v4424
  %v4768 = vmul.f32 %v1058, %v4424
  %v4769 = vmul.f32 %v1062, %v4429
  %v4770 = vmul.f32 %v1064, %v4429
  %v4771 = vmul.f32 %v1068, %v4434
  %v4772 = vmul.f32 %v1070, %v4434
  %v4773 = vmul.f32 %v1074, %v4439
  %v4774 = vmul.f32 %v1076, %v4439
  %v4775 = vmul.f32 %v1080, %v4444
  %v4776 = vmul.f32 %v1082, %v4444
  %v4777 = vmul.f32 %v1086, %v4449
  %v4778 = vmul.f32 %v1088, %v4449
  %v4779 = vmul.f32 %v1092, %v4454
  %v4780 = vmul.f32 %v1094, %v4454
  %v4781 = vmul.f32 %v1098, %v4459
  %v4782 = vmul.f32 %v1100, %v4459
  %v4783 = vmul.f32 %v1104, %v4464
  %v4784 = vmul.f32 %v1106, %v4464
  %v4785 = vmul.f32 %v1110, %v4469
  %v4786 = vmul.f32 %v1112, %v4469
  %v4787 = vmul.f32 %v1116, %v4474
  %v4788 = vmul.f32 %v1118, %v4474
  %v4789 = vmul.f32 %v1122, %v4479
  %v4790 = vmul.f32 %v1124, %v4479
  %v4791 = vmul.f32 %v1128, %v4484
  %v4792 = vmul.f32 %v1130, %v4484
  %v4793 = vmul.f32 %v1134, %v4489
  %v4794 = vmul.f32 %v1136, %v4489
  %v4795 = vmul.f32 %v1140, %v4494
  %v4796 = vmul.f32 %v1142, %v4494
  %v4797 = vmul.f32 %v1146, %v4499
  %v4798 = vmul.f32 %v1148, %v4499
  %v4799 = vmul.f32 %v1152, %v4504
  %v4800 = vmul.f32 %v1154, %v4504
  %v4801 = vmul.f32 %v1158, %v4509
  %v4802 = vmul.f32 %v1160, %v4509
  %v4803 = vmul.f32 %v1164, %v4514
  %v4804 = vmul.f32 %v1166, %v4514
  %v4805 = vmul.f32 %v1170, %v4519
  %v4806 = vmul.f32 %v1172, %v4519
  %v4807 = vmul.f32 %v1176, %v4524
  %v4808 = vmul.f32 %v1178, %v4524
  %v4809 = vmul.f32 %v1182, %v4529
  %v4810 = vmul.f32 %v1184, %v4529
  %v4811 = vmul.f32 %v1188, %v4534
  %v4812 = vmul.f32 %v1190, %v4534
  %v4813 = vmul.f32 %v1194, %v4539
  %v4814 = vmul.f32 %v1196, %v4539
  %v4815 = vmul.f32 %v1200, %v4544
  %v4816 = vmul.f32 %v1202, %v4544
  %v4817 = vmul.f32 %v1206, %v4549
  %v4818 = vmul.f32 %v1208, %v4549
  %v4819 = vmul.f32 %v1212, %v4554
  %v4820 = vmul.f32 %v1214, %v4554
  %v4821 = vmul.f32 %v1218, %v4559
  %v4822 = vmul.f32 %v1220, %v4559
  %v4823 = vmul.f32 %v1224, %v4564
  %v4824 = vmul.f32 %v1226, %v4564
  %v4825 = vmul.f32 %v1230, %v4569
  %v4826 = vmul.f32 %v1232, %v4569
  %4828 = vset.pattern.permute.xlu0 0
  %4829 = vperm.xlu0 %4828, %v3803
  %v4830 = vpop.permute.xlu0 %4829
  %4833 = vset.pattern.permute.xlu0 0
  %4834 = vperm.xlu0 %4833, %v3804
  %v4835 = vpop.permute.xlu0 %4834
  %4838 = vset.pattern.permute.xlu0 0
  %4839 = vperm.xlu0 %4838, %v3805
  %v4840 = vpop.permute.xlu0 %4839
  %4843 = vset.pattern.permute.xlu0 0
  %4844 = vperm.xlu0 %4843, %v3806
  %v4845 = vpop.permute.xlu0 %4844
  %4848 = vset.pattern.permute.xlu0 0
  %4849 = vperm.xlu0 %4848, %v3807
  %v4850 = vpop.permute.xlu0 %4849
  %4853 = vset.pattern.permute.xlu0 0
  %4854 = vperm.xlu0 %4853, %v3808
  %v4855 = vpop.permute.xlu0 %4854
  %4858 = vset.pattern.permute.xlu0 0
  %4859 = vperm.xlu0 %4858, %v3809
  %v4860 = vpop.permute.xlu0 %4859
  %4863 = vset.pattern.permute.xlu0 0
  %4864 = vperm.xlu0 %4863, %v3810
  %v4865 = vpop.permute.xlu0 %4864
  %4868 = vset.pattern.permute.xlu0 0
  %4869 = vperm.xlu0 %4868, %v3811
  %v4870 = vpop.permute.xlu0 %4869
  %4873 = vset.pattern.permute.xlu0 0
  %4874 = vperm.xlu0 %4873, %v3812
  %v4875 = vpop.permute.xlu0 %4874
  %4878 = vset.pattern.permute.xlu0 0
  %4879 = vperm.xlu0 %4878, %v3813
  %v4880 = vpop.permute.xlu0 %4879
  %4883 = vset.pattern.permute.xlu0 0
  %4884 = vperm.xlu0 %4883, %v3814
  %v4885 = vpop.permute.xlu0 %4884
  %4888 = vset.pattern.permute.xlu0 0
  %4889 = vperm.xlu0 %4888, %v3815
  %v4890 = vpop.permute.xlu0 %4889
  %4893 = vset.pattern.permute.xlu0 0
  %4894 = vperm.xlu0 %4893, %v3816
  %v4895 = vpop.permute.xlu0 %4894
  %4898 = vset.pattern.permute.xlu0 0
  %4899 = vperm.xlu0 %4898, %v3817
  %v4900 = vpop.permute.xlu0 %4899
  %4903 = vset.pattern.permute.xlu0 0
  %4904 = vperm.xlu0 %4903, %v3818
  %v4905 = vpop.permute.xlu0 %4904
  %4908 = vset.pattern.permute.xlu0 0
  %4909 = vperm.xlu0 %4908, %v3819
  %v4910 = vpop.permute.xlu0 %4909
  %4913 = vset.pattern.permute.xlu0 0
  %4914 = vperm.xlu0 %4913, %v3820
  %v4915 = vpop.permute.xlu0 %4914
  %4918 = vset.pattern.permute.xlu0 0
  %4919 = vperm.xlu0 %4918, %v3821
  %v4920 = vpop.permute.xlu0 %4919
  %4923 = vset.pattern.permute.xlu0 0
  %4924 = vperm.xlu0 %4923, %v3822
  %v4925 = vpop.permute.xlu0 %4924
  %4928 = vset.pattern.permute.xlu0 0
  %4929 = vperm.xlu0 %4928, %v3823
  %v4930 = vpop.permute.xlu0 %4929
  %4933 = vset.pattern.permute.xlu0 0
  %4934 = vperm.xlu0 %4933, %v3824
  %v4935 = vpop.permute.xlu0 %4934
  %4938 = vset.pattern.permute.xlu0 0
  %4939 = vperm.xlu0 %4938, %v3825
  %v4940 = vpop.permute.xlu0 %4939
  %4943 = vset.pattern.permute.xlu0 0
  %4944 = vperm.xlu0 %4943, %v3826
  %v4945 = vpop.permute.xlu0 %4944
  %4948 = vset.pattern.permute.xlu0 0
  %4949 = vperm.xlu0 %4948, %v3827
  %v4950 = vpop.permute.xlu0 %4949
  %4953 = vset.pattern.permute.xlu0 0
  %4954 = vperm.xlu0 %4953, %v3828
  %v4955 = vpop.permute.xlu0 %4954
  %4958 = vset.pattern.permute.xlu0 0
  %4959 = vperm.xlu0 %4958, %v3829
  %v4960 = vpop.permute.xlu0 %4959
  %4963 = vset.pattern.permute.xlu0 0
  %4964 = vperm.xlu0 %4963, %v3830
  %v4965 = vpop.permute.xlu0 %4964
  %4968 = vset.pattern.permute.xlu0 0
  %4969 = vperm.xlu0 %4968, %v3831
  %v4970 = vpop.permute.xlu0 %4969
  %4973 = vset.pattern.permute.xlu0 0
  %4974 = vperm.xlu0 %4973, %v3832
  %v4975 = vpop.permute.xlu0 %4974
  %4978 = vset.pattern.permute.xlu0 0
  %4979 = vperm.xlu0 %4978, %v3833
  %v4980 = vpop.permute.xlu0 %4979
  %4983 = vset.pattern.permute.xlu0 0
  %4984 = vperm.xlu0 %4983, %v3834
  %v4985 = vpop.permute.xlu0 %4984
  %4988 = vset.pattern.permute.xlu0 0
  %4989 = vperm.xlu0 %4988, %v3835
  %v4990 = vpop.permute.xlu0 %4989
  %4993 = vset.pattern.permute.xlu0 0
  %4994 = vperm.xlu0 %4993, %v3836
  %v4995 = vpop.permute.xlu0 %4994
  %4998 = vset.pattern.permute.xlu0 0
  %4999 = vperm.xlu0 %4998, %v3837
  %v5000 = vpop.permute.xlu0 %4999
  %5003 = vset.pattern.permute.xlu0 0
  %5004 = vperm.xlu0 %5003, %v3838
  %v5005 = vpop.permute.xlu0 %5004
  %5008 = vset.pattern.permute.xlu0 0
  %5009 = vperm.xlu0 %5008, %v3839
  %v5010 = vpop.permute.xlu0 %5009
  %5013 = vset.pattern.permute.xlu0 0
  %5014 = vperm.xlu0 %5013, %v3840
  %v5015 = vpop.permute.xlu0 %5014
  %5018 = vset.pattern.permute.xlu0 0
  %5019 = vperm.xlu0 %5018, %v3841
  %v5020 = vpop.permute.xlu0 %5019
  %5023 = vset.pattern.permute.xlu0 0
  %5024 = vperm.xlu0 %5023, %v3842
  %v5025 = vpop.permute.xlu0 %5024
  %5028 = vset.pattern.permute.xlu0 0
  %5029 = vperm.xlu0 %5028, %v3843
  %v5030 = vpop.permute.xlu0 %5029
  %5033 = vset.pattern.permute.xlu0 0
  %5034 = vperm.xlu0 %5033, %v3844
  %v5035 = vpop.permute.xlu0 %5034
  %5038 = vset.pattern.permute.xlu0 0
  %5039 = vperm.xlu0 %5038, %v3845
  %v5040 = vpop.permute.xlu0 %5039
  %5043 = vset.pattern.permute.xlu0 0
  %5044 = vperm.xlu0 %5043, %v3846
  %v5045 = vpop.permute.xlu0 %5044
  %5048 = vset.pattern.permute.xlu0 0
  %5049 = vperm.xlu0 %5048, %v3847
  %v5050 = vpop.permute.xlu0 %5049
  %5053 = vset.pattern.permute.xlu0 0
  %5054 = vperm.xlu0 %5053, %v3848
  %v5055 = vpop.permute.xlu0 %5054
  %5058 = vset.pattern.permute.xlu0 0
  %5059 = vperm.xlu0 %5058, %v3849
  %v5060 = vpop.permute.xlu0 %5059
  %5063 = vset.pattern.permute.xlu0 0
  %5064 = vperm.xlu0 %5063, %v3850
  %v5065 = vpop.permute.xlu0 %5064
  %5068 = vset.pattern.permute.xlu0 0
  %5069 = vperm.xlu0 %5068, %v3851
  %v5070 = vpop.permute.xlu0 %5069
  %5073 = vset.pattern.permute.xlu0 0
  %5074 = vperm.xlu0 %5073, %v3852
  %v5075 = vpop.permute.xlu0 %5074
  %5078 = vset.pattern.permute.xlu0 0
  %5079 = vperm.xlu0 %5078, %v3853
  %v5080 = vpop.permute.xlu0 %5079
  %5083 = vset.pattern.permute.xlu0 0
  %5084 = vperm.xlu0 %5083, %v3854
  %v5085 = vpop.permute.xlu0 %5084
  %5088 = vset.pattern.permute.xlu0 0
  %5089 = vperm.xlu0 %5088, %v3855
  %v5090 = vpop.permute.xlu0 %5089
  %5093 = vset.pattern.permute.xlu0 0
  %5094 = vperm.xlu0 %5093, %v3856
  %v5095 = vpop.permute.xlu0 %5094
  %5098 = vset.pattern.permute.xlu0 0
  %5099 = vperm.xlu0 %5098, %v3857
  %v5100 = vpop.permute.xlu0 %5099
  %5103 = vset.pattern.permute.xlu0 0
  %5104 = vperm.xlu0 %5103, %v3858
  %v5105 = vpop.permute.xlu0 %5104
  %5108 = vset.pattern.permute.xlu0 0
  %5109 = vperm.xlu0 %5108, %v3859
  %v5110 = vpop.permute.xlu0 %5109
  %5113 = vset.pattern.permute.xlu0 0
  %5114 = vperm.xlu0 %5113, %v3860
  %v5115 = vpop.permute.xlu0 %5114
  %5118 = vset.pattern.permute.xlu0 0
  %5119 = vperm.xlu0 %5118, %v3861
  %v5120 = vpop.permute.xlu0 %5119
  %5123 = vset.pattern.permute.xlu0 0
  %5124 = vperm.xlu0 %5123, %v3862
  %v5125 = vpop.permute.xlu0 %5124
  %5128 = vset.pattern.permute.xlu0 0
  %5129 = vperm.xlu0 %5128, %v3863
  %v5130 = vpop.permute.xlu0 %5129
  %5133 = vset.pattern.permute.xlu0 0
  %5134 = vperm.xlu0 %5133, %v3864
  %v5135 = vpop.permute.xlu0 %5134
  %5138 = vset.pattern.permute.xlu0 0
  %5139 = vperm.xlu0 %5138, %v3865
  %v5140 = vpop.permute.xlu0 %5139
  %5143 = vset.pattern.permute.xlu0 0
  %5144 = vperm.xlu0 %5143, %v3866
  %v5145 = vpop.permute.xlu0 %5144
  %5148 = vset.pattern.permute.xlu0 0
  %5149 = vperm.xlu0 %5148, %v3867
  %v5150 = vpop.permute.xlu0 %5149
  %5153 = vset.pattern.permute.xlu0 0
  %5154 = vperm.xlu0 %5153, %v3868
  %v5155 = vpop.permute.xlu0 %5154
  %5158 = vset.pattern.permute.xlu0 0
  %5159 = vperm.xlu0 %5158, %v3869
  %v5160 = vpop.permute.xlu0 %5159
  %5163 = vset.pattern.permute.xlu0 0
  %5164 = vperm.xlu0 %5163, %v3870
  %v5165 = vpop.permute.xlu0 %5164
  %5168 = vset.pattern.permute.xlu0 0
  %5169 = vperm.xlu0 %5168, %v3871
  %v5170 = vpop.permute.xlu0 %5169
  %5173 = vset.pattern.permute.xlu0 0
  %5174 = vperm.xlu0 %5173, %v3872
  %v5175 = vpop.permute.xlu0 %5174
  %5178 = vset.pattern.permute.xlu0 0
  %5179 = vperm.xlu0 %5178, %v3873
  %v5180 = vpop.permute.xlu0 %5179
  %5183 = vset.pattern.permute.xlu0 0
  %5184 = vperm.xlu0 %5183, %v3874
  %v5185 = vpop.permute.xlu0 %5184
  %5188 = vset.pattern.permute.xlu0 0
  %5189 = vperm.xlu0 %5188, %v3875
  %v5190 = vpop.permute.xlu0 %5189
  %5193 = vset.pattern.permute.xlu0 0
  %5194 = vperm.xlu0 %5193, %v3876
  %v5195 = vpop.permute.xlu0 %5194
  %5198 = vset.pattern.permute.xlu0 0
  %5199 = vperm.xlu0 %5198, %v3877
  %v5200 = vpop.permute.xlu0 %5199
  %5203 = vset.pattern.permute.xlu0 0
  %5204 = vperm.xlu0 %5203, %v3878
  %v5205 = vpop.permute.xlu0 %5204
  %5208 = vset.pattern.permute.xlu0 0
  %5209 = vperm.xlu0 %5208, %v3879
  %v5210 = vpop.permute.xlu0 %5209
  %5213 = vset.pattern.permute.xlu0 0
  %5214 = vperm.xlu0 %5213, %v3880
  %v5215 = vpop.permute.xlu0 %5214
  %5218 = vset.pattern.permute.xlu0 0
  %5219 = vperm.xlu0 %5218, %v3881
  %v5220 = vpop.permute.xlu0 %5219
  %5223 = vset.pattern.permute.xlu0 0
  %5224 = vperm.xlu0 %5223, %v3882
  %v5225 = vpop.permute.xlu0 %5224
  %5228 = vset.pattern.permute.xlu0 0
  %5229 = vperm.xlu0 %5228, %v3883
  %v5230 = vpop.permute.xlu0 %5229
  %5233 = vset.pattern.permute.xlu0 0
  %5234 = vperm.xlu0 %5233, %v3884
  %v5235 = vpop.permute.xlu0 %5234
  %5238 = vset.pattern.permute.xlu0 0
  %5239 = vperm.xlu0 %5238, %v3885
  %v5240 = vpop.permute.xlu0 %5239
  %5243 = vset.pattern.permute.xlu0 0
  %5244 = vperm.xlu0 %5243, %v3886
  %v5245 = vpop.permute.xlu0 %5244
  %5248 = vset.pattern.permute.xlu0 0
  %5249 = vperm.xlu0 %5248, %v3887
  %v5250 = vpop.permute.xlu0 %5249
  %5253 = vset.pattern.permute.xlu0 0
  %5254 = vperm.xlu0 %5253, %v3888
  %v5255 = vpop.permute.xlu0 %5254
  %5258 = vset.pattern.permute.xlu0 0
  %5259 = vperm.xlu0 %5258, %v3889
  %v5260 = vpop.permute.xlu0 %5259
  %5263 = vset.pattern.permute.xlu0 0
  %5264 = vperm.xlu0 %5263, %v3890
  %v5265 = vpop.permute.xlu0 %5264
  %5268 = vset.pattern.permute.xlu0 0
  %5269 = vperm.xlu0 %5268, %v3891
  %v5270 = vpop.permute.xlu0 %5269
  %5273 = vset.pattern.permute.xlu0 0
  %5274 = vperm.xlu0 %5273, %v3892
  %v5275 = vpop.permute.xlu0 %5274
  %5278 = vset.pattern.permute.xlu0 0
  %5279 = vperm.xlu0 %5278, %v3893
  %v5280 = vpop.permute.xlu0 %5279
  %5283 = vset.pattern.permute.xlu0 0
  %5284 = vperm.xlu0 %5283, %v3894
  %v5285 = vpop.permute.xlu0 %5284
  %5288 = vset.pattern.permute.xlu0 0
  %5289 = vperm.xlu0 %5288, %v3895
  %v5290 = vpop.permute.xlu0 %5289
  %5293 = vset.pattern.permute.xlu0 0
  %5294 = vperm.xlu0 %5293, %v3896
  %v5295 = vpop.permute.xlu0 %5294
  %5298 = vset.pattern.permute.xlu0 0
  %5299 = vperm.xlu0 %5298, %v3897
  %v5300 = vpop.permute.xlu0 %5299
  %5303 = vset.pattern.permute.xlu0 0
  %5304 = vperm.xlu0 %5303, %v3898
  %v5305 = vpop.permute.xlu0 %5304
  %5308 = vset.pattern.permute.xlu0 0
  %5309 = vperm.xlu0 %5308, %v3899
  %v5310 = vpop.permute.xlu0 %5309
  %5313 = vset.pattern.permute.xlu0 0
  %5314 = vperm.xlu0 %5313, %v3900
  %v5315 = vpop.permute.xlu0 %5314
  %5318 = vset.pattern.permute.xlu0 0
  %5319 = vperm.xlu0 %5318, %v3901
  %v5320 = vpop.permute.xlu0 %5319
  %5323 = vset.pattern.permute.xlu0 0
  %5324 = vperm.xlu0 %5323, %v3902
  %v5325 = vpop.permute.xlu0 %5324
  %5328 = vset.pattern.permute.xlu0 0
  %5329 = vperm.xlu0 %5328, %v3903
  %v5330 = vpop.permute.xlu0 %5329
  %5333 = vset.pattern.permute.xlu0 0
  %5334 = vperm.xlu0 %5333, %v3904
  %v5335 = vpop.permute.xlu0 %5334
  %5338 = vset.pattern.permute.xlu0 0
  %5339 = vperm.xlu0 %5338, %v3905
  %v5340 = vpop.permute.xlu0 %5339
  %5343 = vset.pattern.permute.xlu0 0
  %5344 = vperm.xlu0 %5343, %v3906
  %v5345 = vpop.permute.xlu0 %5344
  %5348 = vset.pattern.permute.xlu0 0
  %5349 = vperm.xlu0 %5348, %v3907
  %v5350 = vpop.permute.xlu0 %5349
  %5353 = vset.pattern.permute.xlu0 0
  %5354 = vperm.xlu0 %5353, %v3908
  %v5355 = vpop.permute.xlu0 %5354
  %5358 = vset.pattern.permute.xlu0 0
  %5359 = vperm.xlu0 %5358, %v3909
  %v5360 = vpop.permute.xlu0 %5359
  %5363 = vset.pattern.permute.xlu0 0
  %5364 = vperm.xlu0 %5363, %v3910
  %v5365 = vpop.permute.xlu0 %5364
  %5368 = vset.pattern.permute.xlu0 0
  %5369 = vperm.xlu0 %5368, %v3911
  %v5370 = vpop.permute.xlu0 %5369
  %5373 = vset.pattern.permute.xlu0 0
  %5374 = vperm.xlu0 %5373, %v3912
  %v5375 = vpop.permute.xlu0 %5374
  %5378 = vset.pattern.permute.xlu0 0
  %5379 = vperm.xlu0 %5378, %v3913
  %v5380 = vpop.permute.xlu0 %5379
  %5383 = vset.pattern.permute.xlu0 0
  %5384 = vperm.xlu0 %5383, %v3914
  %v5385 = vpop.permute.xlu0 %5384
  %5388 = vset.pattern.permute.xlu0 0
  %5389 = vperm.xlu0 %5388, %v3915
  %v5390 = vpop.permute.xlu0 %5389
  %5393 = vset.pattern.permute.xlu0 0
  %5394 = vperm.xlu0 %5393, %v3916
  %v5395 = vpop.permute.xlu0 %5394
  %5398 = vset.pattern.permute.xlu0 0
  %5399 = vperm.xlu0 %5398, %v3917
  %v5400 = vpop.permute.xlu0 %5399
  %5403 = vset.pattern.permute.xlu0 0
  %5404 = vperm.xlu0 %5403, %v3918
  %v5405 = vpop.permute.xlu0 %5404
  %5408 = vset.pattern.permute.xlu0 0
  %5409 = vperm.xlu0 %5408, %v3919
  %v5410 = vpop.permute.xlu0 %5409
  %5413 = vset.pattern.permute.xlu0 0
  %5414 = vperm.xlu0 %5413, %v3920
  %v5415 = vpop.permute.xlu0 %5414
  %5418 = vset.pattern.permute.xlu0 0
  %5419 = vperm.xlu0 %5418, %v3921
  %v5420 = vpop.permute.xlu0 %5419
  %5423 = vset.pattern.permute.xlu0 0
  %5424 = vperm.xlu0 %5423, %v3922
  %v5425 = vpop.permute.xlu0 %5424
  %5428 = vset.pattern.permute.xlu0 0
  %5429 = vperm.xlu0 %5428, %v3923
  %v5430 = vpop.permute.xlu0 %5429
  %5433 = vset.pattern.permute.xlu0 0
  %5434 = vperm.xlu0 %5433, %v3924
  %v5435 = vpop.permute.xlu0 %5434
  %5438 = vset.pattern.permute.xlu0 0
  %5439 = vperm.xlu0 %5438, %v3925
  %v5440 = vpop.permute.xlu0 %5439
  %5443 = vset.pattern.permute.xlu0 0
  %5444 = vperm.xlu0 %5443, %v3926
  %v5445 = vpop.permute.xlu0 %5444
  %5448 = vset.pattern.permute.xlu0 0
  %5449 = vperm.xlu0 %5448, %v3927
  %v5450 = vpop.permute.xlu0 %5449
  %5453 = vset.pattern.permute.xlu0 0
  %5454 = vperm.xlu0 %5453, %v3928
  %v5455 = vpop.permute.xlu0 %5454
  %5458 = vset.pattern.permute.xlu0 0
  %5459 = vperm.xlu0 %5458, %v3929
  %v5460 = vpop.permute.xlu0 %5459
  %5463 = vset.pattern.permute.xlu0 0
  %5464 = vperm.xlu0 %5463, %v3930
  %v5465 = vpop.permute.xlu0 %5464
  %v5467 = vadd.f32 %v4571, %v4830
  %v5468 = vadd.f32 %v4572, %v4830
  %v5469 = vadd.f32 %v4573, %v4835
  %v5470 = vadd.f32 %v4574, %v4835
  %v5471 = vadd.f32 %v4575, %v4840
  %v5472 = vadd.f32 %v4576, %v4840
  %v5473 = vadd.f32 %v4577, %v4845
  %v5474 = vadd.f32 %v4578, %v4845
  %v5475 = vadd.f32 %v4579, %v4850
  %v5476 = vadd.f32 %v4580, %v4850
  %v5477 = vadd.f32 %v4581, %v4855
  %v5478 = vadd.f32 %v4582, %v4855
  %v5479 = vadd.f32 %v4583, %v4860
  %v5480 = vadd.f32 %v4584, %v4860
  %v5481 = vadd.f32 %v4585, %v4865
  %v5482 = vadd.f32 %v4586, %v4865
  %v5483 = vadd.f32 %v4587, %v4870
  %v5484 = vadd.f32 %v4588, %v4870
  %v5485 = vadd.f32 %v4589, %v4875
  %v5486 = vadd.f32 %v4590, %v4875
  %v5487 = vadd.f32 %v4591, %v4880
  %v5488 = vadd.f32 %v4592, %v4880
  %v5489 = vadd.f32 %v4593, %v4885
  %v5490 = vadd.f32 %v4594, %v4885
  %v5491 = vadd.f32 %v4595, %v4890
  %v5492 = vadd.f32 %v4596, %v4890
  %v5493 = vadd.f32 %v4597, %v4895
  %v5494 = vadd.f32 %v4598, %v4895
  %v5495 = vadd.f32 %v4599, %v4900
  %v5496 = vadd.f32 %v4600, %v4900
  %v5497 = vadd.f32 %v4601, %v4905
  %v5498 = vadd.f32 %v4602, %v4905
  %v5499 = vadd.f32 %v4603, %v4910
  %v5500 = vadd.f32 %v4604, %v4910
  %v5501 = vadd.f32 %v4605, %v4915
  %v5502 = vadd.f32 %v4606, %v4915
  %v5503 = vadd.f32 %v4607, %v4920
  %v5504 = vadd.f32 %v4608, %v4920
  %v5505 = vadd.f32 %v4609, %v4925
  %v5506 = vadd.f32 %v4610, %v4925
  %v5507 = vadd.f32 %v4611, %v4930
  %v5508 = vadd.f32 %v4612, %v4930
  %v5509 = vadd.f32 %v4613, %v4935
  %v5510 = vadd.f32 %v4614, %v4935
  %v5511 = vadd.f32 %v4615, %v4940
  %v5512 = vadd.f32 %v4616, %v4940
  %v5513 = vadd.f32 %v4617, %v4945
  %v5514 = vadd.f32 %v4618, %v4945
  %v5515 = vadd.f32 %v4619, %v4950
  %v5516 = vadd.f32 %v4620, %v4950
  %v5517 = vadd.f32 %v4621, %v4955
  %v5518 = vadd.f32 %v4622, %v4955
  %v5519 = vadd.f32 %v4623, %v4960
  %v5520 = vadd.f32 %v4624, %v4960
  %v5521 = vadd.f32 %v4625, %v4965
  %v5522 = vadd.f32 %v4626, %v4965
  %v5523 = vadd.f32 %v4627, %v4970
  %v5524 = vadd.f32 %v4628, %v4970
  %v5525 = vadd.f32 %v4629, %v4975
  %v5526 = vadd.f32 %v4630, %v4975
  %v5527 = vadd.f32 %v4631, %v4980
  %v5528 = vadd.f32 %v4632, %v4980
  %v5529 = vadd.f32 %v4633, %v4985
  %v5530 = vadd.f32 %v4634, %v4985
  %v5531 = vadd.f32 %v4635, %v4990
  %v5532 = vadd.f32 %v4636, %v4990
  %v5533 = vadd.f32 %v4637, %v4995
  %v5534 = vadd.f32 %v4638, %v4995
  %v5535 = vadd.f32 %v4639, %v5000
  %v5536 = vadd.f32 %v4640, %v5000
  %v5537 = vadd.f32 %v4641, %v5005
  %v5538 = vadd.f32 %v4642, %v5005
  %v5539 = vadd.f32 %v4643, %v5010
  %v5540 = vadd.f32 %v4644, %v5010
  %v5541 = vadd.f32 %v4645, %v5015
  %v5542 = vadd.f32 %v4646, %v5015
  %v5543 = vadd.f32 %v4647, %v5020
  %v5544 = vadd.f32 %v4648, %v5020
  %v5545 = vadd.f32 %v4649, %v5025
  %v5546 = vadd.f32 %v4650, %v5025
  %v5547 = vadd.f32 %v4651, %v5030
  %v5548 = vadd.f32 %v4652, %v5030
  %v5549 = vadd.f32 %v4653, %v5035
  %v5550 = vadd.f32 %v4654, %v5035
  %v5551 = vadd.f32 %v4655, %v5040
  %v5552 = vadd.f32 %v4656, %v5040
  %v5553 = vadd.f32 %v4657, %v5045
  %v5554 = vadd.f32 %v4658, %v5045
  %v5555 = vadd.f32 %v4659, %v5050
  %v5556 = vadd.f32 %v4660, %v5050
  %v5557 = vadd.f32 %v4661, %v5055
  %v5558 = vadd.f32 %v4662, %v5055
  %v5559 = vadd.f32 %v4663, %v5060
  %v5560 = vadd.f32 %v4664, %v5060
  %v5561 = vadd.f32 %v4665, %v5065
  %v5562 = vadd.f32 %v4666, %v5065
  %v5563 = vadd.f32 %v4667, %v5070
  %v5564 = vadd.f32 %v4668, %v5070
  %v5565 = vadd.f32 %v4669, %v5075
  %v5566 = vadd.f32 %v4670, %v5075
  %v5567 = vadd.f32 %v4671, %v5080
  %v5568 = vadd.f32 %v4672, %v5080
  %v5569 = vadd.f32 %v4673, %v5085
  %v5570 = vadd.f32 %v4674, %v5085
  %v5571 = vadd.f32 %v4675, %v5090
  %v5572 = vadd.f32 %v4676, %v5090
  %v5573 = vadd.f32 %v4677, %v5095
  %v5574 = vadd.f32 %v4678, %v5095
  %v5575 = vadd.f32 %v4679, %v5100
  %v5576 = vadd.f32 %v4680, %v5100
  %v5577 = vadd.f32 %v4681, %v5105
  %v5578 = vadd.f32 %v4682, %v5105
  %v5579 = vadd.f32 %v4683, %v5110
  %v5580 = vadd.f32 %v4684, %v5110
  %v5581 = vadd.f32 %v4685, %v5115
  %v5582 = vadd.f32 %v4686, %v5115
  %v5583 = vadd.f32 %v4687, %v5120
  %v5584 = vadd.f32 %v4688, %v5120
  %v5585 = vadd.f32 %v4689, %v5125
  %v5586 = vadd.f32 %v4690, %v5125
  %v5587 = vadd.f32 %v4691, %v5130
  %v5588 = vadd.f32 %v4692, %v5130
  %v5589 = vadd.f32 %v4693, %v5135
  %v5590 = vadd.f32 %v4694, %v5135
  %v5591 = vadd.f32 %v4695, %v5140
  %v5592 = vadd.f32 %v4696, %v5140
  %v5593 = vadd.f32 %v4697, %v5145
  %v5594 = vadd.f32 %v4698, %v5145
  %v5595 = vadd.f32 %v4699, %v5150
  %v5596 = vadd.f32 %v4700, %v5150
  %v5597 = vadd.f32 %v4701, %v5155
  %v5598 = vadd.f32 %v4702, %v5155
  %v5599 = vadd.f32 %v4703, %v5160
  %v5600 = vadd.f32 %v4704, %v5160
  %v5601 = vadd.f32 %v4705, %v5165
  %v5602 = vadd.f32 %v4706, %v5165
  %v5603 = vadd.f32 %v4707, %v5170
  %v5604 = vadd.f32 %v4708, %v5170
  %v5605 = vadd.f32 %v4709, %v5175
  %v5606 = vadd.f32 %v4710, %v5175
  %v5607 = vadd.f32 %v4711, %v5180
  %v5608 = vadd.f32 %v4712, %v5180
  %v5609 = vadd.f32 %v4713, %v5185
  %v5610 = vadd.f32 %v4714, %v5185
  %v5611 = vadd.f32 %v4715, %v5190
  %v5612 = vadd.f32 %v4716, %v5190
  %v5613 = vadd.f32 %v4717, %v5195
  %v5614 = vadd.f32 %v4718, %v5195
  %v5615 = vadd.f32 %v4719, %v5200
  %v5616 = vadd.f32 %v4720, %v5200
  %v5617 = vadd.f32 %v4721, %v5205
  %v5618 = vadd.f32 %v4722, %v5205
  %v5619 = vadd.f32 %v4723, %v5210
  %v5620 = vadd.f32 %v4724, %v5210
  %v5621 = vadd.f32 %v4725, %v5215
  %v5622 = vadd.f32 %v4726, %v5215
  %v5623 = vadd.f32 %v4727, %v5220
  %v5624 = vadd.f32 %v4728, %v5220
  %v5625 = vadd.f32 %v4729, %v5225
  %v5626 = vadd.f32 %v4730, %v5225
  %v5627 = vadd.f32 %v4731, %v5230
  %v5628 = vadd.f32 %v4732, %v5230
  %v5629 = vadd.f32 %v4733, %v5235
  %v5630 = vadd.f32 %v4734, %v5235
  %v5631 = vadd.f32 %v4735, %v5240
  %v5632 = vadd.f32 %v4736, %v5240
  %v5633 = vadd.f32 %v4737, %v5245
  %v5634 = vadd.f32 %v4738, %v5245
  %v5635 = vadd.f32 %v4739, %v5250
  %v5636 = vadd.f32 %v4740, %v5250
  %v5637 = vadd.f32 %v4741, %v5255
  %v5638 = vadd.f32 %v4742, %v5255
  %v5639 = vadd.f32 %v4743, %v5260
  %v5640 = vadd.f32 %v4744, %v5260
  %v5641 = vadd.f32 %v4745, %v5265
  %v5642 = vadd.f32 %v4746, %v5265
  %v5643 = vadd.f32 %v4747, %v5270
  %v5644 = vadd.f32 %v4748, %v5270
  %v5645 = vadd.f32 %v4749, %v5275
  %v5646 = vadd.f32 %v4750, %v5275
  %v5647 = vadd.f32 %v4751, %v5280
  %v5648 = vadd.f32 %v4752, %v5280
  %v5649 = vadd.f32 %v4753, %v5285
  %v5650 = vadd.f32 %v4754, %v5285
  %v5651 = vadd.f32 %v4755, %v5290
  %v5652 = vadd.f32 %v4756, %v5290
  %v5653 = vadd.f32 %v4757, %v5295
  %v5654 = vadd.f32 %v4758, %v5295
  %v5655 = vadd.f32 %v4759, %v5300
  %v5656 = vadd.f32 %v4760, %v5300
  %v5657 = vadd.f32 %v4761, %v5305
  %v5658 = vadd.f32 %v4762, %v5305
  %v5659 = vadd.f32 %v4763, %v5310
  %v5660 = vadd.f32 %v4764, %v5310
  %v5661 = vadd.f32 %v4765, %v5315
  %v5662 = vadd.f32 %v4766, %v5315
  %v5663 = vadd.f32 %v4767, %v5320
  %v5664 = vadd.f32 %v4768, %v5320
  %v5665 = vadd.f32 %v4769, %v5325
  %v5666 = vadd.f32 %v4770, %v5325
  %v5667 = vadd.f32 %v4771, %v5330
  %v5668 = vadd.f32 %v4772, %v5330
  %v5669 = vadd.f32 %v4773, %v5335
  %v5670 = vadd.f32 %v4774, %v5335
  %v5671 = vadd.f32 %v4775, %v5340
  %v5672 = vadd.f32 %v4776, %v5340
  %v5673 = vadd.f32 %v4777, %v5345
  %v5674 = vadd.f32 %v4778, %v5345
  %v5675 = vadd.f32 %v4779, %v5350
  %v5676 = vadd.f32 %v4780, %v5350
  %v5677 = vadd.f32 %v4781, %v5355
  %v5678 = vadd.f32 %v4782, %v5355
  %v5679 = vadd.f32 %v4783, %v5360
  %v5680 = vadd.f32 %v4784, %v5360
  %v5681 = vadd.f32 %v4785, %v5365
  %v5682 = vadd.f32 %v4786, %v5365
  %v5683 = vadd.f32 %v4787, %v5370
  %v5684 = vadd.f32 %v4788, %v5370
  %v5685 = vadd.f32 %v4789, %v5375
  %v5686 = vadd.f32 %v4790, %v5375
  %v5687 = vadd.f32 %v4791, %v5380
  %v5688 = vadd.f32 %v4792, %v5380
  %v5689 = vadd.f32 %v4793, %v5385
  %v5690 = vadd.f32 %v4794, %v5385
  %v5691 = vadd.f32 %v4795, %v5390
  %v5692 = vadd.f32 %v4796, %v5390
  %v5693 = vadd.f32 %v4797, %v5395
  %v5694 = vadd.f32 %v4798, %v5395
  %v5695 = vadd.f32 %v4799, %v5400
  %v5696 = vadd.f32 %v4800, %v5400
  %v5697 = vadd.f32 %v4801, %v5405
  %v5698 = vadd.f32 %v4802, %v5405
  %v5699 = vadd.f32 %v4803, %v5410
  %v5700 = vadd.f32 %v4804, %v5410
  %v5701 = vadd.f32 %v4805, %v5415
  %v5702 = vadd.f32 %v4806, %v5415
  %v5703 = vadd.f32 %v4807, %v5420
  %v5704 = vadd.f32 %v4808, %v5420
  %v5705 = vadd.f32 %v4809, %v5425
  %v5706 = vadd.f32 %v4810, %v5425
  %v5707 = vadd.f32 %v4811, %v5430
  %v5708 = vadd.f32 %v4812, %v5430
  %v5709 = vadd.f32 %v4813, %v5435
  %v5710 = vadd.f32 %v4814, %v5435
  %v5711 = vadd.f32 %v4815, %v5440
  %v5712 = vadd.f32 %v4816, %v5440
  %v5713 = vadd.f32 %v4817, %v5445
  %v5714 = vadd.f32 %v4818, %v5445
  %v5715 = vadd.f32 %v4819, %v5450
  %v5716 = vadd.f32 %v4820, %v5450
  %v5717 = vadd.f32 %v4821, %v5455
  %v5718 = vadd.f32 %v4822, %v5455
  %v5719 = vadd.f32 %v4823, %v5460
  %v5720 = vadd.f32 %v4824, %v5460
  %v5721 = vadd.f32 %v4825, %v5465
  %v5722 = vadd.f32 %v4826, %v5465
  %5723 = vst [vmem:[%s4] sm:$0xff] %v5467
  %5724 = vst [vmem:[%s4 + $0x8] sm:$0xff] %v5468
  %5725 = vst [vmem:[%s4 + $0x10] sm:$0xff] %v5469
  %5726 = vst [vmem:[%s4 + $0x18] sm:$0xff] %v5470
  %5727 = vst [vmem:[%s4 + $0x20] sm:$0xff] %v5471
  %5728 = vst [vmem:[%s4 + $0x28] sm:$0xff] %v5472
  %5729 = vst [vmem:[%s4 + $0x30] sm:$0xff] %v5473
  %5730 = vst [vmem:[%s4 + $0x38] sm:$0xff] %v5474
  %5731 = vst [vmem:[%s4 + $0x40] sm:$0xff] %v5475
  %5732 = vst [vmem:[%s4 + $0x48] sm:$0xff] %v5476
  %5733 = vst [vmem:[%s4 + $0x50] sm:$0xff] %v5477
  %5734 = vst [vmem:[%s4 + $0x58] sm:$0xff] %v5478
  %5735 = vst [vmem:[%s4 + $0x60] sm:$0xff] %v5479
  %5736 = vst [vmem:[%s4 + $0x68] sm:$0xff] %v5480
  %5737 = vst [vmem:[%s4 + $0x70] sm:$0xff] %v5481
  %5738 = vst [vmem:[%s4 + $0x78] sm:$0xff] %v5482
  %5739 = vst [vmem:[%s4 + $0x80] sm:$0xff] %v5483
  %5740 = vst [vmem:[%s4 + $0x88] sm:$0xff] %v5484
  %5741 = vst [vmem:[%s4 + $0x90] sm:$0xff] %v5485
  %5742 = vst [vmem:[%s4 + $0x98] sm:$0xff] %v5486
  %5743 = vst [vmem:[%s4 + $0xa0] sm:$0xff] %v5487
  %5744 = vst [vmem:[%s4 + $0xa8] sm:$0xff] %v5488
  %5745 = vst [vmem:[%s4 + $0xb0] sm:$0xff] %v5489
  %5746 = vst [vmem:[%s4 + $0xb8] sm:$0xff] %v5490
  %5747 = vst [vmem:[%s4 + $0xc0] sm:$0xff] %v5491
  %5748 = vst [vmem:[%s4 + $0xc8] sm:$0xff] %v5492
  %5749 = vst [vmem:[%s4 + $0xd0] sm:$0xff] %v5493
  %5750 = vst [vmem:[%s4 + $0xd8] sm:$0xff] %v5494
  %5751 = vst [vmem:[%s4 + $0xe0] sm:$0xff] %v5495
  %5752 = vst [vmem:[%s4 + $0xe8] sm:$0xff] %v5496
  %5753 = vst [vmem:[%s4 + $0xf0] sm:$0xff] %v5497
  %5754 = vst [vmem:[%s4 + $0xf8] sm:$0xff] %v5498
  %5755 = vst [vmem:[%s4 + $0x100] sm:$0xff] %v5499
  %5756 = vst [vmem:[%s4 + $0x108] sm:$0xff] %v5500
  %5757 = vst [vmem:[%s4 + $0x110] sm:$0xff] %v5501
  %5758 = vst [vmem:[%s4 + $0x118] sm:$0xff] %v5502
  %5759 = vst [vmem:[%s4 + $0x120] sm:$0xff] %v5503
  %5760 = vst [vmem:[%s4 + $0x128] sm:$0xff] %v5504
  %5761 = vst [vmem:[%s4 + $0x130] sm:$0xff] %v5505
  %5762 = vst [vmem:[%s4 + $0x138] sm:$0xff] %v5506
  %5763 = vst [vmem:[%s4 + $0x140] sm:$0xff] %v5507
  %5764 = vst [vmem:[%s4 + $0x148] sm:$0xff] %v5508
  %5765 = vst [vmem:[%s4 + $0x150] sm:$0xff] %v5509
  %5766 = vst [vmem:[%s4 + $0x158] sm:$0xff] %v5510
  %5767 = vst [vmem:[%s4 + $0x160] sm:$0xff] %v5511
  %5768 = vst [vmem:[%s4 + $0x168] sm:$0xff] %v5512
  %5769 = vst [vmem:[%s4 + $0x170] sm:$0xff] %v5513
  %5770 = vst [vmem:[%s4 + $0x178] sm:$0xff] %v5514
  %5771 = vst [vmem:[%s4 + $0x180] sm:$0xff] %v5515
  %5772 = vst [vmem:[%s4 + $0x188] sm:$0xff] %v5516
  %5773 = vst [vmem:[%s4 + $0x190] sm:$0xff] %v5517
  %5774 = vst [vmem:[%s4 + $0x198] sm:$0xff] %v5518
  %5775 = vst [vmem:[%s4 + $0x1a0] sm:$0xff] %v5519
  %5776 = vst [vmem:[%s4 + $0x1a8] sm:$0xff] %v5520
  %5777 = vst [vmem:[%s4 + $0x1b0] sm:$0xff] %v5521
  %5778 = vst [vmem:[%s4 + $0x1b8] sm:$0xff] %v5522
  %5779 = vst [vmem:[%s4 + $0x1c0] sm:$0xff] %v5523
  %5780 = vst [vmem:[%s4 + $0x1c8] sm:$0xff] %v5524
  %5781 = vst [vmem:[%s4 + $0x1d0] sm:$0xff] %v5525
  %5782 = vst [vmem:[%s4 + $0x1d8] sm:$0xff] %v5526
  %5783 = vst [vmem:[%s4 + $0x1e0] sm:$0xff] %v5527
  %5784 = vst [vmem:[%s4 + $0x1e8] sm:$0xff] %v5528
  %5785 = vst [vmem:[%s4 + $0x1f0] sm:$0xff] %v5529
  %5786 = vst [vmem:[%s4 + $0x1f8] sm:$0xff] %v5530
  %5787 = vst [vmem:[%s4 + $0x200] sm:$0xff] %v5531
  %5788 = vst [vmem:[%s4 + $0x208] sm:$0xff] %v5532
  %5789 = vst [vmem:[%s4 + $0x210] sm:$0xff] %v5533
  %5790 = vst [vmem:[%s4 + $0x218] sm:$0xff] %v5534
  %5791 = vst [vmem:[%s4 + $0x220] sm:$0xff] %v5535
  %5792 = vst [vmem:[%s4 + $0x228] sm:$0xff] %v5536
  %5793 = vst [vmem:[%s4 + $0x230] sm:$0xff] %v5537
  %5794 = vst [vmem:[%s4 + $0x238] sm:$0xff] %v5538
  %5795 = vst [vmem:[%s4 + $0x240] sm:$0xff] %v5539
  %5796 = vst [vmem:[%s4 + $0x248] sm:$0xff] %v5540
  %5797 = vst [vmem:[%s4 + $0x250] sm:$0xff] %v5541
  %5798 = vst [vmem:[%s4 + $0x258] sm:$0xff] %v5542
  %5799 = vst [vmem:[%s4 + $0x260] sm:$0xff] %v5543
  %5800 = vst [vmem:[%s4 + $0x268] sm:$0xff] %v5544
  %5801 = vst [vmem:[%s4 + $0x270] sm:$0xff] %v5545
  %5802 = vst [vmem:[%s4 + $0x278] sm:$0xff] %v5546
  %5803 = vst [vmem:[%s4 + $0x280] sm:$0xff] %v5547
  %5804 = vst [vmem:[%s4 + $0x288] sm:$0xff] %v5548
  %5805 = vst [vmem:[%s4 + $0x290] sm:$0xff] %v5549
  %5806 = vst [vmem:[%s4 + $0x298] sm:$0xff] %v5550
  %5807 = vst [vmem:[%s4 + $0x2a0] sm:$0xff] %v5551
  %5808 = vst [vmem:[%s4 + $0x2a8] sm:$0xff] %v5552
  %5809 = vst [vmem:[%s4 + $0x2b0] sm:$0xff] %v5553
  %5810 = vst [vmem:[%s4 + $0x2b8] sm:$0xff] %v5554
  %5811 = vst [vmem:[%s4 + $0x2c0] sm:$0xff] %v5555
  %5812 = vst [vmem:[%s4 + $0x2c8] sm:$0xff] %v5556
  %5813 = vst [vmem:[%s4 + $0x2d0] sm:$0xff] %v5557
  %5814 = vst [vmem:[%s4 + $0x2d8] sm:$0xff] %v5558
  %5815 = vst [vmem:[%s4 + $0x2e0] sm:$0xff] %v5559
  %5816 = vst [vmem:[%s4 + $0x2e8] sm:$0xff] %v5560
  %5817 = vst [vmem:[%s4 + $0x2f0] sm:$0xff] %v5561
  %5818 = vst [vmem:[%s4 + $0x2f8] sm:$0xff] %v5562
  %5819 = vst [vmem:[%s4 + $0x300] sm:$0xff] %v5563
  %5820 = vst [vmem:[%s4 + $0x308] sm:$0xff] %v5564
  %5821 = vst [vmem:[%s4 + $0x310] sm:$0xff] %v5565
  %5822 = vst [vmem:[%s4 + $0x318] sm:$0xff] %v5566
  %5823 = vst [vmem:[%s4 + $0x320] sm:$0xff] %v5567
  %5824 = vst [vmem:[%s4 + $0x328] sm:$0xff] %v5568
  %5825 = vst [vmem:[%s4 + $0x330] sm:$0xff] %v5569
  %5826 = vst [vmem:[%s4 + $0x338] sm:$0xff] %v5570
  %5827 = vst [vmem:[%s4 + $0x340] sm:$0xff] %v5571
  %5828 = vst [vmem:[%s4 + $0x348] sm:$0xff] %v5572
  %5829 = vst [vmem:[%s4 + $0x350] sm:$0xff] %v5573
  %5830 = vst [vmem:[%s4 + $0x358] sm:$0xff] %v5574
  %5831 = vst [vmem:[%s4 + $0x360] sm:$0xff] %v5575
  %5832 = vst [vmem:[%s4 + $0x368] sm:$0xff] %v5576
  %5833 = vst [vmem:[%s4 + $0x370] sm:$0xff] %v5577
  %5834 = vst [vmem:[%s4 + $0x378] sm:$0xff] %v5578
  %5835 = vst [vmem:[%s4 + $0x380] sm:$0xff] %v5579
  %5836 = vst [vmem:[%s4 + $0x388] sm:$0xff] %v5580
  %5837 = vst [vmem:[%s4 + $0x390] sm:$0xff] %v5581
  %5838 = vst [vmem:[%s4 + $0x398] sm:$0xff] %v5582
  %5839 = vst [vmem:[%s4 + $0x3a0] sm:$0xff] %v5583
  %5840 = vst [vmem:[%s4 + $0x3a8] sm:$0xff] %v5584
  %5841 = vst [vmem:[%s4 + $0x3b0] sm:$0xff] %v5585
  %5842 = vst [vmem:[%s4 + $0x3b8] sm:$0xff] %v5586
  %5843 = vst [vmem:[%s4 + $0x3c0] sm:$0xff] %v5587
  %5844 = vst [vmem:[%s4 + $0x3c8] sm:$0xff] %v5588
  %5845 = vst [vmem:[%s4 + $0x3d0] sm:$0xff] %v5589
  %5846 = vst [vmem:[%s4 + $0x3d8] sm:$0xff] %v5590
  %5847 = vst [vmem:[%s4 + $0x3e0] sm:$0xff] %v5591
  %5848 = vst [vmem:[%s4 + $0x3e8] sm:$0xff] %v5592
  %5849 = vst [vmem:[%s4 + $0x3f0] sm:$0xff] %v5593
  %5850 = vst [vmem:[%s4 + $0x3f8] sm:$0xff] %v5594
  %5851 = vst [vmem:[%s4 + $0x400] sm:$0xff] %v5595
  %5852 = vst [vmem:[%s4 + $0x408] sm:$0xff] %v5596
  %5853 = vst [vmem:[%s4 + $0x410] sm:$0xff] %v5597
  %5854 = vst [vmem:[%s4 + $0x418] sm:$0xff] %v5598
  %5855 = vst [vmem:[%s4 + $0x420] sm:$0xff] %v5599
  %5856 = vst [vmem:[%s4 + $0x428] sm:$0xff] %v5600
  %5857 = vst [vmem:[%s4 + $0x430] sm:$0xff] %v5601
  %5858 = vst [vmem:[%s4 + $0x438] sm:$0xff] %v5602
  %5859 = vst [vmem:[%s4 + $0x440] sm:$0xff] %v5603
  %5860 = vst [vmem:[%s4 + $0x448] sm:$0xff] %v5604
  %5861 = vst [vmem:[%s4 + $0x450] sm:$0xff] %v5605
  %5862 = vst [vmem:[%s4 + $0x458] sm:$0xff] %v5606
  %5863 = vst [vmem:[%s4 + $0x460] sm:$0xff] %v5607
  %5864 = vst [vmem:[%s4 + $0x468] sm:$0xff] %v5608
  %5865 = vst [vmem:[%s4 + $0x470] sm:$0xff] %v5609
  %5866 = vst [vmem:[%s4 + $0x478] sm:$0xff] %v5610
  %5867 = vst [vmem:[%s4 + $0x480] sm:$0xff] %v5611
  %5868 = vst [vmem:[%s4 + $0x488] sm:$0xff] %v5612
  %5869 = vst [vmem:[%s4 + $0x490] sm:$0xff] %v5613
  %5870 = vst [vmem:[%s4 + $0x498] sm:$0xff] %v5614
  %5871 = vst [vmem:[%s4 + $0x4a0] sm:$0xff] %v5615
  %5872 = vst [vmem:[%s4 + $0x4a8] sm:$0xff] %v5616
  %5873 = vst [vmem:[%s4 + $0x4b0] sm:$0xff] %v5617
  %5874 = vst [vmem:[%s4 + $0x4b8] sm:$0xff] %v5618
  %5875 = vst [vmem:[%s4 + $0x4c0] sm:$0xff] %v5619
  %5876 = vst [vmem:[%s4 + $0x4c8] sm:$0xff] %v5620
  %5877 = vst [vmem:[%s4 + $0x4d0] sm:$0xff] %v5621
  %5878 = vst [vmem:[%s4 + $0x4d8] sm:$0xff] %v5622
  %5879 = vst [vmem:[%s4 + $0x4e0] sm:$0xff] %v5623
  %5880 = vst [vmem:[%s4 + $0x4e8] sm:$0xff] %v5624
  %5881 = vst [vmem:[%s4 + $0x4f0] sm:$0xff] %v5625
  %5882 = vst [vmem:[%s4 + $0x4f8] sm:$0xff] %v5626
  %5883 = vst [vmem:[%s4 + $0x500] sm:$0xff] %v5627
  %5884 = vst [vmem:[%s4 + $0x508] sm:$0xff] %v5628
  %5885 = vst [vmem:[%s4 + $0x510] sm:$0xff] %v5629
  %5886 = vst [vmem:[%s4 + $0x518] sm:$0xff] %v5630
  %5887 = vst [vmem:[%s4 + $0x520] sm:$0xff] %v5631
  %5888 = vst [vmem:[%s4 + $0x528] sm:$0xff] %v5632
  %5889 = vst [vmem:[%s4 + $0x530] sm:$0xff] %v5633
  %5890 = vst [vmem:[%s4 + $0x538] sm:$0xff] %v5634
  %5891 = vst [vmem:[%s4 + $0x540] sm:$0xff] %v5635
  %5892 = vst [vmem:[%s4 + $0x548] sm:$0xff] %v5636
  %5893 = vst [vmem:[%s4 + $0x550] sm:$0xff] %v5637
  %5894 = vst [vmem:[%s4 + $0x558] sm:$0xff] %v5638
  %5895 = vst [vmem:[%s4 + $0x560] sm:$0xff] %v5639
  %5896 = vst [vmem:[%s4 + $0x568] sm:$0xff] %v5640
  %5897 = vst [vmem:[%s4 + $0x570] sm:$0xff] %v5641
  %5898 = vst [vmem:[%s4 + $0x578] sm:$0xff] %v5642
  %5899 = vst [vmem:[%s4 + $0x580] sm:$0xff] %v5643
  %5900 = vst [vmem:[%s4 + $0x588] sm:$0xff] %v5644
  %5901 = vst [vmem:[%s4 + $0x590] sm:$0xff] %v5645
  %5902 = vst [vmem:[%s4 + $0x598] sm:$0xff] %v5646
  %5903 = vst [vmem:[%s4 + $0x5a0] sm:$0xff] %v5647
  %5904 = vst [vmem:[%s4 + $0x5a8] sm:$0xff] %v5648
  %5905 = vst [vmem:[%s4 + $0x5b0] sm:$0xff] %v5649
  %5906 = vst [vmem:[%s4 + $0x5b8] sm:$0xff] %v5650
  %5907 = vst [vmem:[%s4 + $0x5c0] sm:$0xff] %v5651
  %5908 = vst [vmem:[%s4 + $0x5c8] sm:$0xff] %v5652
  %5909 = vst [vmem:[%s4 + $0x5d0] sm:$0xff] %v5653
  %5910 = vst [vmem:[%s4 + $0x5d8] sm:$0xff] %v5654
  %5911 = vst [vmem:[%s4 + $0x5e0] sm:$0xff] %v5655
  %5912 = vst [vmem:[%s4 + $0x5e8] sm:$0xff] %v5656
  %5913 = vst [vmem:[%s4 + $0x5f0] sm:$0xff] %v5657
  %5914 = vst [vmem:[%s4 + $0x5f8] sm:$0xff] %v5658
  %5915 = vst [vmem:[%s4 + $0x600] sm:$0xff] %v5659
  %5916 = vst [vmem:[%s4 + $0x608] sm:$0xff] %v5660
  %5917 = vst [vmem:[%s4 + $0x610] sm:$0xff] %v5661
  %5918 = vst [vmem:[%s4 + $0x618] sm:$0xff] %v5662
  %5919 = vst [vmem:[%s4 + $0x620] sm:$0xff] %v5663
  %5920 = vst [vmem:[%s4 + $0x628] sm:$0xff] %v5664
  %5921 = vst [vmem:[%s4 + $0x630] sm:$0xff] %v5665
  %5922 = vst [vmem:[%s4 + $0x638] sm:$0xff] %v5666
  %5923 = vst [vmem:[%s4 + $0x640] sm:$0xff] %v5667
  %5924 = vst [vmem:[%s4 + $0x648] sm:$0xff] %v5668
  %5925 = vst [vmem:[%s4 + $0x650] sm:$0xff] %v5669
  %5926 = vst [vmem:[%s4 + $0x658] sm:$0xff] %v5670
  %5927 = vst [vmem:[%s4 + $0x660] sm:$0xff] %v5671
  %5928 = vst [vmem:[%s4 + $0x668] sm:$0xff] %v5672
  %5929 = vst [vmem:[%s4 + $0x670] sm:$0xff] %v5673
  %5930 = vst [vmem:[%s4 + $0x678] sm:$0xff] %v5674
  %5931 = vst [vmem:[%s4 + $0x680] sm:$0xff] %v5675
  %5932 = vst [vmem:[%s4 + $0x688] sm:$0xff] %v5676
  %5933 = vst [vmem:[%s4 + $0x690] sm:$0xff] %v5677
  %5934 = vst [vmem:[%s4 + $0x698] sm:$0xff] %v5678
  %5935 = vst [vmem:[%s4 + $0x6a0] sm:$0xff] %v5679
  %5936 = vst [vmem:[%s4 + $0x6a8] sm:$0xff] %v5680
  %5937 = vst [vmem:[%s4 + $0x6b0] sm:$0xff] %v5681
  %5938 = vst [vmem:[%s4 + $0x6b8] sm:$0xff] %v5682
  %5939 = vst [vmem:[%s4 + $0x6c0] sm:$0xff] %v5683
  %5940 = vst [vmem:[%s4 + $0x6c8] sm:$0xff] %v5684
  %5941 = vst [vmem:[%s4 + $0x6d0] sm:$0xff] %v5685
  %5942 = vst [vmem:[%s4 + $0x6d8] sm:$0xff] %v5686
  %5943 = vst [vmem:[%s4 + $0x6e0] sm:$0xff] %v5687
  %5944 = vst [vmem:[%s4 + $0x6e8] sm:$0xff] %v5688
  %5945 = vst [vmem:[%s4 + $0x6f0] sm:$0xff] %v5689
  %5946 = vst [vmem:[%s4 + $0x6f8] sm:$0xff] %v5690
  %5947 = vst [vmem:[%s4 + $0x700] sm:$0xff] %v5691
  %5948 = vst [vmem:[%s4 + $0x708] sm:$0xff] %v5692
  %5949 = vst [vmem:[%s4 + $0x710] sm:$0xff] %v5693
  %5950 = vst [vmem:[%s4 + $0x718] sm:$0xff] %v5694
  %5951 = vst [vmem:[%s4 + $0x720] sm:$0xff] %v5695
  %5952 = vst [vmem:[%s4 + $0x728] sm:$0xff] %v5696
  %5953 = vst [vmem:[%s4 + $0x730] sm:$0xff] %v5697
  %5954 = vst [vmem:[%s4 + $0x738] sm:$0xff] %v5698
  %5955 = vst [vmem:[%s4 + $0x740] sm:$0xff] %v5699
  %5956 = vst [vmem:[%s4 + $0x748] sm:$0xff] %v5700
  %5957 = vst [vmem:[%s4 + $0x750] sm:$0xff] %v5701
  %5958 = vst [vmem:[%s4 + $0x758] sm:$0xff] %v5702
  %5959 = vst [vmem:[%s4 + $0x760] sm:$0xff] %v5703
  %5960 = vst [vmem:[%s4 + $0x768] sm:$0xff] %v5704
  %5961 = vst [vmem:[%s4 + $0x770] sm:$0xff] %v5705
  %5962 = vst [vmem:[%s4 + $0x778] sm:$0xff] %v5706
  %5963 = vst [vmem:[%s4 + $0x780] sm:$0xff] %v5707
  %5964 = vst [vmem:[%s4 + $0x788] sm:$0xff] %v5708
  %5965 = vst [vmem:[%s4 + $0x790] sm:$0xff] %v5709
  %5966 = vst [vmem:[%s4 + $0x798] sm:$0xff] %v5710
  %5967 = vst [vmem:[%s4 + $0x7a0] sm:$0xff] %v5711
  %5968 = vst [vmem:[%s4 + $0x7a8] sm:$0xff] %v5712
  %5969 = vst [vmem:[%s4 + $0x7b0] sm:$0xff] %v5713
  %5970 = vst [vmem:[%s4 + $0x7b8] sm:$0xff] %v5714
  %5971 = vst [vmem:[%s4 + $0x7c0] sm:$0xff] %v5715
  %5972 = vst [vmem:[%s4 + $0x7c8] sm:$0xff] %v5716
  %5973 = vst [vmem:[%s4 + $0x7d0] sm:$0xff] %v5717
  %5974 = vst [vmem:[%s4 + $0x7d8] sm:$0xff] %v5718
  %5975 = vst [vmem:[%s4 + $0x7e0] sm:$0xff] %v5719
  %5976 = vst [vmem:[%s4 + $0x7e8] sm:$0xff] %v5720
  %5977 = vst [vmem:[%s4 + $0x7f0] sm:$0xff] %v5721
  %5978 = vst [vmem:[%s4 + $0x7f8] sm:$0xff] %v5722
  // Predicated region
  $region18: #{relu_conv1x1_bn.1} parent=0 // pred_check
    _
  $region19: #{relu_conv1x1_bn.1} parent=0 // pred_check_branch
    %5980 = sbr.rel (0) target = $region21
  $region20: #{relu_conv1x1_bn.1} parent=0 // pred_region
    _
  $region21: #{relu_conv1x1_bn.1} parent=0 // pred_fallthru
    _
  // Predicated region
  $region22: #{relu_conv1x1_bn.1} parent=0 // pred_check
    _
  $region23: #{relu_conv1x1_bn.1} parent=0 // pred_check_branch
    %5982 = sbr.rel (0) target = $region25
  $region24: #{relu_conv1x1_bn.1} parent=0 // pred_region
    _
  $region25: #{relu_conv1x1_bn.1} parent=0 // pred_fallthru
    _

</llo_original>
